<compile_context>
chip_gen: v5e
topology: v5e:2x2
jax: 0.10.0
libtpu: 0.0.40
codegen_flags: <defaults>
</compile_context>

<pallas_src>
import math

import jax
import jax.numpy as jnp
import numpy as np
from jax import lax
from jax.experimental import pallas as pl
from jax.experimental.pallas import tpu as pltpu


def _make_kernel(emb, heads, compute_dtype):
    inv_sqrt_e = 1.0 / math.sqrt(float(emb))

    def kernel(xT_ref, wq_ref, wk_ref, wv_ref, wu_ref, bu_ref, o_ref):
        # Operand layouts (prepared in the wrapper):
        #   xT:       (e, t)      compute_dtype   (tokens on the lane axis)
        #   wq/wk/wv: (h*e, e)    compute_dtype   (native PyTorch Linear layout)
        #   wu:       (e, h*e)    compute_dtype   (native layout)
        #   bu:       (e, 1)      float32
        #   o:        (e, t)      float32         (wrapper transposes back)
        xT = xT_ref[...]

        # Fused-head projections: (h*e, e) @ (e, t) -> (h*e, t), f32 accumulation.
        # M = h*e fills the MXU rows; N = t is the lane axis (lane-dense t>=128).
        qT = jnp.dot(wq_ref[...], xT, preferred_element_type=jnp.float32)
        kT = jnp.dot(wk_ref[...], xT, preferred_element_type=jnp.float32)
        vT = jnp.dot(wv_ref[...], xT, preferred_element_type=jnp.float32)

        # Fold the full 1/sqrt(e) scale into q only (softmax-invariant), in f32,
        # then cast each projection exactly ONCE for MXU consumption.
        q_c = (qT * inv_sqrt_e).astype(compute_dtype)
        k_c = kT.astype(compute_dtype)
        v_c = vT.astype(compute_dtype)

        # Per-head attention, statically unrolled (heads is small and static).
        # Heads sit on the sublane axis -> the slices below are free.
        ctx_heads = []
        for hd in range(heads):
            lo = hd * emb
            qh = q_c[lo:lo + emb, :]                       # (e, t)  sublane slice
            kh = k_c[lo:lo + emb, :]                       # (e, t)
            vh = v_c[lo:lo + emb, :]                       # (e, t)

            # scores[i, j] = q_i . k_j : TN contraction over the embedding axis.
            s = lax.dot_general(qh, kh, (((0,), (0,)), ((), ())),
                                preferred_element_type=jnp.float32)    # (t, t)
            s = s - jnp.max(s, axis=-1, keepdims=True)
            p = jnp.exp(s)
            p = p * pl.reciprocal(jnp.sum(p, axis=-1, keepdims=True), approx=True)

            # ctxT[e, q] = sum_k v[e, k] * p[q, k] : NT contraction over keys.
            ctxT = lax.dot_general(vh, p.astype(compute_dtype),
                                   (((1,), (1,)), ((), ())),
                                   preferred_element_type=jnp.float32)  # (e, t)
            ctx_heads.append(ctxT.astype(compute_dtype))

        # Single fused unify-heads matmul on the sublane-concatenated context
        # slab: (e, h*e) @ (h*e, t) -> (e, t).  No serial accumulator chain.
        ctx_full = jnp.concatenate(ctx_heads, axis=0)                   # (h*e, t)
        outT = jnp.dot(wu_ref[...], ctx_full, preferred_element_type=jnp.float32)

        # Lane-dense store: last dim is t (>=128 in the demo), no masked vst.
        o_ref[...] = (outT + bu_ref[...]).astype(o_ref.dtype)

    return kernel


def self_attention_wide(x, wq, wk, wv, wu, bu, heads,
                        compute_dtype=jnp.bfloat16):
    """Forward of SelfAttentionWide.

    x: (t, e) float32; wq/wk/wv: (h*e, e) (PyTorch Linear convention);
    wu: (e, h*e); bu: (e,).  Returns (t, e) in x.dtype.
    """
    t, e = x.shape
    h = heads
    assert wq.shape == (h * e, e) and wk.shape == (h * e, e) and wv.shape == (h * e, e)
    assert wu.shape == (e, h * e) and bu.shape == (e,)

    # One-time XLA-side layout prep (outside the kernel): transpose x so tokens
    # land on the lane axis and cast MXU operands; the weights are used in their
    # native PyTorch layout (no transposes needed).
    cdt = compute_dtype
    xT = x.T.astype(cdt)                          # (e, t)
    wq_c = wq.astype(cdt)                         # (h*e, e)
    wk_c = wk.astype(cdt)
    wv_c = wv.astype(cdt)
    wu_c = wu.astype(cdt)                         # (e, h*e)
    buT = bu.reshape(e, 1).astype(jnp.float32)    # (e, 1)

    kernel = _make_kernel(e, h, cdt)

    outT = pl.pallas_call(
        kernel,
        out_shape=jax.ShapeDtypeStruct((e, t), x.dtype),
        in_specs=[pl.BlockSpec(memory_space=pltpu.MemorySpace.VMEM)
                  for _ in range(6)],
        out_specs=pl.BlockSpec(memory_space=pltpu.MemorySpace.VMEM),
    )(xT, wq_c, wk_c, wv_c, wu_c, buT)

    # Single wrapper-side transpose back to the module's (t, e) convention.
    return outT.T


def reference_f32(x, wq, wk, wv, wu, bu, heads):
    """Exact float32 replica of the PyTorch forward."""
    t, e = x.shape
    h = heads
    keys = (x @ wk.T).reshape(t, h, e).transpose(1, 0, 2)      # (h, t, e)
    queries = (x @ wq.T).reshape(t, h, e).transpose(1, 0, 2)
    values = (x @ wv.T).reshape(t, h, e).transpose(1, 0, 2)
    scale = e ** 0.25
    queries = queries / scale
    keys = keys / scale
    dot = jnp.einsum("hqe,hke->hqk", queries, keys)
    dot = jax.nn.softmax(dot, axis=-1)
    out = jnp.einsum("hqk,hke->hqe", dot, values)
    out = out.transpose(1, 0, 2).reshape(t, h * e)
    return out @ wu.T + bu


def reference_matched(x, wq, wk, wv, wu, bu, heads, compute_dtype):
    """Same math with the kernel's precision policy (compute_dtype MXU operands,
    float32 accumulation, float32 softmax), in the same transposed orientation."""
    t, e = x.shape
    h = heads
    f32 = jnp.float32
    cdt = compute_dtype
    xT = x.T.astype(cdt)                                           # (e, t)
    qT = jnp.dot(wq.astype(cdt), xT, preferred_element_type=f32) * (1.0 / math.sqrt(e))
    kT = jnp.dot(wk.astype(cdt), xT, preferred_element_type=f32)
    vT = jnp.dot(wv.astype(cdt), xT, preferred_element_type=f32)
    q3 = qT.reshape(h, e, t).astype(cdt)
    k3 = kT.reshape(h, e, t).astype(cdt)
    v3 = vT.reshape(h, e, t).astype(cdt)
    s = jnp.einsum("heq,hek->hqk", q3, k3, preferred_element_type=f32)
    p = jax.nn.softmax(s, axis=-1)
    ctx = jnp.einsum("hek,hqk->heq", v3, p.astype(cdt), preferred_element_type=f32)
    ctx = ctx.astype(cdt).reshape(h * e, t)
    outT = jnp.dot(wu.astype(cdt), ctx, preferred_element_type=f32) + bu.reshape(e, 1)
    return outT.T


if __name__ == "__main__":
    emb = 32
    heads = 8
    t = 128      # real M/N dim for the MXU; lane-dense (t,t) scores and (e,t) output

    key = jax.random.PRNGKey(0)
    kx, kq, kk, kv, ku, kb = jax.random.split(key, 6)

    x = jax.random.normal(kx, (t, emb), dtype=jnp.float32)
    # Deterministic synthetic parameters (PyTorch Linear weight convention).
    wq = jax.random.normal(kq, (emb * heads, emb), dtype=jnp.float32) / np.sqrt(emb)
    wk = jax.random.normal(kk, (emb * heads, emb), dtype=jnp.float32) / np.sqrt(emb)
    wv = jax.random.normal(kv, (emb * heads, emb), dtype=jnp.float32) / np.sqrt(emb)
    wu = jax.random.normal(ku, (emb, emb * heads), dtype=jnp.float32) / np.sqrt(emb * heads)
    bu = jax.random.normal(kb, (emb,), dtype=jnp.float32) * 0.01

    out = self_attention_wide(x, wq, wk, wv, wu, bu, heads)
    out = jax.block_until_ready(out)

    # Tight check against a reference using the identical precision policy
    # (bf16 MXU operands, f32 accumulation): residual differences come only
    # from the approximate reciprocal and MXU accumulation order.
    ref_m = reference_matched(x, wq, wk, wv, wu, bu, heads, jnp.bfloat16)
    np.testing.assert_allclose(np.asarray(out), np.asarray(ref_m),
                               rtol=1e-2, atol=1e-2)

    # Sanity bound vs. the exact float32 PyTorch math (difference is purely
    # bf16 operand quantization of O(1) activations).
    ref_f = reference_f32(x, wq, wk, wv, wu, bu, heads)
    max_dev = float(jnp.max(jnp.abs(out.astype(jnp.float32) - ref_f)))
    assert max_dev < 0.25, f"bf16-vs-f32 deviation unexpectedly large: {max_dev}"

    print("KERNEL_OK")
</pallas_src>

<mosaic_0001>
module attributes {stable_mosaic.version = 11 : i64} {
  func.func @kernel(%arg0: memref<32x128xbf16, #tpu.memory_space<vmem>>, %arg1: memref<256x32xbf16, #tpu.memory_space<vmem>>, %arg2: memref<256x32xbf16, #tpu.memory_space<vmem>>, %arg3: memref<256x32xbf16, #tpu.memory_space<vmem>>, %arg4: memref<32x256xbf16, #tpu.memory_space<vmem>>, %arg5: memref<32x1xf32, #tpu.memory_space<vmem>>, %arg6: memref<32x128xf32, #tpu.memory_space<vmem>>) attributes {dimension_semantics = [], scalar_prefetch = 0 : i64, scratch_operands = 0 : i64, tpu.core_type = #tpu.core_type<tc>} {
    %c0 = arith.constant 0 : index
    %c0_0 = arith.constant 0 : index
    %0 = vector.load %arg0[%c0, %c0_0] : memref<32x128xbf16, #tpu.memory_space<vmem>>, vector<32x128xbf16>
    %c0_1 = arith.constant 0 : index
    %c0_2 = arith.constant 0 : index
    %1 = vector.load %arg1[%c0_1, %c0_2] : memref<256x32xbf16, #tpu.memory_space<vmem>>, vector<256x32xbf16>
    %cst = arith.constant dense<0.000000e+00> : vector<256x128xf32>
    %2 = tpu.matmul %1, %0, %cst {dimension_numbers = #tpu.dot_dimension_numbers<[1], [0], [0], [1], [0, 0, 1, 1], [], []>} : vector<256x32xbf16>, vector<32x128xbf16>, vector<256x128xf32> -> vector<256x128xf32>
    %c0_3 = arith.constant 0 : index
    %c0_4 = arith.constant 0 : index
    %3 = vector.load %arg2[%c0_3, %c0_4] : memref<256x32xbf16, #tpu.memory_space<vmem>>, vector<256x32xbf16>
    %cst_5 = arith.constant dense<0.000000e+00> : vector<256x128xf32>
    %4 = tpu.matmul %3, %0, %cst_5 {dimension_numbers = #tpu.dot_dimension_numbers<[1], [0], [0], [1], [0, 0, 1, 1], [], []>} : vector<256x32xbf16>, vector<32x128xbf16>, vector<256x128xf32> -> vector<256x128xf32>
    %c0_6 = arith.constant 0 : index
    %c0_7 = arith.constant 0 : index
    %5 = vector.load %arg3[%c0_6, %c0_7] : memref<256x32xbf16, #tpu.memory_space<vmem>>, vector<256x32xbf16>
    %cst_8 = arith.constant dense<0.000000e+00> : vector<256x128xf32>
    %6 = tpu.matmul %5, %0, %cst_8 {dimension_numbers = #tpu.dot_dimension_numbers<[1], [0], [0], [1], [0, 0, 1, 1], [], []>} : vector<256x32xbf16>, vector<32x128xbf16>, vector<256x128xf32> -> vector<256x128xf32>
    %cst_9 = arith.constant 0.176776692 : f32
    %7 = vector.broadcast %cst_9 : f32 to vector<256x128xf32>
    %8 = arith.mulf %2, %7 : vector<256x128xf32>
    %9 = arith.truncf %8 : vector<256x128xf32> to vector<256x128xbf16>
    %10 = arith.truncf %4 : vector<256x128xf32> to vector<256x128xbf16>
    %11 = arith.truncf %6 : vector<256x128xf32> to vector<256x128xbf16>
    %12 = vector.extract_strided_slice %9 {offsets = [0, 0], sizes = [32, 128], strides = [1, 1]} : vector<256x128xbf16> to vector<32x128xbf16>
    %13 = vector.extract_strided_slice %10 {offsets = [0, 0], sizes = [32, 128], strides = [1, 1]} : vector<256x128xbf16> to vector<32x128xbf16>
    %14 = vector.extract_strided_slice %11 {offsets = [0, 0], sizes = [32, 128], strides = [1, 1]} : vector<256x128xbf16> to vector<32x128xbf16>
    %cst_10 = arith.constant dense<0.000000e+00> : vector<128x128xf32>
    %15 = tpu.matmul %12, %13, %cst_10 {dimension_numbers = #tpu.dot_dimension_numbers<[0], [0], [1], [1], [0, 1, 1, 1], [], []>} : vector<32x128xbf16>, vector<32x128xbf16>, vector<128x128xf32> -> vector<128x128xf32>
    %cst_11 = arith.constant dense<0xFF800000> : vector<128xf32>
    %16 = vector.multi_reduction <maximumf>, %15, %cst_11 [1] : vector<128x128xf32> to vector<128xf32>
    %17 = vector.shape_cast %16 : vector<128xf32> to vector<128x1xf32>
    %18 = vector.broadcast %17 : vector<128x1xf32> to vector<128x128xf32>
    %19 = arith.subf %15, %18 : vector<128x128xf32>
    %20 = math.exp %19 : vector<128x128xf32>
    %cst_12 = arith.constant dense<0.000000e+00> : vector<128xf32>
    %21 = vector.multi_reduction <add>, %20, %cst_12 [1] : vector<128x128xf32> to vector<128xf32>
    %22 = vector.shape_cast %21 : vector<128xf32> to vector<128x1xf32>
    %23 = tpu.reciprocal %22 {approx = true} : vector<128x1xf32> -> vector<128x1xf32>
    %24 = vector.broadcast %23 : vector<128x1xf32> to vector<128x128xf32>
    %25 = arith.mulf %20, %24 : vector<128x128xf32>
    %26 = arith.truncf %25 : vector<128x128xf32> to vector<128x128xbf16>
    %cst_13 = arith.constant dense<0.000000e+00> : vector<32x128xf32>
    %27 = tpu.matmul %14, %26, %cst_13 {dimension_numbers = #tpu.dot_dimension_numbers<[1], [1], [0], [0], [0, 0, 1, 0], [], []>} : vector<32x128xbf16>, vector<128x128xbf16>, vector<32x128xf32> -> vector<32x128xf32>
    %28 = arith.truncf %27 : vector<32x128xf32> to vector<32x128xbf16>
    %29 = vector.extract_strided_slice %9 {offsets = [32, 0], sizes = [32, 128], strides = [1, 1]} : vector<256x128xbf16> to vector<32x128xbf16>
    %30 = vector.extract_strided_slice %10 {offsets = [32, 0], sizes = [32, 128], strides = [1, 1]} : vector<256x128xbf16> to vector<32x128xbf16>
    %31 = vector.extract_strided_slice %11 {offsets = [32, 0], sizes = [32, 128], strides = [1, 1]} : vector<256x128xbf16> to vector<32x128xbf16>
    %cst_14 = arith.constant dense<0.000000e+00> : vector<128x128xf32>
    %32 = tpu.matmul %29, %30, %cst_14 {dimension_numbers = #tpu.dot_dimension_numbers<[0], [0], [1], [1], [0, 1, 1, 1], [], []>} : vector<32x128xbf16>, vector<32x128xbf16>, vector<128x128xf32> -> vector<128x128xf32>
    %cst_15 = arith.constant dense<0xFF800000> : vector<128xf32>
    %33 = vector.multi_reduction <maximumf>, %32, %cst_15 [1] : vector<128x128xf32> to vector<128xf32>
    %34 = vector.shape_cast %33 : vector<128xf32> to vector<128x1xf32>
    %35 = vector.broadcast %34 : vector<128x1xf32> to vector<128x128xf32>
    %36 = arith.subf %32, %35 : vector<128x128xf32>
    %37 = math.exp %36 : vector<128x128xf32>
    %cst_16 = arith.constant dense<0.000000e+00> : vector<128xf32>
    %38 = vector.multi_reduction <add>, %37, %cst_16 [1] : vector<128x128xf32> to vector<128xf32>
    %39 = vector.shape_cast %38 : vector<128xf32> to vector<128x1xf32>
    %40 = tpu.reciprocal %39 {approx = true} : vector<128x1xf32> -> vector<128x1xf32>
    %41 = vector.broadcast %40 : vector<128x1xf32> to vector<128x128xf32>
    %42 = arith.mulf %37, %41 : vector<128x128xf32>
    %43 = arith.truncf %42 : vector<128x128xf32> to vector<128x128xbf16>
    %cst_17 = arith.constant dense<0.000000e+00> : vector<32x128xf32>
    %44 = tpu.matmul %31, %43, %cst_17 {dimension_numbers = #tpu.dot_dimension_numbers<[1], [1], [0], [0], [0, 0, 1, 0], [], []>} : vector<32x128xbf16>, vector<128x128xbf16>, vector<32x128xf32> -> vector<32x128xf32>
    %45 = arith.truncf %44 : vector<32x128xf32> to vector<32x128xbf16>
    %46 = vector.extract_strided_slice %9 {offsets = [64, 0], sizes = [32, 128], strides = [1, 1]} : vector<256x128xbf16> to vector<32x128xbf16>
    %47 = vector.extract_strided_slice %10 {offsets = [64, 0], sizes = [32, 128], strides = [1, 1]} : vector<256x128xbf16> to vector<32x128xbf16>
    %48 = vector.extract_strided_slice %11 {offsets = [64, 0], sizes = [32, 128], strides = [1, 1]} : vector<256x128xbf16> to vector<32x128xbf16>
    %cst_18 = arith.constant dense<0.000000e+00> : vector<128x128xf32>
    %49 = tpu.matmul %46, %47, %cst_18 {dimension_numbers = #tpu.dot_dimension_numbers<[0], [0], [1], [1], [0, 1, 1, 1], [], []>} : vector<32x128xbf16>, vector<32x128xbf16>, vector<128x128xf32> -> vector<128x128xf32>
    %cst_19 = arith.constant dense<0xFF800000> : vector<128xf32>
    %50 = vector.multi_reduction <maximumf>, %49, %cst_19 [1] : vector<128x128xf32> to vector<128xf32>
    %51 = vector.shape_cast %50 : vector<128xf32> to vector<128x1xf32>
    %52 = vector.broadcast %51 : vector<128x1xf32> to vector<128x128xf32>
    %53 = arith.subf %49, %52 : vector<128x128xf32>
    %54 = math.exp %53 : vector<128x128xf32>
    %cst_20 = arith.constant dense<0.000000e+00> : vector<128xf32>
    %55 = vector.multi_reduction <add>, %54, %cst_20 [1] : vector<128x128xf32> to vector<128xf32>
    %56 = vector.shape_cast %55 : vector<128xf32> to vector<128x1xf32>
    %57 = tpu.reciprocal %56 {approx = true} : vector<128x1xf32> -> vector<128x1xf32>
    %58 = vector.broadcast %57 : vector<128x1xf32> to vector<128x128xf32>
    %59 = arith.mulf %54, %58 : vector<128x128xf32>
    %60 = arith.truncf %59 : vector<128x128xf32> to vector<128x128xbf16>
    %cst_21 = arith.constant dense<0.000000e+00> : vector<32x128xf32>
    %61 = tpu.matmul %48, %60, %cst_21 {dimension_numbers = #tpu.dot_dimension_numbers<[1], [1], [0], [0], [0, 0, 1, 0], [], []>} : vector<32x128xbf16>, vector<128x128xbf16>, vector<32x128xf32> -> vector<32x128xf32>
    %62 = arith.truncf %61 : vector<32x128xf32> to vector<32x128xbf16>
    %63 = vector.extract_strided_slice %9 {offsets = [96, 0], sizes = [32, 128], strides = [1, 1]} : vector<256x128xbf16> to vector<32x128xbf16>
    %64 = vector.extract_strided_slice %10 {offsets = [96, 0], sizes = [32, 128], strides = [1, 1]} : vector<256x128xbf16> to vector<32x128xbf16>
    %65 = vector.extract_strided_slice %11 {offsets = [96, 0], sizes = [32, 128], strides = [1, 1]} : vector<256x128xbf16> to vector<32x128xbf16>
    %cst_22 = arith.constant dense<0.000000e+00> : vector<128x128xf32>
    %66 = tpu.matmul %63, %64, %cst_22 {dimension_numbers = #tpu.dot_dimension_numbers<[0], [0], [1], [1], [0, 1, 1, 1], [], []>} : vector<32x128xbf16>, vector<32x128xbf16>, vector<128x128xf32> -> vector<128x128xf32>
    %cst_23 = arith.constant dense<0xFF800000> : vector<128xf32>
    %67 = vector.multi_reduction <maximumf>, %66, %cst_23 [1] : vector<128x128xf32> to vector<128xf32>
    %68 = vector.shape_cast %67 : vector<128xf32> to vector<128x1xf32>
    %69 = vector.broadcast %68 : vector<128x1xf32> to vector<128x128xf32>
    %70 = arith.subf %66, %69 : vector<128x128xf32>
    %71 = math.exp %70 : vector<128x128xf32>
    %cst_24 = arith.constant dense<0.000000e+00> : vector<128xf32>
    %72 = vector.multi_reduction <add>, %71, %cst_24 [1] : vector<128x128xf32> to vector<128xf32>
    %73 = vector.shape_cast %72 : vector<128xf32> to vector<128x1xf32>
    %74 = tpu.reciprocal %73 {approx = true} : vector<128x1xf32> -> vector<128x1xf32>
    %75 = vector.broadcast %74 : vector<128x1xf32> to vector<128x128xf32>
    %76 = arith.mulf %71, %75 : vector<128x128xf32>
    %77 = arith.truncf %76 : vector<128x128xf32> to vector<128x128xbf16>
    %cst_25 = arith.constant dense<0.000000e+00> : vector<32x128xf32>
    %78 = tpu.matmul %65, %77, %cst_25 {dimension_numbers = #tpu.dot_dimension_numbers<[1], [1], [0], [0], [0, 0, 1, 0], [], []>} : vector<32x128xbf16>, vector<128x128xbf16>, vector<32x128xf32> -> vector<32x128xf32>
    %79 = arith.truncf %78 : vector<32x128xf32> to vector<32x128xbf16>
    %80 = vector.extract_strided_slice %9 {offsets = [128, 0], sizes = [32, 128], strides = [1, 1]} : vector<256x128xbf16> to vector<32x128xbf16>
    %81 = vector.extract_strided_slice %10 {offsets = [128, 0], sizes = [32, 128], strides = [1, 1]} : vector<256x128xbf16> to vector<32x128xbf16>
    %82 = vector.extract_strided_slice %11 {offsets = [128, 0], sizes = [32, 128], strides = [1, 1]} : vector<256x128xbf16> to vector<32x128xbf16>
    %cst_26 = arith.constant dense<0.000000e+00> : vector<128x128xf32>
    %83 = tpu.matmul %80, %81, %cst_26 {dimension_numbers = #tpu.dot_dimension_numbers<[0], [0], [1], [1], [0, 1, 1, 1], [], []>} : vector<32x128xbf16>, vector<32x128xbf16>, vector<128x128xf32> -> vector<128x128xf32>
    %cst_27 = arith.constant dense<0xFF800000> : vector<128xf32>
    %84 = vector.multi_reduction <maximumf>, %83, %cst_27 [1] : vector<128x128xf32> to vector<128xf32>
    %85 = vector.shape_cast %84 : vector<128xf32> to vector<128x1xf32>
    %86 = vector.broadcast %85 : vector<128x1xf32> to vector<128x128xf32>
    %87 = arith.subf %83, %86 : vector<128x128xf32>
    %88 = math.exp %87 : vector<128x128xf32>
    %cst_28 = arith.constant dense<0.000000e+00> : vector<128xf32>
    %89 = vector.multi_reduction <add>, %88, %cst_28 [1] : vector<128x128xf32> to vector<128xf32>
    %90 = vector.shape_cast %89 : vector<128xf32> to vector<128x1xf32>
    %91 = tpu.reciprocal %90 {approx = true} : vector<128x1xf32> -> vector<128x1xf32>
    %92 = vector.broadcast %91 : vector<128x1xf32> to vector<128x128xf32>
    %93 = arith.mulf %88, %92 : vector<128x128xf32>
    %94 = arith.truncf %93 : vector<128x128xf32> to vector<128x128xbf16>
    %cst_29 = arith.constant dense<0.000000e+00> : vector<32x128xf32>
    %95 = tpu.matmul %82, %94, %cst_29 {dimension_numbers = #tpu.dot_dimension_numbers<[1], [1], [0], [0], [0, 0, 1, 0], [], []>} : vector<32x128xbf16>, vector<128x128xbf16>, vector<32x128xf32> -> vector<32x128xf32>
    %96 = arith.truncf %95 : vector<32x128xf32> to vector<32x128xbf16>
    %97 = vector.extract_strided_slice %9 {offsets = [160, 0], sizes = [32, 128], strides = [1, 1]} : vector<256x128xbf16> to vector<32x128xbf16>
    %98 = vector.extract_strided_slice %10 {offsets = [160, 0], sizes = [32, 128], strides = [1, 1]} : vector<256x128xbf16> to vector<32x128xbf16>
    %99 = vector.extract_strided_slice %11 {offsets = [160, 0], sizes = [32, 128], strides = [1, 1]} : vector<256x128xbf16> to vector<32x128xbf16>
    %cst_30 = arith.constant dense<0.000000e+00> : vector<128x128xf32>
    %100 = tpu.matmul %97, %98, %cst_30 {dimension_numbers = #tpu.dot_dimension_numbers<[0], [0], [1], [1], [0, 1, 1, 1], [], []>} : vector<32x128xbf16>, vector<32x128xbf16>, vector<128x128xf32> -> vector<128x128xf32>
    %cst_31 = arith.constant dense<0xFF800000> : vector<128xf32>
    %101 = vector.multi_reduction <maximumf>, %100, %cst_31 [1] : vector<128x128xf32> to vector<128xf32>
    %102 = vector.shape_cast %101 : vector<128xf32> to vector<128x1xf32>
    %103 = vector.broadcast %102 : vector<128x1xf32> to vector<128x128xf32>
    %104 = arith.subf %100, %103 : vector<128x128xf32>
    %105 = math.exp %104 : vector<128x128xf32>
    %cst_32 = arith.constant dense<0.000000e+00> : vector<128xf32>
    %106 = vector.multi_reduction <add>, %105, %cst_32 [1] : vector<128x128xf32> to vector<128xf32>
    %107 = vector.shape_cast %106 : vector<128xf32> to vector<128x1xf32>
    %108 = tpu.reciprocal %107 {approx = true} : vector<128x1xf32> -> vector<128x1xf32>
    %109 = vector.broadcast %108 : vector<128x1xf32> to vector<128x128xf32>
    %110 = arith.mulf %105, %109 : vector<128x128xf32>
    %111 = arith.truncf %110 : vector<128x128xf32> to vector<128x128xbf16>
    %cst_33 = arith.constant dense<0.000000e+00> : vector<32x128xf32>
    %112 = tpu.matmul %99, %111, %cst_33 {dimension_numbers = #tpu.dot_dimension_numbers<[1], [1], [0], [0], [0, 0, 1, 0], [], []>} : vector<32x128xbf16>, vector<128x128xbf16>, vector<32x128xf32> -> vector<32x128xf32>
    %113 = arith.truncf %112 : vector<32x128xf32> to vector<32x128xbf16>
    %114 = vector.extract_strided_slice %9 {offsets = [192, 0], sizes = [32, 128], strides = [1, 1]} : vector<256x128xbf16> to vector<32x128xbf16>
    %115 = vector.extract_strided_slice %10 {offsets = [192, 0], sizes = [32, 128], strides = [1, 1]} : vector<256x128xbf16> to vector<32x128xbf16>
    %116 = vector.extract_strided_slice %11 {offsets = [192, 0], sizes = [32, 128], strides = [1, 1]} : vector<256x128xbf16> to vector<32x128xbf16>
    %cst_34 = arith.constant dense<0.000000e+00> : vector<128x128xf32>
    %117 = tpu.matmul %114, %115, %cst_34 {dimension_numbers = #tpu.dot_dimension_numbers<[0], [0], [1], [1], [0, 1, 1, 1], [], []>} : vector<32x128xbf16>, vector<32x128xbf16>, vector<128x128xf32> -> vector<128x128xf32>
    %cst_35 = arith.constant dense<0xFF800000> : vector<128xf32>
    %118 = vector.multi_reduction <maximumf>, %117, %cst_35 [1] : vector<128x128xf32> to vector<128xf32>
    %119 = vector.shape_cast %118 : vector<128xf32> to vector<128x1xf32>
    %120 = vector.broadcast %119 : vector<128x1xf32> to vector<128x128xf32>
    %121 = arith.subf %117, %120 : vector<128x128xf32>
    %122 = math.exp %121 : vector<128x128xf32>
    %cst_36 = arith.constant dense<0.000000e+00> : vector<128xf32>
    %123 = vector.multi_reduction <add>, %122, %cst_36 [1] : vector<128x128xf32> to vector<128xf32>
    %124 = vector.shape_cast %123 : vector<128xf32> to vector<128x1xf32>
    %125 = tpu.reciprocal %124 {approx = true} : vector<128x1xf32> -> vector<128x1xf32>
    %126 = vector.broadcast %125 : vector<128x1xf32> to vector<128x128xf32>
    %127 = arith.mulf %122, %126 : vector<128x128xf32>
    %128 = arith.truncf %127 : vector<128x128xf32> to vector<128x128xbf16>
    %cst_37 = arith.constant dense<0.000000e+00> : vector<32x128xf32>
    %129 = tpu.matmul %116, %128, %cst_37 {dimension_numbers = #tpu.dot_dimension_numbers<[1], [1], [0], [0], [0, 0, 1, 0], [], []>} : vector<32x128xbf16>, vector<128x128xbf16>, vector<32x128xf32> -> vector<32x128xf32>
    %130 = arith.truncf %129 : vector<32x128xf32> to vector<32x128xbf16>
    %131 = vector.extract_strided_slice %9 {offsets = [224, 0], sizes = [32, 128], strides = [1, 1]} : vector<256x128xbf16> to vector<32x128xbf16>
    %132 = vector.extract_strided_slice %10 {offsets = [224, 0], sizes = [32, 128], strides = [1, 1]} : vector<256x128xbf16> to vector<32x128xbf16>
    %133 = vector.extract_strided_slice %11 {offsets = [224, 0], sizes = [32, 128], strides = [1, 1]} : vector<256x128xbf16> to vector<32x128xbf16>
    %cst_38 = arith.constant dense<0.000000e+00> : vector<128x128xf32>
    %134 = tpu.matmul %131, %132, %cst_38 {dimension_numbers = #tpu.dot_dimension_numbers<[0], [0], [1], [1], [0, 1, 1, 1], [], []>} : vector<32x128xbf16>, vector<32x128xbf16>, vector<128x128xf32> -> vector<128x128xf32>
    %cst_39 = arith.constant dense<0xFF800000> : vector<128xf32>
    %135 = vector.multi_reduction <maximumf>, %134, %cst_39 [1] : vector<128x128xf32> to vector<128xf32>
    %136 = vector.shape_cast %135 : vector<128xf32> to vector<128x1xf32>
    %137 = vector.broadcast %136 : vector<128x1xf32> to vector<128x128xf32>
    %138 = arith.subf %134, %137 : vector<128x128xf32>
    %139 = math.exp %138 : vector<128x128xf32>
    %cst_40 = arith.constant dense<0.000000e+00> : vector<128xf32>
    %140 = vector.multi_reduction <add>, %139, %cst_40 [1] : vector<128x128xf32> to vector<128xf32>
    %141 = vector.shape_cast %140 : vector<128xf32> to vector<128x1xf32>
    %142 = tpu.reciprocal %141 {approx = true} : vector<128x1xf32> -> vector<128x1xf32>
    %143 = vector.broadcast %142 : vector<128x1xf32> to vector<128x128xf32>
    %144 = arith.mulf %139, %143 : vector<128x128xf32>
    %145 = arith.truncf %144 : vector<128x128xf32> to vector<128x128xbf16>
    %cst_41 = arith.constant dense<0.000000e+00> : vector<32x128xf32>
    %146 = tpu.matmul %133, %145, %cst_41 {dimension_numbers = #tpu.dot_dimension_numbers<[1], [1], [0], [0], [0, 0, 1, 0], [], []>} : vector<32x128xbf16>, vector<128x128xbf16>, vector<32x128xf32> -> vector<32x128xf32>
    %147 = arith.truncf %146 : vector<32x128xf32> to vector<32x128xbf16>
    %148 = tpu.concatenate %28, %45, %62, %79, %96, %113, %130, %147 in 0 : vector<32x128xbf16>, vector<32x128xbf16>, vector<32x128xbf16>, vector<32x128xbf16>, vector<32x128xbf16>, vector<32x128xbf16>, vector<32x128xbf16>, vector<32x128xbf16> -> vector<256x128xbf16>
    %c0_42 = arith.constant 0 : index
    %c0_43 = arith.constant 0 : index
    %149 = vector.load %arg4[%c0_42, %c0_43] : memref<32x256xbf16, #tpu.memory_space<vmem>>, vector<32x256xbf16>
    %cst_44 = arith.constant dense<0.000000e+00> : vector<32x128xf32>
    %150 = tpu.matmul %149, %148, %cst_44 {dimension_numbers = #tpu.dot_dimension_numbers<[1], [0], [0], [1], [0, 0, 1, 1], [], []>} : vector<32x256xbf16>, vector<256x128xbf16>, vector<32x128xf32> -> vector<32x128xf32>
    %c0_45 = arith.constant 0 : index
    %c0_46 = arith.constant 0 : index
    %151 = vector.load %arg5[%c0_45, %c0_46] : memref<32x1xf32, #tpu.memory_space<vmem>>, vector<32x1xf32>
    %152 = vector.broadcast %151 : vector<32x1xf32> to vector<32x128xf32>
    %153 = arith.addf %150, %152 : vector<32x128xf32>
    %c0_47 = arith.constant 0 : index
    %c0_48 = arith.constant 0 : index
    %154 = vector.load %arg6[%c0_47, %c0_48] : memref<32x128xf32, #tpu.memory_space<vmem>>, vector<32x128xf32>
    tpu.vector_store %arg6[%c0_47, %c0_48], %153 {strides = array<i32>} : memref<32x128xf32, #tpu.memory_space<vmem>>, vector<32x128xf32>,
    return
  }
}

</mosaic_0001>

<llo_original>
// kernel: tpu_custom_call.1
$region0: #{tpu_custom_call.1}
  #allocation0 [shape = 'u32[]', space=smem, size = 0x4, offset = 0x4, fixed_abs, tag = 'smem constant byte address 0x4 - core index']
  #allocation1 [shape = 'u32[72,128]{1,0:T(1,128)}', space=vmem, size = 0x9000, scoped, tag = 'internal scratch']
  %s0 = inlined_call_operand.vmem [shape: bf16[32,128], index: 0, kind: input, shape index: {}]
  %s1 = inlined_call_operand.vmem [shape: bf16[256,32], index: 1, kind: input, shape index: {}]
  %s2 = inlined_call_operand.vmem [shape: bf16[256,32], index: 2, kind: input, shape index: {}]
  %s3 = inlined_call_operand.vmem [shape: bf16[256,32], index: 3, kind: input, shape index: {}]
  %s4 = inlined_call_operand.vmem [shape: bf16[32,256], index: 4, kind: input, shape index: {}]
  %s5 = inlined_call_operand.vmem [shape: f32[32,1], index: 5, kind: input, shape index: {}]
  %s6 = inlined_call_operand.hbm [shape: f32[32,128], index: 6, kind: output, shape index: {}]
  %s7 = sld [smem:[#allocation0]]
  $region34: #{tpu_custom_call.1} parent=0
    _
  %s9 = ssub.s32 1, %s7
  %s10 = scalar_select 0, %s9, %s7
  $region1: #{tpu_custom_call.1} parent=0
    #allocation2 [shape = 'u8[16384]{0}', space=vmem, size = 0x4000, scoped, tag = 'output window, operand 0, single buffered']
    #allocation3 [shape = 's32[1]{0}', space=sflag, size = 0x4, scoped, tag = 'scoped memory for tpu_custom_call.1']
    %11 = vsyncpa [#allocation3], 0
    // Predicated region
    $region2: #{tpu_custom_call.1} parent=1 // pred_check
      _
    $region3: #{tpu_custom_call.1} parent=1 // pred_check_branch
      %13 = sbr.rel (0) target = $region5
    $region4: #{tpu_custom_call.1} parent=1 // pred_region
      _
    $region5: #{tpu_custom_call.1} parent=1 // pred_fallthru
      _
    // Predicated region
    $region6: #{tpu_custom_call.1} parent=1 // pred_check
      _
    $region7: #{tpu_custom_call.1} parent=1 // pred_check_branch
      %15 = sbr.rel (0) target = $region9
    $region8: #{tpu_custom_call.1} parent=1 // pred_region
      _
    $region9: #{tpu_custom_call.1} parent=1 // pred_fallthru
      _
    // Predicated region
    $region10: #{tpu_custom_call.1} parent=1 // pred_check
      _
    $region11: #{tpu_custom_call.1} parent=1 // pred_check_branch
      %17 = sbr.rel (0) target = $region13
    $region12: #{tpu_custom_call.1} parent=1 // pred_region
      _
    $region13: #{tpu_custom_call.1} parent=1 // pred_fallthru
      _
    // Predicated region
    $region14: #{tpu_custom_call.1} parent=1 // pred_check
      _
    $region15: #{tpu_custom_call.1} parent=1 // pred_check_branch
      %19 = sbr.rel (0) target = $region17
    $region16: #{tpu_custom_call.1} parent=1 // pred_region
      _
    $region17: #{tpu_custom_call.1} parent=1 // pred_fallthru
      _
    // Predicated region
    $region18: #{tpu_custom_call.1} parent=1 // pred_check
      _
    $region19: #{tpu_custom_call.1} parent=1 // pred_check_branch
      %21 = sbr.rel (0) target = $region21
    $region20: #{tpu_custom_call.1} parent=1 // pred_region
      _
    $region21: #{tpu_custom_call.1} parent=1 // pred_fallthru
      _
    // Predicated region
    $region22: #{tpu_custom_call.1} parent=1 // pred_check
      _
    $region23: #{tpu_custom_call.1} parent=1 // pred_check_branch
      %23 = sbr.rel (0) target = $region25
    $region24: #{tpu_custom_call.1} parent=1 // pred_region
      _
    $region25: #{tpu_custom_call.1} parent=1 // pred_fallthru
      _
    %v25 = vld [vmem:[%s0] sm:$0xf]
    %v26 = vld [vmem:[%s0 + $0x4] sm:$0xf]
    %v27 = vld [vmem:[%s0 + $0x8] sm:$0xf]
    %v28 = vld [vmem:[%s0 + $0xc] sm:$0xf]
    %v29 = vld [vmem:[%s1] sm:$0xf]
    %v30 = vld [vmem:[%s1 + $0x4] sm:$0xf]
    %v31 = vld [vmem:[%s1 + $0x8] sm:$0xf]
    %v32 = vld [vmem:[%s1 + $0xc] sm:$0xf]
    %v33 = vld [vmem:[%s1 + $0x10] sm:$0xf]
    %v34 = vld [vmem:[%s1 + $0x14] sm:$0xf]
    %v35 = vld [vmem:[%s1 + $0x18] sm:$0xf]
    %v36 = vld [vmem:[%s1 + $0x1c] sm:$0xf]
    %v37 = vld [vmem:[%s1 + $0x20] sm:$0xf]
    %v38 = vld [vmem:[%s1 + $0x24] sm:$0xf]
    %v39 = vld [vmem:[%s1 + $0x28] sm:$0xf]
    %v40 = vld [vmem:[%s1 + $0x2c] sm:$0xf]
    %v41 = vld [vmem:[%s1 + $0x30] sm:$0xf]
    %v42 = vld [vmem:[%s1 + $0x34] sm:$0xf]
    %v43 = vld [vmem:[%s1 + $0x38] sm:$0xf]
    %v44 = vld [vmem:[%s1 + $0x3c] sm:$0xf]
    %v45 = vld [vmem:[%s1 + $0x40] sm:$0xf]
    %v46 = vld [vmem:[%s1 + $0x44] sm:$0xf]
    %v47 = vld [vmem:[%s1 + $0x48] sm:$0xf]
    %v48 = vld [vmem:[%s1 + $0x4c] sm:$0xf]
    %v49 = vld [vmem:[%s1 + $0x50] sm:$0xf]
    %v50 = vld [vmem:[%s1 + $0x54] sm:$0xf]
    %v51 = vld [vmem:[%s1 + $0x58] sm:$0xf]
    %v52 = vld [vmem:[%s1 + $0x5c] sm:$0xf]
    %v53 = vld [vmem:[%s1 + $0x60] sm:$0xf]
    %v54 = vld [vmem:[%s1 + $0x64] sm:$0xf]
    %v55 = vld [vmem:[%s1 + $0x68] sm:$0xf]
    %v56 = vld [vmem:[%s1 + $0x6c] sm:$0xf]
    %v57 = vld [vmem:[%s1 + $0x70] sm:$0xf]
    %v58 = vld [vmem:[%s1 + $0x74] sm:$0xf]
    %v59 = vld [vmem:[%s1 + $0x78] sm:$0xf]
    %v60 = vld [vmem:[%s1 + $0x7c] sm:$0xf]
    %v93 = vunpack.c.l.b16 %v29
    %v94 = vunpack.c.l.b16 %v30
    %v95 = vunpack.c.l.b16 %v31
    %v96 = vunpack.c.l.b16 %v32
    %v97 = vunpack.c.l.b16 %v33
    %v98 = vunpack.c.l.b16 %v34
    %v99 = vunpack.c.l.b16 %v35
    %v100 = vunpack.c.l.b16 %v36
    %v101 = vunpack.c.l.b16 %v37
    %v102 = vunpack.c.l.b16 %v38
    %v103 = vunpack.c.l.b16 %v39
    %v104 = vunpack.c.l.b16 %v40
    %v105 = vunpack.c.l.b16 %v41
    %v106 = vunpack.c.l.b16 %v42
    %v107 = vunpack.c.l.b16 %v43
    %v108 = vunpack.c.l.b16 %v44
    %v109 = vunpack.c.l.b16 %v45
    %v110 = vunpack.c.l.b16 %v46
    %v111 = vunpack.c.l.b16 %v47
    %v112 = vunpack.c.l.b16 %v48
    %v113 = vunpack.c.l.b16 %v49
    %v114 = vunpack.c.l.b16 %v50
    %v115 = vunpack.c.l.b16 %v51
    %v116 = vunpack.c.l.b16 %v52
    %v117 = vunpack.c.l.b16 %v53
    %v118 = vunpack.c.l.b16 %v54
    %v119 = vunpack.c.l.b16 %v55
    %v120 = vunpack.c.l.b16 %v56
    %v121 = vunpack.c.l.b16 %v57
    %v122 = vunpack.c.l.b16 %v58
    %v123 = vunpack.c.l.b16 %v59
    %v124 = vunpack.c.l.b16 %v60
    %v125 = vpack.c.b16 %v94, %v93
    %v126 = vpack.c.b16 %v96, %v95
    %v127 = vpack.c.b16 %v98, %v97
    %v128 = vpack.c.b16 %v100, %v99
    %v129 = vpack.c.b16 %v102, %v101
    %v130 = vpack.c.b16 %v104, %v103
    %v131 = vpack.c.b16 %v106, %v105
    %v132 = vpack.c.b16 %v108, %v107
    %v133 = vpack.c.b16 %v110, %v109
    %v134 = vpack.c.b16 %v112, %v111
    %v135 = vpack.c.b16 %v114, %v113
    %v136 = vpack.c.b16 %v116, %v115
    %v137 = vpack.c.b16 %v118, %v117
    %v138 = vpack.c.b16 %v120, %v119
    %v139 = vpack.c.b16 %v122, %v121
    %v140 = vpack.c.b16 %v124, %v123
    %v145 = vunpack.c.l.b16 %v25
    %v146 = vunpack.c.l.b16 %v26
    %v147 = vunpack.c.l.b16 %v27
    %v148 = vunpack.c.l.b16 %v28
    %v149 = vpack.c.b16 %v146, %v145
    %v150 = vpack.c.b16 %v148, %v147
    %vm153 = vcmask 261120
    %v155 = vsel %vm153, %v125, 0
    %v158 = vsel %vm153, %v126, 0
    %v161 = vsel %vm153, %v127, 0
    %v164 = vsel %vm153, %v128, 0
    %v167 = vsel %vm153, %v129, 0
    %v170 = vsel %vm153, %v130, 0
    %v173 = vsel %vm153, %v131, 0
    %v176 = vsel %vm153, %v132, 0
    %v179 = vsel %vm153, %v133, 0
    %v182 = vsel %vm153, %v134, 0
    %v185 = vsel %vm153, %v135, 0
    %v188 = vsel %vm153, %v136, 0
    %v191 = vsel %vm153, %v137, 0
    %v194 = vsel %vm153, %v138, 0
    %v197 = vsel %vm153, %v139, 0
    %v200 = vsel %vm153, %v140, 0
    %202 = vmatpush.bf16.msra.mxu0 0
    %203 = vmatpush.bf16.msra.mxu0 0
    %204 = vmatpush.bf16.msra.mxu0 0
    %205 = vmatpush.bf16.msra.mxu0 0
    %206 = vmatpush.bf16.msra.mxu0 0
    %207 = vmatpush.bf16.msra.mxu0 0
    %208 = vmatpush.bf16.msra.mxu0 %v150
    %209 = vmatpush.bf16.msra.mxu0 %v149
    %210 = vmatmul.bf16.gmra.mxu0 %v155
    %v211 = vpop.f32.mrf.mxu0
    %v212 = vadd.f32 0.0, %v211
    %v213 = vpop.f32.mrf.mxu0
    %v214 = vadd.f32 0.0, %v213
    %215 = vmatmul.bf16.gmra.mxu0 %v158
    %v216 = vpop.f32.mrf.mxu0
    %v217 = vadd.f32 0.0, %v216
    %v218 = vpop.f32.mrf.mxu0
    %v219 = vadd.f32 0.0, %v218
    %220 = vmatmul.bf16.gmra.mxu0 %v161
    %v221 = vpop.f32.mrf.mxu0
    %v222 = vadd.f32 0.0, %v221
    %v223 = vpop.f32.mrf.mxu0
    %v224 = vadd.f32 0.0, %v223
    %225 = vmatmul.bf16.gmra.mxu0 %v164
    %v226 = vpop.f32.mrf.mxu0
    %v227 = vadd.f32 0.0, %v226
    %v228 = vpop.f32.mrf.mxu0
    %v229 = vadd.f32 0.0, %v228
    %230 = vmatmul.bf16.gmra.mxu0 %v167
    %v231 = vpop.f32.mrf.mxu0
    %v232 = vadd.f32 0.0, %v231
    %v233 = vpop.f32.mrf.mxu0
    %v234 = vadd.f32 0.0, %v233
    %235 = vmatmul.bf16.gmra.mxu0 %v170
    %v236 = vpop.f32.mrf.mxu0
    %v237 = vadd.f32 0.0, %v236
    %v238 = vpop.f32.mrf.mxu0
    %v239 = vadd.f32 0.0, %v238
    %240 = vmatmul.bf16.gmra.mxu0 %v173
    %v241 = vpop.f32.mrf.mxu0
    %v242 = vadd.f32 0.0, %v241
    %v243 = vpop.f32.mrf.mxu0
    %v244 = vadd.f32 0.0, %v243
    %245 = vmatmul.bf16.gmra.mxu0 %v176
    %v246 = vpop.f32.mrf.mxu0
    %v247 = vadd.f32 0.0, %v246
    %v248 = vpop.f32.mrf.mxu0
    %v249 = vadd.f32 0.0, %v248
    %250 = vmatmul.bf16.gmra.mxu0 %v179
    %v251 = vpop.f32.mrf.mxu0
    %v252 = vadd.f32 0.0, %v251
    %v253 = vpop.f32.mrf.mxu0
    %v254 = vadd.f32 0.0, %v253
    %255 = vmatmul.bf16.gmra.mxu0 %v182
    %v256 = vpop.f32.mrf.mxu0
    %v257 = vadd.f32 0.0, %v256
    %v258 = vpop.f32.mrf.mxu0
    %v259 = vadd.f32 0.0, %v258
    %260 = vmatmul.bf16.gmra.mxu0 %v185
    %v261 = vpop.f32.mrf.mxu0
    %v262 = vadd.f32 0.0, %v261
    %v263 = vpop.f32.mrf.mxu0
    %v264 = vadd.f32 0.0, %v263
    %265 = vmatmul.bf16.gmra.mxu0 %v188
    %v266 = vpop.f32.mrf.mxu0
    %v267 = vadd.f32 0.0, %v266
    %v268 = vpop.f32.mrf.mxu0
    %v269 = vadd.f32 0.0, %v268
    %270 = vmatmul.bf16.gmra.mxu0 %v191
    %v271 = vpop.f32.mrf.mxu0
    %v272 = vadd.f32 0.0, %v271
    %v273 = vpop.f32.mrf.mxu0
    %v274 = vadd.f32 0.0, %v273
    %275 = vmatmul.bf16.gmra.mxu0 %v194
    %v276 = vpop.f32.mrf.mxu0
    %v277 = vadd.f32 0.0, %v276
    %v278 = vpop.f32.mrf.mxu0
    %v279 = vadd.f32 0.0, %v278
    %280 = vmatmul.bf16.gmra.mxu0 %v197
    %v281 = vpop.f32.mrf.mxu0
    %v282 = vadd.f32 0.0, %v281
    %v283 = vpop.f32.mrf.mxu0
    %v284 = vadd.f32 0.0, %v283
    %285 = vmatmul.bf16.gmra.mxu0 %v200
    %v286 = vpop.f32.mrf.mxu0
    %v287 = vadd.f32 0.0, %v286
    %v288 = vpop.f32.mrf.mxu0
    %v289 = vadd.f32 0.0, %v288
    %290 = vdwg.mxu0
    %v291 = vld [vmem:[%s2] sm:$0xf]
    %v292 = vld [vmem:[%s2 + $0x4] sm:$0xf]
    %v293 = vld [vmem:[%s2 + $0x8] sm:$0xf]
    %v294 = vld [vmem:[%s2 + $0xc] sm:$0xf]
    %v295 = vld [vmem:[%s2 + $0x10] sm:$0xf]
    %v296 = vld [vmem:[%s2 + $0x14] sm:$0xf]
    %v297 = vld [vmem:[%s2 + $0x18] sm:$0xf]
    %v298 = vld [vmem:[%s2 + $0x1c] sm:$0xf]
    %v299 = vld [vmem:[%s2 + $0x20] sm:$0xf]
    %v300 = vld [vmem:[%s2 + $0x24] sm:$0xf]
    %v301 = vld [vmem:[%s2 + $0x28] sm:$0xf]
    %v302 = vld [vmem:[%s2 + $0x2c] sm:$0xf]
    %v303 = vld [vmem:[%s2 + $0x30] sm:$0xf]
    %v304 = vld [vmem:[%s2 + $0x34] sm:$0xf]
    %v305 = vld [vmem:[%s2 + $0x38] sm:$0xf]
    %v306 = vld [vmem:[%s2 + $0x3c] sm:$0xf]
    %v307 = vld [vmem:[%s2 + $0x40] sm:$0xf]
    %v308 = vld [vmem:[%s2 + $0x44] sm:$0xf]
    %v309 = vld [vmem:[%s2 + $0x48] sm:$0xf]
    %v310 = vld [vmem:[%s2 + $0x4c] sm:$0xf]
    %v311 = vld [vmem:[%s2 + $0x50] sm:$0xf]
    %v312 = vld [vmem:[%s2 + $0x54] sm:$0xf]
    %v313 = vld [vmem:[%s2 + $0x58] sm:$0xf]
    %v314 = vld [vmem:[%s2 + $0x5c] sm:$0xf]
    %v315 = vld [vmem:[%s2 + $0x60] sm:$0xf]
    %v316 = vld [vmem:[%s2 + $0x64] sm:$0xf]
    %v317 = vld [vmem:[%s2 + $0x68] sm:$0xf]
    %v318 = vld [vmem:[%s2 + $0x6c] sm:$0xf]
    %v319 = vld [vmem:[%s2 + $0x70] sm:$0xf]
    %v320 = vld [vmem:[%s2 + $0x74] sm:$0xf]
    %v321 = vld [vmem:[%s2 + $0x78] sm:$0xf]
    %v322 = vld [vmem:[%s2 + $0x7c] sm:$0xf]
    %v355 = vunpack.c.l.b16 %v291
    %v356 = vunpack.c.l.b16 %v292
    %v357 = vunpack.c.l.b16 %v293
    %v358 = vunpack.c.l.b16 %v294
    %v359 = vunpack.c.l.b16 %v295
    %v360 = vunpack.c.l.b16 %v296
    %v361 = vunpack.c.l.b16 %v297
    %v362 = vunpack.c.l.b16 %v298
    %v363 = vunpack.c.l.b16 %v299
    %v364 = vunpack.c.l.b16 %v300
    %v365 = vunpack.c.l.b16 %v301
    %v366 = vunpack.c.l.b16 %v302
    %v367 = vunpack.c.l.b16 %v303
    %v368 = vunpack.c.l.b16 %v304
    %v369 = vunpack.c.l.b16 %v305
    %v370 = vunpack.c.l.b16 %v306
    %v371 = vunpack.c.l.b16 %v307
    %v372 = vunpack.c.l.b16 %v308
    %v373 = vunpack.c.l.b16 %v309
    %v374 = vunpack.c.l.b16 %v310
    %v375 = vunpack.c.l.b16 %v311
    %v376 = vunpack.c.l.b16 %v312
    %v377 = vunpack.c.l.b16 %v313
    %v378 = vunpack.c.l.b16 %v314
    %v379 = vunpack.c.l.b16 %v315
    %v380 = vunpack.c.l.b16 %v316
    %v381 = vunpack.c.l.b16 %v317
    %v382 = vunpack.c.l.b16 %v318
    %v383 = vunpack.c.l.b16 %v319
    %v384 = vunpack.c.l.b16 %v320
    %v385 = vunpack.c.l.b16 %v321
    %v386 = vunpack.c.l.b16 %v322
    %v387 = vpack.c.b16 %v356, %v355
    %v388 = vpack.c.b16 %v358, %v357
    %v389 = vpack.c.b16 %v360, %v359
    %v390 = vpack.c.b16 %v362, %v361
    %v391 = vpack.c.b16 %v364, %v363
    %v392 = vpack.c.b16 %v366, %v365
    %v393 = vpack.c.b16 %v368, %v367
    %v394 = vpack.c.b16 %v370, %v369
    %v395 = vpack.c.b16 %v372, %v371
    %v396 = vpack.c.b16 %v374, %v373
    %v397 = vpack.c.b16 %v376, %v375
    %v398 = vpack.c.b16 %v378, %v377
    %v399 = vpack.c.b16 %v380, %v379
    %v400 = vpack.c.b16 %v382, %v381
    %v401 = vpack.c.b16 %v384, %v383
    %v402 = vpack.c.b16 %v386, %v385
    %v404 = vsel %vm153, %v387, 0
    %v407 = vsel %vm153, %v388, 0
    %v410 = vsel %vm153, %v389, 0
    %v413 = vsel %vm153, %v390, 0
    %v416 = vsel %vm153, %v391, 0
    %v419 = vsel %vm153, %v392, 0
    %v422 = vsel %vm153, %v393, 0
    %v425 = vsel %vm153, %v394, 0
    %v428 = vsel %vm153, %v395, 0
    %v431 = vsel %vm153, %v396, 0
    %v434 = vsel %vm153, %v397, 0
    %v437 = vsel %vm153, %v398, 0
    %v440 = vsel %vm153, %v399, 0
    %v443 = vsel %vm153, %v400, 0
    %v446 = vsel %vm153, %v401, 0
    %v449 = vsel %vm153, %v402, 0
    %451 = vmatpush.bf16.msra.mxu0 0
    %452 = vmatpush.bf16.msra.mxu0 0
    %453 = vmatpush.bf16.msra.mxu0 0
    %454 = vmatpush.bf16.msra.mxu0 0
    %455 = vmatpush.bf16.msra.mxu0 0
    %456 = vmatpush.bf16.msra.mxu0 0
    %457 = vmatpush.bf16.msra.mxu0 %v150
    %458 = vmatpush.bf16.msra.mxu0 %v149
    %459 = vmatmul.bf16.gmra.mxu0 %v404
    %v460 = vpop.f32.mrf.mxu0
    %v461 = vadd.f32 0.0, %v460
    %v462 = vpop.f32.mrf.mxu0
    %v463 = vadd.f32 0.0, %v462
    %464 = vmatmul.bf16.gmra.mxu0 %v407
    %v465 = vpop.f32.mrf.mxu0
    %v466 = vadd.f32 0.0, %v465
    %v467 = vpop.f32.mrf.mxu0
    %v468 = vadd.f32 0.0, %v467
    %469 = vmatmul.bf16.gmra.mxu0 %v410
    %v470 = vpop.f32.mrf.mxu0
    %v471 = vadd.f32 0.0, %v470
    %v472 = vpop.f32.mrf.mxu0
    %v473 = vadd.f32 0.0, %v472
    %474 = vmatmul.bf16.gmra.mxu0 %v413
    %v475 = vpop.f32.mrf.mxu0
    %v476 = vadd.f32 0.0, %v475
    %v477 = vpop.f32.mrf.mxu0
    %v478 = vadd.f32 0.0, %v477
    %479 = vmatmul.bf16.gmra.mxu0 %v416
    %v480 = vpop.f32.mrf.mxu0
    %v481 = vadd.f32 0.0, %v480
    %v482 = vpop.f32.mrf.mxu0
    %v483 = vadd.f32 0.0, %v482
    %484 = vmatmul.bf16.gmra.mxu0 %v419
    %v485 = vpop.f32.mrf.mxu0
    %v486 = vadd.f32 0.0, %v485
    %v487 = vpop.f32.mrf.mxu0
    %v488 = vadd.f32 0.0, %v487
    %489 = vmatmul.bf16.gmra.mxu0 %v422
    %v490 = vpop.f32.mrf.mxu0
    %v491 = vadd.f32 0.0, %v490
    %v492 = vpop.f32.mrf.mxu0
    %v493 = vadd.f32 0.0, %v492
    %494 = vmatmul.bf16.gmra.mxu0 %v425
    %v495 = vpop.f32.mrf.mxu0
    %v496 = vadd.f32 0.0, %v495
    %v497 = vpop.f32.mrf.mxu0
    %v498 = vadd.f32 0.0, %v497
    %499 = vmatmul.bf16.gmra.mxu0 %v428
    %v500 = vpop.f32.mrf.mxu0
    %v501 = vadd.f32 0.0, %v500
    %v502 = vpop.f32.mrf.mxu0
    %v503 = vadd.f32 0.0, %v502
    %504 = vmatmul.bf16.gmra.mxu0 %v431
    %v505 = vpop.f32.mrf.mxu0
    %v506 = vadd.f32 0.0, %v505
    %v507 = vpop.f32.mrf.mxu0
    %v508 = vadd.f32 0.0, %v507
    %509 = vmatmul.bf16.gmra.mxu0 %v434
    %v510 = vpop.f32.mrf.mxu0
    %v511 = vadd.f32 0.0, %v510
    %v512 = vpop.f32.mrf.mxu0
    %v513 = vadd.f32 0.0, %v512
    %514 = vmatmul.bf16.gmra.mxu0 %v437
    %v515 = vpop.f32.mrf.mxu0
    %v516 = vadd.f32 0.0, %v515
    %v517 = vpop.f32.mrf.mxu0
    %v518 = vadd.f32 0.0, %v517
    %519 = vmatmul.bf16.gmra.mxu0 %v440
    %v520 = vpop.f32.mrf.mxu0
    %v521 = vadd.f32 0.0, %v520
    %v522 = vpop.f32.mrf.mxu0
    %v523 = vadd.f32 0.0, %v522
    %524 = vmatmul.bf16.gmra.mxu0 %v443
    %v525 = vpop.f32.mrf.mxu0
    %v526 = vadd.f32 0.0, %v525
    %v527 = vpop.f32.mrf.mxu0
    %v528 = vadd.f32 0.0, %v527
    %529 = vmatmul.bf16.gmra.mxu0 %v446
    %v530 = vpop.f32.mrf.mxu0
    %v531 = vadd.f32 0.0, %v530
    %v532 = vpop.f32.mrf.mxu0
    %v533 = vadd.f32 0.0, %v532
    %534 = vmatmul.bf16.gmra.mxu0 %v449
    %v535 = vpop.f32.mrf.mxu0
    %v536 = vadd.f32 0.0, %v535
    %v537 = vpop.f32.mrf.mxu0
    %v538 = vadd.f32 0.0, %v537
    %539 = vdwg.mxu0
    %v540 = vld [vmem:[%s3] sm:$0xf]
    %v541 = vld [vmem:[%s3 + $0x4] sm:$0xf]
    %v542 = vld [vmem:[%s3 + $0x8] sm:$0xf]
    %v543 = vld [vmem:[%s3 + $0xc] sm:$0xf]
    %v544 = vld [vmem:[%s3 + $0x10] sm:$0xf]
    %v545 = vld [vmem:[%s3 + $0x14] sm:$0xf]
    %v546 = vld [vmem:[%s3 + $0x18] sm:$0xf]
    %v547 = vld [vmem:[%s3 + $0x1c] sm:$0xf]
    %v548 = vld [vmem:[%s3 + $0x20] sm:$0xf]
    %v549 = vld [vmem:[%s3 + $0x24] sm:$0xf]
    %v550 = vld [vmem:[%s3 + $0x28] sm:$0xf]
    %v551 = vld [vmem:[%s3 + $0x2c] sm:$0xf]
    %v552 = vld [vmem:[%s3 + $0x30] sm:$0xf]
    %v553 = vld [vmem:[%s3 + $0x34] sm:$0xf]
    %v554 = vld [vmem:[%s3 + $0x38] sm:$0xf]
    %v555 = vld [vmem:[%s3 + $0x3c] sm:$0xf]
    %v556 = vld [vmem:[%s3 + $0x40] sm:$0xf]
    %v557 = vld [vmem:[%s3 + $0x44] sm:$0xf]
    %v558 = vld [vmem:[%s3 + $0x48] sm:$0xf]
    %v559 = vld [vmem:[%s3 + $0x4c] sm:$0xf]
    %v560 = vld [vmem:[%s3 + $0x50] sm:$0xf]
    %v561 = vld [vmem:[%s3 + $0x54] sm:$0xf]
    %v562 = vld [vmem:[%s3 + $0x58] sm:$0xf]
    %v563 = vld [vmem:[%s3 + $0x5c] sm:$0xf]
    %v564 = vld [vmem:[%s3 + $0x60] sm:$0xf]
    %v565 = vld [vmem:[%s3 + $0x64] sm:$0xf]
    %v566 = vld [vmem:[%s3 + $0x68] sm:$0xf]
    %v567 = vld [vmem:[%s3 + $0x6c] sm:$0xf]
    %v568 = vld [vmem:[%s3 + $0x70] sm:$0xf]
    %v569 = vld [vmem:[%s3 + $0x74] sm:$0xf]
    %v570 = vld [vmem:[%s3 + $0x78] sm:$0xf]
    %v571 = vld [vmem:[%s3 + $0x7c] sm:$0xf]
    %v604 = vunpack.c.l.b16 %v540
    %v605 = vunpack.c.l.b16 %v541
    %v606 = vunpack.c.l.b16 %v542
    %v607 = vunpack.c.l.b16 %v543
    %v608 = vunpack.c.l.b16 %v544
    %v609 = vunpack.c.l.b16 %v545
    %v610 = vunpack.c.l.b16 %v546
    %v611 = vunpack.c.l.b16 %v547
    %v612 = vunpack.c.l.b16 %v548
    %v613 = vunpack.c.l.b16 %v549
    %v614 = vunpack.c.l.b16 %v550
    %v615 = vunpack.c.l.b16 %v551
    %v616 = vunpack.c.l.b16 %v552
    %v617 = vunpack.c.l.b16 %v553
    %v618 = vunpack.c.l.b16 %v554
    %v619 = vunpack.c.l.b16 %v555
    %v620 = vunpack.c.l.b16 %v556
    %v621 = vunpack.c.l.b16 %v557
    %v622 = vunpack.c.l.b16 %v558
    %v623 = vunpack.c.l.b16 %v559
    %v624 = vunpack.c.l.b16 %v560
    %v625 = vunpack.c.l.b16 %v561
    %v626 = vunpack.c.l.b16 %v562
    %v627 = vunpack.c.l.b16 %v563
    %v628 = vunpack.c.l.b16 %v564
    %v629 = vunpack.c.l.b16 %v565
    %v630 = vunpack.c.l.b16 %v566
    %v631 = vunpack.c.l.b16 %v567
    %v632 = vunpack.c.l.b16 %v568
    %v633 = vunpack.c.l.b16 %v569
    %v634 = vunpack.c.l.b16 %v570
    %v635 = vunpack.c.l.b16 %v571
    %v636 = vpack.c.b16 %v605, %v604
    %v637 = vpack.c.b16 %v607, %v606
    %v638 = vpack.c.b16 %v609, %v608
    %v639 = vpack.c.b16 %v611, %v610
    %v640 = vpack.c.b16 %v613, %v612
    %v641 = vpack.c.b16 %v615, %v614
    %v642 = vpack.c.b16 %v617, %v616
    %v643 = vpack.c.b16 %v619, %v618
    %v644 = vpack.c.b16 %v621, %v620
    %v645 = vpack.c.b16 %v623, %v622
    %v646 = vpack.c.b16 %v625, %v624
    %v647 = vpack.c.b16 %v627, %v626
    %v648 = vpack.c.b16 %v629, %v628
    %v649 = vpack.c.b16 %v631, %v630
    %v650 = vpack.c.b16 %v633, %v632
    %v651 = vpack.c.b16 %v635, %v634
    %v653 = vsel %vm153, %v636, 0
    %v656 = vsel %vm153, %v637, 0
    %v659 = vsel %vm153, %v638, 0
    %v662 = vsel %vm153, %v639, 0
    %v665 = vsel %vm153, %v640, 0
    %v668 = vsel %vm153, %v641, 0
    %v671 = vsel %vm153, %v642, 0
    %v674 = vsel %vm153, %v643, 0
    %v677 = vsel %vm153, %v644, 0
    %v680 = vsel %vm153, %v645, 0
    %v683 = vsel %vm153, %v646, 0
    %v686 = vsel %vm153, %v647, 0
    %v689 = vsel %vm153, %v648, 0
    %v692 = vsel %vm153, %v649, 0
    %v695 = vsel %vm153, %v650, 0
    %v698 = vsel %vm153, %v651, 0
    %700 = vmatpush.bf16.msra.mxu0 0
    %701 = vmatpush.bf16.msra.mxu0 0
    %702 = vmatpush.bf16.msra.mxu0 0
    %703 = vmatpush.bf16.msra.mxu0 0
    %704 = vmatpush.bf16.msra.mxu0 0
    %705 = vmatpush.bf16.msra.mxu0 0
    %706 = vmatpush.bf16.msra.mxu0 %v150
    %707 = vmatpush.bf16.msra.mxu0 %v149
    %708 = vmatmul.bf16.gmra.mxu0 %v653
    %v709 = vpop.f32.mrf.mxu0
    %v710 = vadd.f32 0.0, %v709
    %v711 = vpop.f32.mrf.mxu0
    %v712 = vadd.f32 0.0, %v711
    %713 = vmatmul.bf16.gmra.mxu0 %v656
    %v714 = vpop.f32.mrf.mxu0
    %v715 = vadd.f32 0.0, %v714
    %v716 = vpop.f32.mrf.mxu0
    %v717 = vadd.f32 0.0, %v716
    %718 = vmatmul.bf16.gmra.mxu0 %v659
    %v719 = vpop.f32.mrf.mxu0
    %v720 = vadd.f32 0.0, %v719
    %v721 = vpop.f32.mrf.mxu0
    %v722 = vadd.f32 0.0, %v721
    %723 = vmatmul.bf16.gmra.mxu0 %v662
    %v724 = vpop.f32.mrf.mxu0
    %v725 = vadd.f32 0.0, %v724
    %v726 = vpop.f32.mrf.mxu0
    %v727 = vadd.f32 0.0, %v726
    %728 = vmatmul.bf16.gmra.mxu0 %v665
    %v729 = vpop.f32.mrf.mxu0
    %v730 = vadd.f32 0.0, %v729
    %v731 = vpop.f32.mrf.mxu0
    %v732 = vadd.f32 0.0, %v731
    %733 = vmatmul.bf16.gmra.mxu0 %v668
    %v734 = vpop.f32.mrf.mxu0
    %v735 = vadd.f32 0.0, %v734
    %v736 = vpop.f32.mrf.mxu0
    %v737 = vadd.f32 0.0, %v736
    %738 = vmatmul.bf16.gmra.mxu0 %v671
    %v739 = vpop.f32.mrf.mxu0
    %v740 = vadd.f32 0.0, %v739
    %v741 = vpop.f32.mrf.mxu0
    %v742 = vadd.f32 0.0, %v741
    %743 = vmatmul.bf16.gmra.mxu0 %v674
    %v744 = vpop.f32.mrf.mxu0
    %v745 = vadd.f32 0.0, %v744
    %v746 = vpop.f32.mrf.mxu0
    %v747 = vadd.f32 0.0, %v746
    %748 = vmatmul.bf16.gmra.mxu0 %v677
    %v749 = vpop.f32.mrf.mxu0
    %v750 = vadd.f32 0.0, %v749
    %v751 = vpop.f32.mrf.mxu0
    %v752 = vadd.f32 0.0, %v751
    %753 = vmatmul.bf16.gmra.mxu0 %v680
    %v754 = vpop.f32.mrf.mxu0
    %v755 = vadd.f32 0.0, %v754
    %v756 = vpop.f32.mrf.mxu0
    %v757 = vadd.f32 0.0, %v756
    %758 = vmatmul.bf16.gmra.mxu0 %v683
    %v759 = vpop.f32.mrf.mxu0
    %v760 = vadd.f32 0.0, %v759
    %v761 = vpop.f32.mrf.mxu0
    %v762 = vadd.f32 0.0, %v761
    %763 = vmatmul.bf16.gmra.mxu0 %v686
    %v764 = vpop.f32.mrf.mxu0
    %v765 = vadd.f32 0.0, %v764
    %v766 = vpop.f32.mrf.mxu0
    %v767 = vadd.f32 0.0, %v766
    %768 = vmatmul.bf16.gmra.mxu0 %v689
    %v769 = vpop.f32.mrf.mxu0
    %v770 = vadd.f32 0.0, %v769
    %v771 = vpop.f32.mrf.mxu0
    %v772 = vadd.f32 0.0, %v771
    %773 = vmatmul.bf16.gmra.mxu0 %v692
    %v774 = vpop.f32.mrf.mxu0
    %v775 = vadd.f32 0.0, %v774
    %v776 = vpop.f32.mrf.mxu0
    %v777 = vadd.f32 0.0, %v776
    %778 = vmatmul.bf16.gmra.mxu0 %v695
    %v779 = vpop.f32.mrf.mxu0
    %v780 = vadd.f32 0.0, %v779
    %v781 = vpop.f32.mrf.mxu0
    %v782 = vadd.f32 0.0, %v781
    %783 = vmatmul.bf16.gmra.mxu0 %v698
    %v784 = vpop.f32.mrf.mxu0
    %v785 = vadd.f32 0.0, %v784
    %v786 = vpop.f32.mrf.mxu0
    %v787 = vadd.f32 0.0, %v786
    %788 = vdwg.mxu0
    %v789 = vmul.f32 %v212, 0.17677669
    %v790 = vmul.f32 %v214, 0.17677669
    %v791 = vmul.f32 %v217, 0.17677669
    %v792 = vmul.f32 %v219, 0.17677669
    %v793 = vmul.f32 %v222, 0.17677669
    %v794 = vmul.f32 %v224, 0.17677669
    %v795 = vmul.f32 %v227, 0.17677669
    %v796 = vmul.f32 %v229, 0.17677669
    %v797 = vmul.f32 %v232, 0.17677669
    %v798 = vmul.f32 %v234, 0.17677669
    %v799 = vmul.f32 %v237, 0.17677669
    %v800 = vmul.f32 %v239, 0.17677669
    %v801 = vmul.f32 %v242, 0.17677669
    %v802 = vmul.f32 %v244, 0.17677669
    %v803 = vmul.f32 %v247, 0.17677669
    %v804 = vmul.f32 %v249, 0.17677669
    %v805 = vmul.f32 %v252, 0.17677669
    %v806 = vmul.f32 %v254, 0.17677669
    %v807 = vmul.f32 %v257, 0.17677669
    %v808 = vmul.f32 %v259, 0.17677669
    %v809 = vmul.f32 %v262, 0.17677669
    %v810 = vmul.f32 %v264, 0.17677669
    %v811 = vmul.f32 %v267, 0.17677669
    %v812 = vmul.f32 %v269, 0.17677669
    %v813 = vmul.f32 %v272, 0.17677669
    %v814 = vmul.f32 %v274, 0.17677669
    %v815 = vmul.f32 %v277, 0.17677669
    %v816 = vmul.f32 %v279, 0.17677669
    %v817 = vmul.f32 %v282, 0.17677669
    %v818 = vmul.f32 %v284, 0.17677669
    %v819 = vmul.f32 %v287, 0.17677669
    %v820 = vmul.f32 %v289, 0.17677669
    %v821 = vpack.c.bf16 %v789, %v789
    %v822 = vpack.c.bf16 %v790, %v790
    %v823 = vpack.c.bf16 %v791, %v791
    %v824 = vpack.c.bf16 %v792, %v792
    %v825 = vpack.c.bf16 %v793, %v793
    %v826 = vpack.c.bf16 %v794, %v794
    %v827 = vpack.c.bf16 %v795, %v795
    %v828 = vpack.c.bf16 %v796, %v796
    %v829 = vpack.c.bf16 %v797, %v797
    %v830 = vpack.c.bf16 %v798, %v798
    %v831 = vpack.c.bf16 %v799, %v799
    %v832 = vpack.c.bf16 %v800, %v800
    %v833 = vpack.c.bf16 %v801, %v801
    %v834 = vpack.c.bf16 %v802, %v802
    %v835 = vpack.c.bf16 %v803, %v803
    %v836 = vpack.c.bf16 %v804, %v804
    %v837 = vpack.c.bf16 %v805, %v805
    %v838 = vpack.c.bf16 %v806, %v806
    %v839 = vpack.c.bf16 %v807, %v807
    %v840 = vpack.c.bf16 %v808, %v808
    %v841 = vpack.c.bf16 %v809, %v809
    %v842 = vpack.c.bf16 %v810, %v810
    %v843 = vpack.c.bf16 %v811, %v811
    %v844 = vpack.c.bf16 %v812, %v812
    %v845 = vpack.c.bf16 %v813, %v813
    %v846 = vpack.c.bf16 %v814, %v814
    %v847 = vpack.c.bf16 %v815, %v815
    %v848 = vpack.c.bf16 %v816, %v816
    %v849 = vpack.c.bf16 %v817, %v817
    %v850 = vpack.c.bf16 %v818, %v818
    %v851 = vpack.c.bf16 %v819, %v819
    %v852 = vpack.c.bf16 %v820, %v820
    %v853 = vpack.c.bf16 %v461, %v461
    %v854 = vpack.c.bf16 %v463, %v463
    %v855 = vpack.c.bf16 %v466, %v466
    %v856 = vpack.c.bf16 %v468, %v468
    %v857 = vpack.c.bf16 %v471, %v471
    %v858 = vpack.c.bf16 %v473, %v473
    %v859 = vpack.c.bf16 %v476, %v476
    %v860 = vpack.c.bf16 %v478, %v478
    %v861 = vpack.c.bf16 %v481, %v481
    %v862 = vpack.c.bf16 %v483, %v483
    %v863 = vpack.c.bf16 %v486, %v486
    %v864 = vpack.c.bf16 %v488, %v488
    %v865 = vpack.c.bf16 %v491, %v491
    %v866 = vpack.c.bf16 %v493, %v493
    %v867 = vpack.c.bf16 %v496, %v496
    %v868 = vpack.c.bf16 %v498, %v498
    %v869 = vpack.c.bf16 %v501, %v501
    %v870 = vpack.c.bf16 %v503, %v503
    %v871 = vpack.c.bf16 %v506, %v506
    %v872 = vpack.c.bf16 %v508, %v508
    %v873 = vpack.c.bf16 %v511, %v511
    %v874 = vpack.c.bf16 %v513, %v513
    %v875 = vpack.c.bf16 %v516, %v516
    %v876 = vpack.c.bf16 %v518, %v518
    %v877 = vpack.c.bf16 %v521, %v521
    %v878 = vpack.c.bf16 %v523, %v523
    %v879 = vpack.c.bf16 %v526, %v526
    %v880 = vpack.c.bf16 %v528, %v528
    %v881 = vpack.c.bf16 %v531, %v531
    %v882 = vpack.c.bf16 %v533, %v533
    %v883 = vpack.c.bf16 %v536, %v536
    %v884 = vpack.c.bf16 %v538, %v538
    %v885 = vpack.c.bf16 %v710, %v710
    %v886 = vpack.c.bf16 %v712, %v712
    %v887 = vpack.c.bf16 %v715, %v715
    %v888 = vpack.c.bf16 %v717, %v717
    %v889 = vpack.c.bf16 %v720, %v720
    %v890 = vpack.c.bf16 %v722, %v722
    %v891 = vpack.c.bf16 %v725, %v725
    %v892 = vpack.c.bf16 %v727, %v727
    %v893 = vpack.c.bf16 %v730, %v730
    %v894 = vpack.c.bf16 %v732, %v732
    %v895 = vpack.c.bf16 %v735, %v735
    %v896 = vpack.c.bf16 %v737, %v737
    %v897 = vpack.c.bf16 %v740, %v740
    %v898 = vpack.c.bf16 %v742, %v742
    %v899 = vpack.c.bf16 %v745, %v745
    %v900 = vpack.c.bf16 %v747, %v747
    %v901 = vpack.c.bf16 %v750, %v750
    %v902 = vpack.c.bf16 %v752, %v752
    %v903 = vpack.c.bf16 %v755, %v755
    %v904 = vpack.c.bf16 %v757, %v757
    %v905 = vpack.c.bf16 %v760, %v760
    %v906 = vpack.c.bf16 %v762, %v762
    %v907 = vpack.c.bf16 %v765, %v765
    %v908 = vpack.c.bf16 %v767, %v767
    %v909 = vpack.c.bf16 %v770, %v770
    %v910 = vpack.c.bf16 %v772, %v772
    %v911 = vpack.c.bf16 %v775, %v775
    %v912 = vpack.c.bf16 %v777, %v777
    %v913 = vpack.c.bf16 %v780, %v780
    %v914 = vpack.c.bf16 %v782, %v782
    %v915 = vpack.c.bf16 %v785, %v785
    %v916 = vpack.c.bf16 %v787, %v787
    %v921 = vunpack.c.l.b16 %v821
    %v922 = vunpack.c.l.b16 %v822
    %v923 = vunpack.c.l.b16 %v823
    %v924 = vunpack.c.l.b16 %v824
    %v925 = vpack.c.b16 %v922, %v921
    %v926 = vpack.c.b16 %v924, %v923
    %929 = vxpose.xlu0.c.b16.start [1/8] %v925, 128
    %930 = vxpose.xlu0.c.b16.cont [2/8] %v926, 128
    %931 = vxpose.xlu0.c.b16.cont [3/8] 0, 128
    %932 = vxpose.xlu0.c.b16.cont [4/8] 0, 128
    %933 = vxpose.xlu0.c.b16.cont [5/8] 0, 128
    %934 = vxpose.xlu0.c.b16.cont [6/8] 0, 128
    %935 = vxpose.xlu0.c.b16.cont [7/8] 0, 128
    %936 = vxpose.xlu0.c.b16.end [8/8] 0, 128
    %v937 = vpop.trf.xlu0
    %v938 = vpop.trf.xlu0
    %v939 = vpop.trf.xlu0
    %v940 = vpop.trf.xlu0
    %v941 = vpop.trf.xlu0
    %v942 = vpop.trf.xlu0
    %v943 = vpop.trf.xlu0
    %v944 = vpop.trf.xlu0
    %v949 = vunpack.c.l.b16 %v853
    %v950 = vunpack.c.l.b16 %v854
    %v951 = vunpack.c.l.b16 %v855
    %v952 = vunpack.c.l.b16 %v856
    %v953 = vpack.c.b16 %v950, %v949
    %v954 = vpack.c.b16 %v952, %v951
    %v958 = vsel %vm153, %v937, 0
    %v961 = vsel %vm153, %v938, 0
    %v964 = vsel %vm153, %v939, 0
    %v967 = vsel %vm153, %v940, 0
    %v970 = vsel %vm153, %v941, 0
    %v973 = vsel %vm153, %v942, 0
    %v976 = vsel %vm153, %v943, 0
    %v979 = vsel %vm153, %v944, 0
    %981 = vmatpush.bf16.msra.mxu0 0
    %982 = vmatpush.bf16.msra.mxu0 0
    %983 = vmatpush.bf16.msra.mxu0 0
    %984 = vmatpush.bf16.msra.mxu0 0
    %985 = vmatpush.bf16.msra.mxu0 0
    %986 = vmatpush.bf16.msra.mxu0 0
    %987 = vmatpush.bf16.msra.mxu0 %v954
    %988 = vmatpush.bf16.msra.mxu0 %v953
    %989 = vmatmul.bf16.gmra.mxu0 %v958
    %v990 = vpop.f32.mrf.mxu0
    %v991 = vadd.f32 0.0, %v990
    %v992 = vpop.f32.mrf.mxu0
    %v993 = vadd.f32 0.0, %v992
    %994 = vmatmul.bf16.gmra.mxu0 %v961
    %v995 = vpop.f32.mrf.mxu0
    %v996 = vadd.f32 0.0, %v995
    %v997 = vpop.f32.mrf.mxu0
    %v998 = vadd.f32 0.0, %v997
    %999 = vmatmul.bf16.gmra.mxu0 %v964
    %v1000 = vpop.f32.mrf.mxu0
    %v1001 = vadd.f32 0.0, %v1000
    %v1002 = vpop.f32.mrf.mxu0
    %v1003 = vadd.f32 0.0, %v1002
    %1004 = vmatmul.bf16.gmra.mxu0 %v967
    %v1005 = vpop.f32.mrf.mxu0
    %v1006 = vadd.f32 0.0, %v1005
    %v1007 = vpop.f32.mrf.mxu0
    %v1008 = vadd.f32 0.0, %v1007
    %1009 = vmatmul.bf16.gmra.mxu0 %v970
    %v1010 = vpop.f32.mrf.mxu0
    %v1011 = vadd.f32 0.0, %v1010
    %v1012 = vpop.f32.mrf.mxu0
    %v1013 = vadd.f32 0.0, %v1012
    %1014 = vmatmul.bf16.gmra.mxu0 %v973
    %v1015 = vpop.f32.mrf.mxu0
    %v1016 = vadd.f32 0.0, %v1015
    %v1017 = vpop.f32.mrf.mxu0
    %v1018 = vadd.f32 0.0, %v1017
    %1019 = vmatmul.bf16.gmra.mxu0 %v976
    %v1020 = vpop.f32.mrf.mxu0
    %v1021 = vadd.f32 0.0, %v1020
    %v1022 = vpop.f32.mrf.mxu0
    %v1023 = vadd.f32 0.0, %v1022
    %1024 = vmatmul.bf16.gmra.mxu0 %v979
    %v1025 = vpop.f32.mrf.mxu0
    %v1026 = vadd.f32 0.0, %v1025
    %v1027 = vpop.f32.mrf.mxu0
    %v1028 = vadd.f32 0.0, %v1027
    %1029 = vdwg.mxu0
    %1030 = vmax.xlane.f32.xlu0 %v991
    %v1031 = vpop.xlane.xlu0 %1030
    %1032 = vmax.xlane.f32.xlu0 %v993
    %v1033 = vpop.xlane.xlu0 %1032
    %1034 = vmax.xlane.f32.xlu0 %v996
    %v1035 = vpop.xlane.xlu0 %1034
    %1036 = vmax.xlane.f32.xlu0 %v998
    %v1037 = vpop.xlane.xlu0 %1036
    %1038 = vmax.xlane.f32.xlu0 %v1001
    %v1039 = vpop.xlane.xlu0 %1038
    %1040 = vmax.xlane.f32.xlu0 %v1003
    %v1041 = vpop.xlane.xlu0 %1040
    %1042 = vmax.xlane.f32.xlu0 %v1006
    %v1043 = vpop.xlane.xlu0 %1042
    %1044 = vmax.xlane.f32.xlu0 %v1008
    %v1045 = vpop.xlane.xlu0 %1044
    %1046 = vmax.xlane.f32.xlu0 %v1011
    %v1047 = vpop.xlane.xlu0 %1046
    %1048 = vmax.xlane.f32.xlu0 %v1013
    %v1049 = vpop.xlane.xlu0 %1048
    %1050 = vmax.xlane.f32.xlu0 %v1016
    %v1051 = vpop.xlane.xlu0 %1050
    %1052 = vmax.xlane.f32.xlu0 %v1018
    %v1053 = vpop.xlane.xlu0 %1052
    %1054 = vmax.xlane.f32.xlu0 %v1021
    %v1055 = vpop.xlane.xlu0 %1054
    %1056 = vmax.xlane.f32.xlu0 %v1023
    %v1057 = vpop.xlane.xlu0 %1056
    %1058 = vmax.xlane.f32.xlu0 %v1026
    %v1059 = vpop.xlane.xlu0 %1058
    %1060 = vmax.xlane.f32.xlu0 %v1028
    %v1061 = vpop.xlane.xlu0 %1060
    %v1062 = vsub.f32 %v991, %v1031
    %v1063 = vsub.f32 %v993, %v1033
    %v1064 = vsub.f32 %v996, %v1035
    %v1065 = vsub.f32 %v998, %v1037
    %v1066 = vsub.f32 %v1001, %v1039
    %v1067 = vsub.f32 %v1003, %v1041
    %v1068 = vsub.f32 %v1006, %v1043
    %v1069 = vsub.f32 %v1008, %v1045
    %v1070 = vsub.f32 %v1011, %v1047
    %v1071 = vsub.f32 %v1013, %v1049
    %v1072 = vsub.f32 %v1016, %v1051
    %v1073 = vsub.f32 %v1018, %v1053
    %v1074 = vsub.f32 %v1021, %v1055
    %v1075 = vsub.f32 %v1023, %v1057
    %v1076 = vsub.f32 %v1026, %v1059
    %v1077 = vsub.f32 %v1028, %v1061
    %v1078 = vmul.f32 %v1062, 1.442695
    %v1079 = vpow.pop %v1078
    %v1080 = vmul.f32 %v1063, 1.442695
    %v1081 = vpow.pop %v1080
    %v1082 = vmul.f32 %v1064, 1.442695
    %v1083 = vpow.pop %v1082
    %v1084 = vmul.f32 %v1065, 1.442695
    %v1085 = vpow.pop %v1084
    %v1086 = vmul.f32 %v1066, 1.442695
    %v1087 = vpow.pop %v1086
    %v1088 = vmul.f32 %v1067, 1.442695
    %v1089 = vpow.pop %v1088
    %v1090 = vmul.f32 %v1068, 1.442695
    %v1091 = vpow.pop %v1090
    %v1092 = vmul.f32 %v1069, 1.442695
    %v1093 = vpow.pop %v1092
    %v1094 = vmul.f32 %v1070, 1.442695
    %v1095 = vpow.pop %v1094
    %v1096 = vmul.f32 %v1071, 1.442695
    %v1097 = vpow.pop %v1096
    %v1098 = vmul.f32 %v1072, 1.442695
    %v1099 = vpow.pop %v1098
    %v1100 = vmul.f32 %v1073, 1.442695
    %v1101 = vpow.pop %v1100
    %v1102 = vmul.f32 %v1074, 1.442695
    %v1103 = vpow.pop %v1102
    %v1104 = vmul.f32 %v1075, 1.442695
    %v1105 = vpow.pop %v1104
    %v1106 = vmul.f32 %v1076, 1.442695
    %v1107 = vpow.pop %v1106
    %v1108 = vmul.f32 %v1077, 1.442695
    %v1109 = vpow.pop %v1108
    %1110 = vadd.xlane.f32.xlu0 %v1079
    %v1111 = vpop.xlane.xlu0 %1110
    %1112 = vadd.xlane.f32.xlu0 %v1081
    %v1113 = vpop.xlane.xlu0 %1112
    %1114 = vadd.xlane.f32.xlu0 %v1083
    %v1115 = vpop.xlane.xlu0 %1114
    %1116 = vadd.xlane.f32.xlu0 %v1085
    %v1117 = vpop.xlane.xlu0 %1116
    %1118 = vadd.xlane.f32.xlu0 %v1087
    %v1119 = vpop.xlane.xlu0 %1118
    %1120 = vadd.xlane.f32.xlu0 %v1089
    %v1121 = vpop.xlane.xlu0 %1120
    %1122 = vadd.xlane.f32.xlu0 %v1091
    %v1123 = vpop.xlane.xlu0 %1122
    %1124 = vadd.xlane.f32.xlu0 %v1093
    %v1125 = vpop.xlane.xlu0 %1124
    %1126 = vadd.xlane.f32.xlu0 %v1095
    %v1127 = vpop.xlane.xlu0 %1126
    %1128 = vadd.xlane.f32.xlu0 %v1097
    %v1129 = vpop.xlane.xlu0 %1128
    %1130 = vadd.xlane.f32.xlu0 %v1099
    %v1131 = vpop.xlane.xlu0 %1130
    %1132 = vadd.xlane.f32.xlu0 %v1101
    %v1133 = vpop.xlane.xlu0 %1132
    %1134 = vadd.xlane.f32.xlu0 %v1103
    %v1135 = vpop.xlane.xlu0 %1134
    %1136 = vadd.xlane.f32.xlu0 %v1105
    %v1137 = vpop.xlane.xlu0 %1136
    %1138 = vadd.xlane.f32.xlu0 %v1107
    %v1139 = vpop.xlane.xlu0 %1138
    %1140 = vadd.xlane.f32.xlu0 %v1109
    %v1141 = vpop.xlane.xlu0 %1140
    %v1142 = vrcp.pop %v1111
    %v1143 = vrcp.pop %v1113
    %v1144 = vrcp.pop %v1115
    %v1145 = vrcp.pop %v1117
    %v1146 = vrcp.pop %v1119
    %v1147 = vrcp.pop %v1121
    %v1148 = vrcp.pop %v1123
    %v1149 = vrcp.pop %v1125
    %v1150 = vrcp.pop %v1127
    %v1151 = vrcp.pop %v1129
    %v1152 = vrcp.pop %v1131
    %v1153 = vrcp.pop %v1133
    %v1154 = vrcp.pop %v1135
    %v1155 = vrcp.pop %v1137
    %v1156 = vrcp.pop %v1139
    %v1157 = vrcp.pop %v1141
    %v1158 = vmul.f32 %v1079, %v1142
    %v1159 = vmul.f32 %v1081, %v1143
    %v1160 = vmul.f32 %v1083, %v1144
    %v1161 = vmul.f32 %v1085, %v1145
    %v1162 = vmul.f32 %v1087, %v1146
    %v1163 = vmul.f32 %v1089, %v1147
    %v1164 = vmul.f32 %v1091, %v1148
    %v1165 = vmul.f32 %v1093, %v1149
    %v1166 = vmul.f32 %v1095, %v1150
    %v1167 = vmul.f32 %v1097, %v1151
    %v1168 = vmul.f32 %v1099, %v1152
    %v1169 = vmul.f32 %v1101, %v1153
    %v1170 = vmul.f32 %v1103, %v1154
    %v1171 = vmul.f32 %v1105, %v1155
    %v1172 = vmul.f32 %v1107, %v1156
    %v1173 = vmul.f32 %v1109, %v1157
    %v1174 = vpack.c.bf16 %v1159, %v1158
    %v1175 = vpack.c.bf16 %v1161, %v1160
    %v1176 = vpack.c.bf16 %v1163, %v1162
    %v1177 = vpack.c.bf16 %v1165, %v1164
    %v1178 = vpack.c.bf16 %v1167, %v1166
    %v1179 = vpack.c.bf16 %v1169, %v1168
    %v1180 = vpack.c.bf16 %v1171, %v1170
    %v1181 = vpack.c.bf16 %v1173, %v1172
    %v1186 = vunpack.c.l.b16 %v885
    %v1187 = vunpack.c.l.b16 %v886
    %v1188 = vunpack.c.l.b16 %v887
    %v1189 = vunpack.c.l.b16 %v888
    %v1190 = vpack.c.b16 %v1187, %v1186
    %v1191 = vpack.c.b16 %v1189, %v1188
    %1194 = vmatpush.bf16.xpose.msra.mxu0 %v1181
    %1195 = vmatpush.bf16.xpose.msra.mxu0 %v1180
    %1196 = vmatpush.bf16.xpose.msra.mxu0 %v1179
    %1197 = vmatpush.bf16.xpose.msra.mxu0 %v1178
    %1198 = vmatpush.bf16.xpose.msra.mxu0 %v1177
    %1199 = vmatpush.bf16.xpose.msra.mxu0 %v1176
    %1200 = vmatpush.bf16.xpose.msra.mxu0 %v1175
    %1201 = vmatpush.bf16.xpose.msra.mxu0 %v1174
    %1202 = vmatmul.bf16.gmra.mxu0 %v1190
    %v1203 = vpop.f32.mrf.mxu0
    %v1204 = vadd.f32 0.0, %v1203
    %v1205 = vpop.f32.mrf.mxu0
    %v1206 = vadd.f32 0.0, %v1205
    %1207 = vmatmul.bf16.gmra.mxu0 %v1191
    %v1208 = vpop.f32.mrf.mxu0
    %v1209 = vadd.f32 0.0, %v1208
    %v1210 = vpop.f32.mrf.mxu0
    %v1211 = vadd.f32 0.0, %v1210
    %1212 = vdwg.mxu0
    %v1213 = vpack.c.bf16 %v1204, %v1204
    %v1214 = vpack.c.bf16 %v1206, %v1206
    %v1215 = vpack.c.bf16 %v1209, %v1209
    %v1216 = vpack.c.bf16 %v1211, %v1211
    %v1221 = vunpack.c.l.b16 %v825
    %v1222 = vunpack.c.l.b16 %v826
    %v1223 = vunpack.c.l.b16 %v827
    %v1224 = vunpack.c.l.b16 %v828
    %v1225 = vpack.c.b16 %v1222, %v1221
    %v1226 = vpack.c.b16 %v1224, %v1223
    %1229 = vxpose.xlu0.c.b16.start [1/8] %v1225, 128
    %1230 = vxpose.xlu0.c.b16.cont [2/8] %v1226, 128
    %1231 = vxpose.xlu0.c.b16.cont [3/8] 0, 128
    %1232 = vxpose.xlu0.c.b16.cont [4/8] 0, 128
    %1233 = vxpose.xlu0.c.b16.cont [5/8] 0, 128
    %1234 = vxpose.xlu0.c.b16.cont [6/8] 0, 128
    %1235 = vxpose.xlu0.c.b16.cont [7/8] 0, 128
    %1236 = vxpose.xlu0.c.b16.end [8/8] 0, 128
    %v1237 = vpop.trf.xlu0
    %v1238 = vpop.trf.xlu0
    %v1239 = vpop.trf.xlu0
    %v1240 = vpop.trf.xlu0
    %v1241 = vpop.trf.xlu0
    %v1242 = vpop.trf.xlu0
    %v1243 = vpop.trf.xlu0
    %v1244 = vpop.trf.xlu0
    %v1249 = vunpack.c.l.b16 %v857
    %v1250 = vunpack.c.l.b16 %v858
    %v1251 = vunpack.c.l.b16 %v859
    %v1252 = vunpack.c.l.b16 %v860
    %v1253 = vpack.c.b16 %v1250, %v1249
    %v1254 = vpack.c.b16 %v1252, %v1251
    %v1258 = vsel %vm153, %v1237, 0
    %v1261 = vsel %vm153, %v1238, 0
    %v1264 = vsel %vm153, %v1239, 0
    %v1267 = vsel %vm153, %v1240, 0
    %v1270 = vsel %vm153, %v1241, 0
    %v1273 = vsel %vm153, %v1242, 0
    %v1276 = vsel %vm153, %v1243, 0
    %v1279 = vsel %vm153, %v1244, 0
    %1281 = vmatpush.bf16.msra.mxu0 0
    %1282 = vmatpush.bf16.msra.mxu0 0
    %1283 = vmatpush.bf16.msra.mxu0 0
    %1284 = vmatpush.bf16.msra.mxu0 0
    %1285 = vmatpush.bf16.msra.mxu0 0
    %1286 = vmatpush.bf16.msra.mxu0 0
    %1287 = vmatpush.bf16.msra.mxu0 %v1254
    %1288 = vmatpush.bf16.msra.mxu0 %v1253
    %1289 = vmatmul.bf16.gmra.mxu0 %v1258
    %v1290 = vpop.f32.mrf.mxu0
    %v1291 = vadd.f32 0.0, %v1290
    %v1292 = vpop.f32.mrf.mxu0
    %v1293 = vadd.f32 0.0, %v1292
    %1294 = vmatmul.bf16.gmra.mxu0 %v1261
    %v1295 = vpop.f32.mrf.mxu0
    %v1296 = vadd.f32 0.0, %v1295
    %v1297 = vpop.f32.mrf.mxu0
    %v1298 = vadd.f32 0.0, %v1297
    %1299 = vmatmul.bf16.gmra.mxu0 %v1264
    %v1300 = vpop.f32.mrf.mxu0
    %v1301 = vadd.f32 0.0, %v1300
    %v1302 = vpop.f32.mrf.mxu0
    %v1303 = vadd.f32 0.0, %v1302
    %1304 = vmatmul.bf16.gmra.mxu0 %v1267
    %v1305 = vpop.f32.mrf.mxu0
    %v1306 = vadd.f32 0.0, %v1305
    %v1307 = vpop.f32.mrf.mxu0
    %v1308 = vadd.f32 0.0, %v1307
    %1309 = vmatmul.bf16.gmra.mxu0 %v1270
    %v1310 = vpop.f32.mrf.mxu0
    %v1311 = vadd.f32 0.0, %v1310
    %v1312 = vpop.f32.mrf.mxu0
    %v1313 = vadd.f32 0.0, %v1312
    %1314 = vmatmul.bf16.gmra.mxu0 %v1273
    %v1315 = vpop.f32.mrf.mxu0
    %v1316 = vadd.f32 0.0, %v1315
    %v1317 = vpop.f32.mrf.mxu0
    %v1318 = vadd.f32 0.0, %v1317
    %1319 = vmatmul.bf16.gmra.mxu0 %v1276
    %v1320 = vpop.f32.mrf.mxu0
    %v1321 = vadd.f32 0.0, %v1320
    %v1322 = vpop.f32.mrf.mxu0
    %v1323 = vadd.f32 0.0, %v1322
    %1324 = vmatmul.bf16.gmra.mxu0 %v1279
    %v1325 = vpop.f32.mrf.mxu0
    %v1326 = vadd.f32 0.0, %v1325
    %v1327 = vpop.f32.mrf.mxu0
    %v1328 = vadd.f32 0.0, %v1327
    %1329 = vdwg.mxu0
    %1330 = vmax.xlane.f32.xlu0 %v1291
    %v1331 = vpop.xlane.xlu0 %1330
    %1332 = vmax.xlane.f32.xlu0 %v1293
    %v1333 = vpop.xlane.xlu0 %1332
    %1334 = vmax.xlane.f32.xlu0 %v1296
    %v1335 = vpop.xlane.xlu0 %1334
    %1336 = vmax.xlane.f32.xlu0 %v1298
    %v1337 = vpop.xlane.xlu0 %1336
    %1338 = vmax.xlane.f32.xlu0 %v1301
    %v1339 = vpop.xlane.xlu0 %1338
    %1340 = vmax.xlane.f32.xlu0 %v1303
    %v1341 = vpop.xlane.xlu0 %1340
    %1342 = vmax.xlane.f32.xlu0 %v1306
    %v1343 = vpop.xlane.xlu0 %1342
    %1344 = vmax.xlane.f32.xlu0 %v1308
    %v1345 = vpop.xlane.xlu0 %1344
    %1346 = vmax.xlane.f32.xlu0 %v1311
    %v1347 = vpop.xlane.xlu0 %1346
    %1348 = vmax.xlane.f32.xlu0 %v1313
    %v1349 = vpop.xlane.xlu0 %1348
    %1350 = vmax.xlane.f32.xlu0 %v1316
    %v1351 = vpop.xlane.xlu0 %1350
    %1352 = vmax.xlane.f32.xlu0 %v1318
    %v1353 = vpop.xlane.xlu0 %1352
    %1354 = vmax.xlane.f32.xlu0 %v1321
    %v1355 = vpop.xlane.xlu0 %1354
    %1356 = vmax.xlane.f32.xlu0 %v1323
    %v1357 = vpop.xlane.xlu0 %1356
    %1358 = vmax.xlane.f32.xlu0 %v1326
    %v1359 = vpop.xlane.xlu0 %1358
    %1360 = vmax.xlane.f32.xlu0 %v1328
    %v1361 = vpop.xlane.xlu0 %1360
    %v1362 = vsub.f32 %v1291, %v1331
    %v1363 = vsub.f32 %v1293, %v1333
    %v1364 = vsub.f32 %v1296, %v1335
    %v1365 = vsub.f32 %v1298, %v1337
    %v1366 = vsub.f32 %v1301, %v1339
    %v1367 = vsub.f32 %v1303, %v1341
    %v1368 = vsub.f32 %v1306, %v1343
    %v1369 = vsub.f32 %v1308, %v1345
    %v1370 = vsub.f32 %v1311, %v1347
    %v1371 = vsub.f32 %v1313, %v1349
    %v1372 = vsub.f32 %v1316, %v1351
    %v1373 = vsub.f32 %v1318, %v1353
    %v1374 = vsub.f32 %v1321, %v1355
    %v1375 = vsub.f32 %v1323, %v1357
    %v1376 = vsub.f32 %v1326, %v1359
    %v1377 = vsub.f32 %v1328, %v1361
    %v1378 = vmul.f32 %v1362, 1.442695
    %v1379 = vpow.pop %v1378
    %v1380 = vmul.f32 %v1363, 1.442695
    %v1381 = vpow.pop %v1380
    %v1382 = vmul.f32 %v1364, 1.442695
    %v1383 = vpow.pop %v1382
    %v1384 = vmul.f32 %v1365, 1.442695
    %v1385 = vpow.pop %v1384
    %v1386 = vmul.f32 %v1366, 1.442695
    %v1387 = vpow.pop %v1386
    %v1388 = vmul.f32 %v1367, 1.442695
    %v1389 = vpow.pop %v1388
    %v1390 = vmul.f32 %v1368, 1.442695
    %v1391 = vpow.pop %v1390
    %v1392 = vmul.f32 %v1369, 1.442695
    %v1393 = vpow.pop %v1392
    %v1394 = vmul.f32 %v1370, 1.442695
    %v1395 = vpow.pop %v1394
    %v1396 = vmul.f32 %v1371, 1.442695
    %v1397 = vpow.pop %v1396
    %v1398 = vmul.f32 %v1372, 1.442695
    %v1399 = vpow.pop %v1398
    %v1400 = vmul.f32 %v1373, 1.442695
    %v1401 = vpow.pop %v1400
    %v1402 = vmul.f32 %v1374, 1.442695
    %v1403 = vpow.pop %v1402
    %v1404 = vmul.f32 %v1375, 1.442695
    %v1405 = vpow.pop %v1404
    %v1406 = vmul.f32 %v1376, 1.442695
    %v1407 = vpow.pop %v1406
    %v1408 = vmul.f32 %v1377, 1.442695
    %v1409 = vpow.pop %v1408
    %1410 = vadd.xlane.f32.xlu0 %v1379
    %v1411 = vpop.xlane.xlu0 %1410
    %1412 = vadd.xlane.f32.xlu0 %v1381
    %v1413 = vpop.xlane.xlu0 %1412
    %1414 = vadd.xlane.f32.xlu0 %v1383
    %v1415 = vpop.xlane.xlu0 %1414
    %1416 = vadd.xlane.f32.xlu0 %v1385
    %v1417 = vpop.xlane.xlu0 %1416
    %1418 = vadd.xlane.f32.xlu0 %v1387
    %v1419 = vpop.xlane.xlu0 %1418
    %1420 = vadd.xlane.f32.xlu0 %v1389
    %v1421 = vpop.xlane.xlu0 %1420
    %1422 = vadd.xlane.f32.xlu0 %v1391
    %v1423 = vpop.xlane.xlu0 %1422
    %1424 = vadd.xlane.f32.xlu0 %v1393
    %v1425 = vpop.xlane.xlu0 %1424
    %1426 = vadd.xlane.f32.xlu0 %v1395
    %v1427 = vpop.xlane.xlu0 %1426
    %1428 = vadd.xlane.f32.xlu0 %v1397
    %v1429 = vpop.xlane.xlu0 %1428
    %1430 = vadd.xlane.f32.xlu0 %v1399
    %v1431 = vpop.xlane.xlu0 %1430
    %1432 = vadd.xlane.f32.xlu0 %v1401
    %v1433 = vpop.xlane.xlu0 %1432
    %1434 = vadd.xlane.f32.xlu0 %v1403
    %v1435 = vpop.xlane.xlu0 %1434
    %1436 = vadd.xlane.f32.xlu0 %v1405
    %v1437 = vpop.xlane.xlu0 %1436
    %1438 = vadd.xlane.f32.xlu0 %v1407
    %v1439 = vpop.xlane.xlu0 %1438
    %1440 = vadd.xlane.f32.xlu0 %v1409
    %v1441 = vpop.xlane.xlu0 %1440
    %v1442 = vrcp.pop %v1411
    %v1443 = vrcp.pop %v1413
    %v1444 = vrcp.pop %v1415
    %v1445 = vrcp.pop %v1417
    %v1446 = vrcp.pop %v1419
    %v1447 = vrcp.pop %v1421
    %v1448 = vrcp.pop %v1423
    %v1449 = vrcp.pop %v1425
    %v1450 = vrcp.pop %v1427
    %v1451 = vrcp.pop %v1429
    %v1452 = vrcp.pop %v1431
    %v1453 = vrcp.pop %v1433
    %v1454 = vrcp.pop %v1435
    %v1455 = vrcp.pop %v1437
    %v1456 = vrcp.pop %v1439
    %v1457 = vrcp.pop %v1441
    %v1458 = vmul.f32 %v1379, %v1442
    %v1459 = vmul.f32 %v1381, %v1443
    %v1460 = vmul.f32 %v1383, %v1444
    %v1461 = vmul.f32 %v1385, %v1445
    %v1462 = vmul.f32 %v1387, %v1446
    %v1463 = vmul.f32 %v1389, %v1447
    %v1464 = vmul.f32 %v1391, %v1448
    %v1465 = vmul.f32 %v1393, %v1449
    %v1466 = vmul.f32 %v1395, %v1450
    %v1467 = vmul.f32 %v1397, %v1451
    %v1468 = vmul.f32 %v1399, %v1452
    %v1469 = vmul.f32 %v1401, %v1453
    %v1470 = vmul.f32 %v1403, %v1454
    %v1471 = vmul.f32 %v1405, %v1455
    %v1472 = vmul.f32 %v1407, %v1456
    %v1473 = vmul.f32 %v1409, %v1457
    %v1474 = vpack.c.bf16 %v1459, %v1458
    %v1475 = vpack.c.bf16 %v1461, %v1460
    %v1476 = vpack.c.bf16 %v1463, %v1462
    %v1477 = vpack.c.bf16 %v1465, %v1464
    %v1478 = vpack.c.bf16 %v1467, %v1466
    %v1479 = vpack.c.bf16 %v1469, %v1468
    %v1480 = vpack.c.bf16 %v1471, %v1470
    %v1481 = vpack.c.bf16 %v1473, %v1472
    %v1486 = vunpack.c.l.b16 %v889
    %v1487 = vunpack.c.l.b16 %v890
    %v1488 = vunpack.c.l.b16 %v891
    %v1489 = vunpack.c.l.b16 %v892
    %v1490 = vpack.c.b16 %v1487, %v1486
    %v1491 = vpack.c.b16 %v1489, %v1488
    %1494 = vmatpush.bf16.xpose.msra.mxu0 %v1481
    %1495 = vmatpush.bf16.xpose.msra.mxu0 %v1480
    %1496 = vmatpush.bf16.xpose.msra.mxu0 %v1479
    %1497 = vmatpush.bf16.xpose.msra.mxu0 %v1478
    %1498 = vmatpush.bf16.xpose.msra.mxu0 %v1477
    %1499 = vmatpush.bf16.xpose.msra.mxu0 %v1476
    %1500 = vmatpush.bf16.xpose.msra.mxu0 %v1475
    %1501 = vmatpush.bf16.xpose.msra.mxu0 %v1474
    %1502 = vmatmul.bf16.gmra.mxu0 %v1490
    %v1503 = vpop.f32.mrf.mxu0
    %v1504 = vadd.f32 0.0, %v1503
    %v1505 = vpop.f32.mrf.mxu0
    %v1506 = vadd.f32 0.0, %v1505
    %1507 = vmatmul.bf16.gmra.mxu0 %v1491
    %v1508 = vpop.f32.mrf.mxu0
    %v1509 = vadd.f32 0.0, %v1508
    %v1510 = vpop.f32.mrf.mxu0
    %v1511 = vadd.f32 0.0, %v1510
    %1512 = vdwg.mxu0
    %v1513 = vpack.c.bf16 %v1504, %v1504
    %v1514 = vpack.c.bf16 %v1506, %v1506
    %v1515 = vpack.c.bf16 %v1509, %v1509
    %v1516 = vpack.c.bf16 %v1511, %v1511
    %v1521 = vunpack.c.l.b16 %v829
    %v1522 = vunpack.c.l.b16 %v830
    %v1523 = vunpack.c.l.b16 %v831
    %v1524 = vunpack.c.l.b16 %v832
    %v1525 = vpack.c.b16 %v1522, %v1521
    %v1526 = vpack.c.b16 %v1524, %v1523
    %1529 = vxpose.xlu0.c.b16.start [1/8] %v1525, 128
    %1530 = vxpose.xlu0.c.b16.cont [2/8] %v1526, 128
    %1531 = vxpose.xlu0.c.b16.cont [3/8] 0, 128
    %1532 = vxpose.xlu0.c.b16.cont [4/8] 0, 128
    %1533 = vxpose.xlu0.c.b16.cont [5/8] 0, 128
    %1534 = vxpose.xlu0.c.b16.cont [6/8] 0, 128
    %1535 = vxpose.xlu0.c.b16.cont [7/8] 0, 128
    %1536 = vxpose.xlu0.c.b16.end [8/8] 0, 128
    %v1537 = vpop.trf.xlu0
    %v1538 = vpop.trf.xlu0
    %v1539 = vpop.trf.xlu0
    %v1540 = vpop.trf.xlu0
    %v1541 = vpop.trf.xlu0
    %v1542 = vpop.trf.xlu0
    %v1543 = vpop.trf.xlu0
    %v1544 = vpop.trf.xlu0
    %v1549 = vunpack.c.l.b16 %v861
    %v1550 = vunpack.c.l.b16 %v862
    %v1551 = vunpack.c.l.b16 %v863
    %v1552 = vunpack.c.l.b16 %v864
    %v1553 = vpack.c.b16 %v1550, %v1549
    %v1554 = vpack.c.b16 %v1552, %v1551
    %v1558 = vsel %vm153, %v1537, 0
    %v1561 = vsel %vm153, %v1538, 0
    %v1564 = vsel %vm153, %v1539, 0
    %v1567 = vsel %vm153, %v1540, 0
    %v1570 = vsel %vm153, %v1541, 0
    %v1573 = vsel %vm153, %v1542, 0
    %v1576 = vsel %vm153, %v1543, 0
    %v1579 = vsel %vm153, %v1544, 0
    %1581 = vmatpush.bf16.msra.mxu0 0
    %1582 = vmatpush.bf16.msra.mxu0 0
    %1583 = vmatpush.bf16.msra.mxu0 0
    %1584 = vmatpush.bf16.msra.mxu0 0
    %1585 = vmatpush.bf16.msra.mxu0 0
    %1586 = vmatpush.bf16.msra.mxu0 0
    %1587 = vmatpush.bf16.msra.mxu0 %v1554
    %1588 = vmatpush.bf16.msra.mxu0 %v1553
    %1589 = vmatmul.bf16.gmra.mxu0 %v1558
    %v1590 = vpop.f32.mrf.mxu0
    %v1591 = vadd.f32 0.0, %v1590
    %v1592 = vpop.f32.mrf.mxu0
    %v1593 = vadd.f32 0.0, %v1592
    %1594 = vmatmul.bf16.gmra.mxu0 %v1561
    %v1595 = vpop.f32.mrf.mxu0
    %v1596 = vadd.f32 0.0, %v1595
    %v1597 = vpop.f32.mrf.mxu0
    %v1598 = vadd.f32 0.0, %v1597
    %1599 = vmatmul.bf16.gmra.mxu0 %v1564
    %v1600 = vpop.f32.mrf.mxu0
    %v1601 = vadd.f32 0.0, %v1600
    %v1602 = vpop.f32.mrf.mxu0
    %v1603 = vadd.f32 0.0, %v1602
    %1604 = vmatmul.bf16.gmra.mxu0 %v1567
    %v1605 = vpop.f32.mrf.mxu0
    %v1606 = vadd.f32 0.0, %v1605
    %v1607 = vpop.f32.mrf.mxu0
    %v1608 = vadd.f32 0.0, %v1607
    %1609 = vmatmul.bf16.gmra.mxu0 %v1570
    %v1610 = vpop.f32.mrf.mxu0
    %v1611 = vadd.f32 0.0, %v1610
    %v1612 = vpop.f32.mrf.mxu0
    %v1613 = vadd.f32 0.0, %v1612
    %1614 = vmatmul.bf16.gmra.mxu0 %v1573
    %v1615 = vpop.f32.mrf.mxu0
    %v1616 = vadd.f32 0.0, %v1615
    %v1617 = vpop.f32.mrf.mxu0
    %v1618 = vadd.f32 0.0, %v1617
    %1619 = vmatmul.bf16.gmra.mxu0 %v1576
    %v1620 = vpop.f32.mrf.mxu0
    %v1621 = vadd.f32 0.0, %v1620
    %v1622 = vpop.f32.mrf.mxu0
    %v1623 = vadd.f32 0.0, %v1622
    %1624 = vmatmul.bf16.gmra.mxu0 %v1579
    %v1625 = vpop.f32.mrf.mxu0
    %v1626 = vadd.f32 0.0, %v1625
    %v1627 = vpop.f32.mrf.mxu0
    %v1628 = vadd.f32 0.0, %v1627
    %1629 = vdwg.mxu0
    %1630 = vmax.xlane.f32.xlu0 %v1591
    %v1631 = vpop.xlane.xlu0 %1630
    %1632 = vmax.xlane.f32.xlu0 %v1593
    %v1633 = vpop.xlane.xlu0 %1632
    %1634 = vmax.xlane.f32.xlu0 %v1596
    %v1635 = vpop.xlane.xlu0 %1634
    %1636 = vmax.xlane.f32.xlu0 %v1598
    %v1637 = vpop.xlane.xlu0 %1636
    %1638 = vmax.xlane.f32.xlu0 %v1601
    %v1639 = vpop.xlane.xlu0 %1638
    %1640 = vmax.xlane.f32.xlu0 %v1603
    %v1641 = vpop.xlane.xlu0 %1640
    %1642 = vmax.xlane.f32.xlu0 %v1606
    %v1643 = vpop.xlane.xlu0 %1642
    %1644 = vmax.xlane.f32.xlu0 %v1608
    %v1645 = vpop.xlane.xlu0 %1644
    %1646 = vmax.xlane.f32.xlu0 %v1611
    %v1647 = vpop.xlane.xlu0 %1646
    %1648 = vmax.xlane.f32.xlu0 %v1613
    %v1649 = vpop.xlane.xlu0 %1648
    %1650 = vmax.xlane.f32.xlu0 %v1616
    %v1651 = vpop.xlane.xlu0 %1650
    %1652 = vmax.xlane.f32.xlu0 %v1618
    %v1653 = vpop.xlane.xlu0 %1652
    %1654 = vmax.xlane.f32.xlu0 %v1621
    %v1655 = vpop.xlane.xlu0 %1654
    %1656 = vmax.xlane.f32.xlu0 %v1623
    %v1657 = vpop.xlane.xlu0 %1656
    %1658 = vmax.xlane.f32.xlu0 %v1626
    %v1659 = vpop.xlane.xlu0 %1658
    %1660 = vmax.xlane.f32.xlu0 %v1628
    %v1661 = vpop.xlane.xlu0 %1660
    %v1662 = vsub.f32 %v1591, %v1631
    %v1663 = vsub.f32 %v1593, %v1633
    %v1664 = vsub.f32 %v1596, %v1635
    %v1665 = vsub.f32 %v1598, %v1637
    %v1666 = vsub.f32 %v1601, %v1639
    %v1667 = vsub.f32 %v1603, %v1641
    %v1668 = vsub.f32 %v1606, %v1643
    %v1669 = vsub.f32 %v1608, %v1645
    %v1670 = vsub.f32 %v1611, %v1647
    %v1671 = vsub.f32 %v1613, %v1649
    %v1672 = vsub.f32 %v1616, %v1651
    %v1673 = vsub.f32 %v1618, %v1653
    %v1674 = vsub.f32 %v1621, %v1655
    %v1675 = vsub.f32 %v1623, %v1657
    %v1676 = vsub.f32 %v1626, %v1659
    %v1677 = vsub.f32 %v1628, %v1661
    %v1678 = vmul.f32 %v1662, 1.442695
    %v1679 = vpow.pop %v1678
    %v1680 = vmul.f32 %v1663, 1.442695
    %v1681 = vpow.pop %v1680
    %v1682 = vmul.f32 %v1664, 1.442695
    %v1683 = vpow.pop %v1682
    %v1684 = vmul.f32 %v1665, 1.442695
    %v1685 = vpow.pop %v1684
    %v1686 = vmul.f32 %v1666, 1.442695
    %v1687 = vpow.pop %v1686
    %v1688 = vmul.f32 %v1667, 1.442695
    %v1689 = vpow.pop %v1688
    %v1690 = vmul.f32 %v1668, 1.442695
    %v1691 = vpow.pop %v1690
    %v1692 = vmul.f32 %v1669, 1.442695
    %v1693 = vpow.pop %v1692
    %v1694 = vmul.f32 %v1670, 1.442695
    %v1695 = vpow.pop %v1694
    %v1696 = vmul.f32 %v1671, 1.442695
    %v1697 = vpow.pop %v1696
    %v1698 = vmul.f32 %v1672, 1.442695
    %v1699 = vpow.pop %v1698
    %v1700 = vmul.f32 %v1673, 1.442695
    %v1701 = vpow.pop %v1700
    %v1702 = vmul.f32 %v1674, 1.442695
    %v1703 = vpow.pop %v1702
    %v1704 = vmul.f32 %v1675, 1.442695
    %v1705 = vpow.pop %v1704
    %v1706 = vmul.f32 %v1676, 1.442695
    %v1707 = vpow.pop %v1706
    %v1708 = vmul.f32 %v1677, 1.442695
    %v1709 = vpow.pop %v1708
    %1710 = vadd.xlane.f32.xlu0 %v1679
    %v1711 = vpop.xlane.xlu0 %1710
    %1712 = vadd.xlane.f32.xlu0 %v1681
    %v1713 = vpop.xlane.xlu0 %1712
    %1714 = vadd.xlane.f32.xlu0 %v1683
    %v1715 = vpop.xlane.xlu0 %1714
    %1716 = vadd.xlane.f32.xlu0 %v1685
    %v1717 = vpop.xlane.xlu0 %1716
    %1718 = vadd.xlane.f32.xlu0 %v1687
    %v1719 = vpop.xlane.xlu0 %1718
    %1720 = vadd.xlane.f32.xlu0 %v1689
    %v1721 = vpop.xlane.xlu0 %1720
    %1722 = vadd.xlane.f32.xlu0 %v1691
    %v1723 = vpop.xlane.xlu0 %1722
    %1724 = vadd.xlane.f32.xlu0 %v1693
    %v1725 = vpop.xlane.xlu0 %1724
    %1726 = vadd.xlane.f32.xlu0 %v1695
    %v1727 = vpop.xlane.xlu0 %1726
    %1728 = vadd.xlane.f32.xlu0 %v1697
    %v1729 = vpop.xlane.xlu0 %1728
    %1730 = vadd.xlane.f32.xlu0 %v1699
    %v1731 = vpop.xlane.xlu0 %1730
    %1732 = vadd.xlane.f32.xlu0 %v1701
    %v1733 = vpop.xlane.xlu0 %1732
    %1734 = vadd.xlane.f32.xlu0 %v1703
    %v1735 = vpop.xlane.xlu0 %1734
    %1736 = vadd.xlane.f32.xlu0 %v1705
    %v1737 = vpop.xlane.xlu0 %1736
    %1738 = vadd.xlane.f32.xlu0 %v1707
    %v1739 = vpop.xlane.xlu0 %1738
    %1740 = vadd.xlane.f32.xlu0 %v1709
    %v1741 = vpop.xlane.xlu0 %1740
    %v1742 = vrcp.pop %v1711
    %v1743 = vrcp.pop %v1713
    %v1744 = vrcp.pop %v1715
    %v1745 = vrcp.pop %v1717
    %v1746 = vrcp.pop %v1719
    %v1747 = vrcp.pop %v1721
    %v1748 = vrcp.pop %v1723
    %v1749 = vrcp.pop %v1725
    %v1750 = vrcp.pop %v1727
    %v1751 = vrcp.pop %v1729
    %v1752 = vrcp.pop %v1731
    %v1753 = vrcp.pop %v1733
    %v1754 = vrcp.pop %v1735
    %v1755 = vrcp.pop %v1737
    %v1756 = vrcp.pop %v1739
    %v1757 = vrcp.pop %v1741
    %v1758 = vmul.f32 %v1679, %v1742
    %v1759 = vmul.f32 %v1681, %v1743
    %v1760 = vmul.f32 %v1683, %v1744
    %v1761 = vmul.f32 %v1685, %v1745
    %v1762 = vmul.f32 %v1687, %v1746
    %v1763 = vmul.f32 %v1689, %v1747
    %v1764 = vmul.f32 %v1691, %v1748
    %v1765 = vmul.f32 %v1693, %v1749
    %v1766 = vmul.f32 %v1695, %v1750
    %v1767 = vmul.f32 %v1697, %v1751
    %v1768 = vmul.f32 %v1699, %v1752
    %v1769 = vmul.f32 %v1701, %v1753
    %v1770 = vmul.f32 %v1703, %v1754
    %v1771 = vmul.f32 %v1705, %v1755
    %v1772 = vmul.f32 %v1707, %v1756
    %v1773 = vmul.f32 %v1709, %v1757
    %v1774 = vpack.c.bf16 %v1759, %v1758
    %v1775 = vpack.c.bf16 %v1761, %v1760
    %v1776 = vpack.c.bf16 %v1763, %v1762
    %v1777 = vpack.c.bf16 %v1765, %v1764
    %v1778 = vpack.c.bf16 %v1767, %v1766
    %v1779 = vpack.c.bf16 %v1769, %v1768
    %v1780 = vpack.c.bf16 %v1771, %v1770
    %v1781 = vpack.c.bf16 %v1773, %v1772
    %v1786 = vunpack.c.l.b16 %v893
    %v1787 = vunpack.c.l.b16 %v894
    %v1788 = vunpack.c.l.b16 %v895
    %v1789 = vunpack.c.l.b16 %v896
    %v1790 = vpack.c.b16 %v1787, %v1786
    %v1791 = vpack.c.b16 %v1789, %v1788
    %1794 = vmatpush.bf16.xpose.msra.mxu0 %v1781
    %1795 = vmatpush.bf16.xpose.msra.mxu0 %v1780
    %1796 = vmatpush.bf16.xpose.msra.mxu0 %v1779
    %1797 = vmatpush.bf16.xpose.msra.mxu0 %v1778
    %1798 = vmatpush.bf16.xpose.msra.mxu0 %v1777
    %1799 = vmatpush.bf16.xpose.msra.mxu0 %v1776
    %1800 = vmatpush.bf16.xpose.msra.mxu0 %v1775
    %1801 = vmatpush.bf16.xpose.msra.mxu0 %v1774
    %1802 = vmatmul.bf16.gmra.mxu0 %v1790
    %v1803 = vpop.f32.mrf.mxu0
    %v1804 = vadd.f32 0.0, %v1803
    %v1805 = vpop.f32.mrf.mxu0
    %v1806 = vadd.f32 0.0, %v1805
    %1807 = vmatmul.bf16.gmra.mxu0 %v1791
    %v1808 = vpop.f32.mrf.mxu0
    %v1809 = vadd.f32 0.0, %v1808
    %v1810 = vpop.f32.mrf.mxu0
    %v1811 = vadd.f32 0.0, %v1810
    %1812 = vdwg.mxu0
    %v1813 = vpack.c.bf16 %v1804, %v1804
    %v1814 = vpack.c.bf16 %v1806, %v1806
    %v1815 = vpack.c.bf16 %v1809, %v1809
    %v1816 = vpack.c.bf16 %v1811, %v1811
    %v1821 = vunpack.c.l.b16 %v833
    %v1822 = vunpack.c.l.b16 %v834
    %v1823 = vunpack.c.l.b16 %v835
    %v1824 = vunpack.c.l.b16 %v836
    %v1825 = vpack.c.b16 %v1822, %v1821
    %v1826 = vpack.c.b16 %v1824, %v1823
    %1829 = vxpose.xlu0.c.b16.start [1/8] %v1825, 128
    %1830 = vxpose.xlu0.c.b16.cont [2/8] %v1826, 128
    %1831 = vxpose.xlu0.c.b16.cont [3/8] 0, 128
    %1832 = vxpose.xlu0.c.b16.cont [4/8] 0, 128
    %1833 = vxpose.xlu0.c.b16.cont [5/8] 0, 128
    %1834 = vxpose.xlu0.c.b16.cont [6/8] 0, 128
    %1835 = vxpose.xlu0.c.b16.cont [7/8] 0, 128
    %1836 = vxpose.xlu0.c.b16.end [8/8] 0, 128
    %v1837 = vpop.trf.xlu0
    %v1838 = vpop.trf.xlu0
    %v1839 = vpop.trf.xlu0
    %v1840 = vpop.trf.xlu0
    %v1841 = vpop.trf.xlu0
    %v1842 = vpop.trf.xlu0
    %v1843 = vpop.trf.xlu0
    %v1844 = vpop.trf.xlu0
    %v1849 = vunpack.c.l.b16 %v865
    %v1850 = vunpack.c.l.b16 %v866
    %v1851 = vunpack.c.l.b16 %v867
    %v1852 = vunpack.c.l.b16 %v868
    %v1853 = vpack.c.b16 %v1850, %v1849
    %v1854 = vpack.c.b16 %v1852, %v1851
    %v1858 = vsel %vm153, %v1837, 0
    %v1861 = vsel %vm153, %v1838, 0
    %v1864 = vsel %vm153, %v1839, 0
    %v1867 = vsel %vm153, %v1840, 0
    %v1870 = vsel %vm153, %v1841, 0
    %v1873 = vsel %vm153, %v1842, 0
    %v1876 = vsel %vm153, %v1843, 0
    %v1879 = vsel %vm153, %v1844, 0
    %1881 = vmatpush.bf16.msra.mxu0 0
    %1882 = vmatpush.bf16.msra.mxu0 0
    %1883 = vmatpush.bf16.msra.mxu0 0
    %1884 = vmatpush.bf16.msra.mxu0 0
    %1885 = vmatpush.bf16.msra.mxu0 0
    %1886 = vmatpush.bf16.msra.mxu0 0
    %1887 = vmatpush.bf16.msra.mxu0 %v1854
    %1888 = vmatpush.bf16.msra.mxu0 %v1853
    %1889 = vmatmul.bf16.gmra.mxu0 %v1858
    %v1890 = vpop.f32.mrf.mxu0
    %v1891 = vadd.f32 0.0, %v1890
    %v1892 = vpop.f32.mrf.mxu0
    %v1893 = vadd.f32 0.0, %v1892
    %1894 = vmatmul.bf16.gmra.mxu0 %v1861
    %v1895 = vpop.f32.mrf.mxu0
    %v1896 = vadd.f32 0.0, %v1895
    %v1897 = vpop.f32.mrf.mxu0
    %v1898 = vadd.f32 0.0, %v1897
    %1899 = vmatmul.bf16.gmra.mxu0 %v1864
    %v1900 = vpop.f32.mrf.mxu0
    %v1901 = vadd.f32 0.0, %v1900
    %v1902 = vpop.f32.mrf.mxu0
    %v1903 = vadd.f32 0.0, %v1902
    %1904 = vmatmul.bf16.gmra.mxu0 %v1867
    %v1905 = vpop.f32.mrf.mxu0
    %v1906 = vadd.f32 0.0, %v1905
    %v1907 = vpop.f32.mrf.mxu0
    %v1908 = vadd.f32 0.0, %v1907
    %1909 = vmatmul.bf16.gmra.mxu0 %v1870
    %v1910 = vpop.f32.mrf.mxu0
    %v1911 = vadd.f32 0.0, %v1910
    %v1912 = vpop.f32.mrf.mxu0
    %v1913 = vadd.f32 0.0, %v1912
    %1914 = vmatmul.bf16.gmra.mxu0 %v1873
    %v1915 = vpop.f32.mrf.mxu0
    %v1916 = vadd.f32 0.0, %v1915
    %v1917 = vpop.f32.mrf.mxu0
    %v1918 = vadd.f32 0.0, %v1917
    %1919 = vmatmul.bf16.gmra.mxu0 %v1876
    %v1920 = vpop.f32.mrf.mxu0
    %v1921 = vadd.f32 0.0, %v1920
    %v1922 = vpop.f32.mrf.mxu0
    %v1923 = vadd.f32 0.0, %v1922
    %1924 = vmatmul.bf16.gmra.mxu0 %v1879
    %v1925 = vpop.f32.mrf.mxu0
    %v1926 = vadd.f32 0.0, %v1925
    %v1927 = vpop.f32.mrf.mxu0
    %v1928 = vadd.f32 0.0, %v1927
    %1929 = vdwg.mxu0
    %1930 = vmax.xlane.f32.xlu0 %v1891
    %v1931 = vpop.xlane.xlu0 %1930
    %1932 = vmax.xlane.f32.xlu0 %v1893
    %v1933 = vpop.xlane.xlu0 %1932
    %1934 = vmax.xlane.f32.xlu0 %v1896
    %v1935 = vpop.xlane.xlu0 %1934
    %1936 = vmax.xlane.f32.xlu0 %v1898
    %v1937 = vpop.xlane.xlu0 %1936
    %1938 = vmax.xlane.f32.xlu0 %v1901
    %v1939 = vpop.xlane.xlu0 %1938
    %1940 = vmax.xlane.f32.xlu0 %v1903
    %v1941 = vpop.xlane.xlu0 %1940
    %1942 = vmax.xlane.f32.xlu0 %v1906
    %v1943 = vpop.xlane.xlu0 %1942
    %1944 = vmax.xlane.f32.xlu0 %v1908
    %v1945 = vpop.xlane.xlu0 %1944
    %1946 = vmax.xlane.f32.xlu0 %v1911
    %v1947 = vpop.xlane.xlu0 %1946
    %1948 = vmax.xlane.f32.xlu0 %v1913
    %v1949 = vpop.xlane.xlu0 %1948
    %1950 = vmax.xlane.f32.xlu0 %v1916
    %v1951 = vpop.xlane.xlu0 %1950
    %1952 = vmax.xlane.f32.xlu0 %v1918
    %v1953 = vpop.xlane.xlu0 %1952
    %1954 = vmax.xlane.f32.xlu0 %v1921
    %v1955 = vpop.xlane.xlu0 %1954
    %1956 = vmax.xlane.f32.xlu0 %v1923
    %v1957 = vpop.xlane.xlu0 %1956
    %1958 = vmax.xlane.f32.xlu0 %v1926
    %v1959 = vpop.xlane.xlu0 %1958
    %1960 = vmax.xlane.f32.xlu0 %v1928
    %v1961 = vpop.xlane.xlu0 %1960
    %v1962 = vsub.f32 %v1891, %v1931
    %v1963 = vsub.f32 %v1893, %v1933
    %v1964 = vsub.f32 %v1896, %v1935
    %v1965 = vsub.f32 %v1898, %v1937
    %v1966 = vsub.f32 %v1901, %v1939
    %v1967 = vsub.f32 %v1903, %v1941
    %v1968 = vsub.f32 %v1906, %v1943
    %v1969 = vsub.f32 %v1908, %v1945
    %v1970 = vsub.f32 %v1911, %v1947
    %v1971 = vsub.f32 %v1913, %v1949
    %v1972 = vsub.f32 %v1916, %v1951
    %v1973 = vsub.f32 %v1918, %v1953
    %v1974 = vsub.f32 %v1921, %v1955
    %v1975 = vsub.f32 %v1923, %v1957
    %v1976 = vsub.f32 %v1926, %v1959
    %v1977 = vsub.f32 %v1928, %v1961
    %v1978 = vmul.f32 %v1962, 1.442695
    %v1979 = vpow.pop %v1978
    %v1980 = vmul.f32 %v1963, 1.442695
    %v1981 = vpow.pop %v1980
    %v1982 = vmul.f32 %v1964, 1.442695
    %v1983 = vpow.pop %v1982
    %v1984 = vmul.f32 %v1965, 1.442695
    %v1985 = vpow.pop %v1984
    %v1986 = vmul.f32 %v1966, 1.442695
    %v1987 = vpow.pop %v1986
    %v1988 = vmul.f32 %v1967, 1.442695
    %v1989 = vpow.pop %v1988
    %v1990 = vmul.f32 %v1968, 1.442695
    %v1991 = vpow.pop %v1990
    %v1992 = vmul.f32 %v1969, 1.442695
    %v1993 = vpow.pop %v1992
    %v1994 = vmul.f32 %v1970, 1.442695
    %v1995 = vpow.pop %v1994
    %v1996 = vmul.f32 %v1971, 1.442695
    %v1997 = vpow.pop %v1996
    %v1998 = vmul.f32 %v1972, 1.442695
    %v1999 = vpow.pop %v1998
    %v2000 = vmul.f32 %v1973, 1.442695
    %v2001 = vpow.pop %v2000
    %v2002 = vmul.f32 %v1974, 1.442695
    %v2003 = vpow.pop %v2002
    %v2004 = vmul.f32 %v1975, 1.442695
    %v2005 = vpow.pop %v2004
    %v2006 = vmul.f32 %v1976, 1.442695
    %v2007 = vpow.pop %v2006
    %v2008 = vmul.f32 %v1977, 1.442695
    %v2009 = vpow.pop %v2008
    %2010 = vadd.xlane.f32.xlu0 %v1979
    %v2011 = vpop.xlane.xlu0 %2010
    %2012 = vadd.xlane.f32.xlu0 %v1981
    %v2013 = vpop.xlane.xlu0 %2012
    %2014 = vadd.xlane.f32.xlu0 %v1983
    %v2015 = vpop.xlane.xlu0 %2014
    %2016 = vadd.xlane.f32.xlu0 %v1985
    %v2017 = vpop.xlane.xlu0 %2016
    %2018 = vadd.xlane.f32.xlu0 %v1987
    %v2019 = vpop.xlane.xlu0 %2018
    %2020 = vadd.xlane.f32.xlu0 %v1989
    %v2021 = vpop.xlane.xlu0 %2020
    %2022 = vadd.xlane.f32.xlu0 %v1991
    %v2023 = vpop.xlane.xlu0 %2022
    %2024 = vadd.xlane.f32.xlu0 %v1993
    %v2025 = vpop.xlane.xlu0 %2024
    %2026 = vadd.xlane.f32.xlu0 %v1995
    %v2027 = vpop.xlane.xlu0 %2026
    %2028 = vadd.xlane.f32.xlu0 %v1997
    %v2029 = vpop.xlane.xlu0 %2028
    %2030 = vadd.xlane.f32.xlu0 %v1999
    %v2031 = vpop.xlane.xlu0 %2030
    %2032 = vadd.xlane.f32.xlu0 %v2001
    %v2033 = vpop.xlane.xlu0 %2032
    %2034 = vadd.xlane.f32.xlu0 %v2003
    %v2035 = vpop.xlane.xlu0 %2034
    %2036 = vadd.xlane.f32.xlu0 %v2005
    %v2037 = vpop.xlane.xlu0 %2036
    %2038 = vadd.xlane.f32.xlu0 %v2007
    %v2039 = vpop.xlane.xlu0 %2038
    %2040 = vadd.xlane.f32.xlu0 %v2009
    %v2041 = vpop.xlane.xlu0 %2040
    %v2042 = vrcp.pop %v2011
    %v2043 = vrcp.pop %v2013
    %v2044 = vrcp.pop %v2015
    %v2045 = vrcp.pop %v2017
    %v2046 = vrcp.pop %v2019
    %v2047 = vrcp.pop %v2021
    %v2048 = vrcp.pop %v2023
    %v2049 = vrcp.pop %v2025
    %v2050 = vrcp.pop %v2027
    %v2051 = vrcp.pop %v2029
    %v2052 = vrcp.pop %v2031
    %v2053 = vrcp.pop %v2033
    %v2054 = vrcp.pop %v2035
    %v2055 = vrcp.pop %v2037
    %v2056 = vrcp.pop %v2039
    %v2057 = vrcp.pop %v2041
    %v2058 = vmul.f32 %v1979, %v2042
    %v2059 = vmul.f32 %v1981, %v2043
    %v2060 = vmul.f32 %v1983, %v2044
    %v2061 = vmul.f32 %v1985, %v2045
    %v2062 = vmul.f32 %v1987, %v2046
    %v2063 = vmul.f32 %v1989, %v2047
    %v2064 = vmul.f32 %v1991, %v2048
    %v2065 = vmul.f32 %v1993, %v2049
    %v2066 = vmul.f32 %v1995, %v2050
    %v2067 = vmul.f32 %v1997, %v2051
    %v2068 = vmul.f32 %v1999, %v2052
    %v2069 = vmul.f32 %v2001, %v2053
    %v2070 = vmul.f32 %v2003, %v2054
    %v2071 = vmul.f32 %v2005, %v2055
    %v2072 = vmul.f32 %v2007, %v2056
    %v2073 = vmul.f32 %v2009, %v2057
    %v2074 = vpack.c.bf16 %v2059, %v2058
    %v2075 = vpack.c.bf16 %v2061, %v2060
    %v2076 = vpack.c.bf16 %v2063, %v2062
    %v2077 = vpack.c.bf16 %v2065, %v2064
    %v2078 = vpack.c.bf16 %v2067, %v2066
    %v2079 = vpack.c.bf16 %v2069, %v2068
    %v2080 = vpack.c.bf16 %v2071, %v2070
    %v2081 = vpack.c.bf16 %v2073, %v2072
    %v2086 = vunpack.c.l.b16 %v897
    %v2087 = vunpack.c.l.b16 %v898
    %v2088 = vunpack.c.l.b16 %v899
    %v2089 = vunpack.c.l.b16 %v900
    %v2090 = vpack.c.b16 %v2087, %v2086
    %v2091 = vpack.c.b16 %v2089, %v2088
    %2094 = vmatpush.bf16.xpose.msra.mxu0 %v2081
    %2095 = vmatpush.bf16.xpose.msra.mxu0 %v2080
    %2096 = vmatpush.bf16.xpose.msra.mxu0 %v2079
    %2097 = vmatpush.bf16.xpose.msra.mxu0 %v2078
    %2098 = vmatpush.bf16.xpose.msra.mxu0 %v2077
    %2099 = vmatpush.bf16.xpose.msra.mxu0 %v2076
    %2100 = vmatpush.bf16.xpose.msra.mxu0 %v2075
    %2101 = vmatpush.bf16.xpose.msra.mxu0 %v2074
    %2102 = vmatmul.bf16.gmra.mxu0 %v2090
    %v2103 = vpop.f32.mrf.mxu0
    %v2104 = vadd.f32 0.0, %v2103
    %v2105 = vpop.f32.mrf.mxu0
    %v2106 = vadd.f32 0.0, %v2105
    %2107 = vmatmul.bf16.gmra.mxu0 %v2091
    %v2108 = vpop.f32.mrf.mxu0
    %v2109 = vadd.f32 0.0, %v2108
    %v2110 = vpop.f32.mrf.mxu0
    %v2111 = vadd.f32 0.0, %v2110
    %2112 = vdwg.mxu0
    %v2113 = vpack.c.bf16 %v2104, %v2104
    %v2114 = vpack.c.bf16 %v2106, %v2106
    %v2115 = vpack.c.bf16 %v2109, %v2109
    %v2116 = vpack.c.bf16 %v2111, %v2111
    %v2121 = vunpack.c.l.b16 %v837
    %v2122 = vunpack.c.l.b16 %v838
    %v2123 = vunpack.c.l.b16 %v839
    %v2124 = vunpack.c.l.b16 %v840
    %v2125 = vpack.c.b16 %v2122, %v2121
    %v2126 = vpack.c.b16 %v2124, %v2123
    %2129 = vxpose.xlu0.c.b16.start [1/8] %v2125, 128
    %2130 = vxpose.xlu0.c.b16.cont [2/8] %v2126, 128
    %2131 = vxpose.xlu0.c.b16.cont [3/8] 0, 128
    %2132 = vxpose.xlu0.c.b16.cont [4/8] 0, 128
    %2133 = vxpose.xlu0.c.b16.cont [5/8] 0, 128
    %2134 = vxpose.xlu0.c.b16.cont [6/8] 0, 128
    %2135 = vxpose.xlu0.c.b16.cont [7/8] 0, 128
    %2136 = vxpose.xlu0.c.b16.end [8/8] 0, 128
    %v2137 = vpop.trf.xlu0
    %v2138 = vpop.trf.xlu0
    %v2139 = vpop.trf.xlu0
    %v2140 = vpop.trf.xlu0
    %v2141 = vpop.trf.xlu0
    %v2142 = vpop.trf.xlu0
    %v2143 = vpop.trf.xlu0
    %v2144 = vpop.trf.xlu0
    %v2149 = vunpack.c.l.b16 %v869
    %v2150 = vunpack.c.l.b16 %v870
    %v2151 = vunpack.c.l.b16 %v871
    %v2152 = vunpack.c.l.b16 %v872
    %v2153 = vpack.c.b16 %v2150, %v2149
    %v2154 = vpack.c.b16 %v2152, %v2151
    %v2158 = vsel %vm153, %v2137, 0
    %v2161 = vsel %vm153, %v2138, 0
    %v2164 = vsel %vm153, %v2139, 0
    %v2167 = vsel %vm153, %v2140, 0
    %v2170 = vsel %vm153, %v2141, 0
    %v2173 = vsel %vm153, %v2142, 0
    %v2176 = vsel %vm153, %v2143, 0
    %v2179 = vsel %vm153, %v2144, 0
    %2181 = vmatpush.bf16.msra.mxu0 0
    %2182 = vmatpush.bf16.msra.mxu0 0
    %2183 = vmatpush.bf16.msra.mxu0 0
    %2184 = vmatpush.bf16.msra.mxu0 0
    %2185 = vmatpush.bf16.msra.mxu0 0
    %2186 = vmatpush.bf16.msra.mxu0 0
    %2187 = vmatpush.bf16.msra.mxu0 %v2154
    %2188 = vmatpush.bf16.msra.mxu0 %v2153
    %2189 = vmatmul.bf16.gmra.mxu0 %v2158
    %v2190 = vpop.f32.mrf.mxu0
    %v2191 = vadd.f32 0.0, %v2190
    %v2192 = vpop.f32.mrf.mxu0
    %v2193 = vadd.f32 0.0, %v2192
    %2194 = vmatmul.bf16.gmra.mxu0 %v2161
    %v2195 = vpop.f32.mrf.mxu0
    %v2196 = vadd.f32 0.0, %v2195
    %v2197 = vpop.f32.mrf.mxu0
    %v2198 = vadd.f32 0.0, %v2197
    %2199 = vmatmul.bf16.gmra.mxu0 %v2164
    %v2200 = vpop.f32.mrf.mxu0
    %v2201 = vadd.f32 0.0, %v2200
    %v2202 = vpop.f32.mrf.mxu0
    %v2203 = vadd.f32 0.0, %v2202
    %2204 = vmatmul.bf16.gmra.mxu0 %v2167
    %v2205 = vpop.f32.mrf.mxu0
    %v2206 = vadd.f32 0.0, %v2205
    %v2207 = vpop.f32.mrf.mxu0
    %v2208 = vadd.f32 0.0, %v2207
    %2209 = vmatmul.bf16.gmra.mxu0 %v2170
    %v2210 = vpop.f32.mrf.mxu0
    %v2211 = vadd.f32 0.0, %v2210
    %v2212 = vpop.f32.mrf.mxu0
    %v2213 = vadd.f32 0.0, %v2212
    %2214 = vmatmul.bf16.gmra.mxu0 %v2173
    %v2215 = vpop.f32.mrf.mxu0
    %v2216 = vadd.f32 0.0, %v2215
    %v2217 = vpop.f32.mrf.mxu0
    %v2218 = vadd.f32 0.0, %v2217
    %2219 = vmatmul.bf16.gmra.mxu0 %v2176
    %v2220 = vpop.f32.mrf.mxu0
    %v2221 = vadd.f32 0.0, %v2220
    %v2222 = vpop.f32.mrf.mxu0
    %v2223 = vadd.f32 0.0, %v2222
    %2224 = vmatmul.bf16.gmra.mxu0 %v2179
    %v2225 = vpop.f32.mrf.mxu0
    %v2226 = vadd.f32 0.0, %v2225
    %v2227 = vpop.f32.mrf.mxu0
    %v2228 = vadd.f32 0.0, %v2227
    %2229 = vdwg.mxu0
    %2230 = vmax.xlane.f32.xlu0 %v2191
    %v2231 = vpop.xlane.xlu0 %2230
    %2232 = vmax.xlane.f32.xlu0 %v2193
    %v2233 = vpop.xlane.xlu0 %2232
    %2234 = vmax.xlane.f32.xlu0 %v2196
    %v2235 = vpop.xlane.xlu0 %2234
    %2236 = vmax.xlane.f32.xlu0 %v2198
    %v2237 = vpop.xlane.xlu0 %2236
    %2238 = vmax.xlane.f32.xlu0 %v2201
    %v2239 = vpop.xlane.xlu0 %2238
    %2240 = vmax.xlane.f32.xlu0 %v2203
    %v2241 = vpop.xlane.xlu0 %2240
    %2242 = vmax.xlane.f32.xlu0 %v2206
    %v2243 = vpop.xlane.xlu0 %2242
    %2244 = vmax.xlane.f32.xlu0 %v2208
    %v2245 = vpop.xlane.xlu0 %2244
    %2246 = vmax.xlane.f32.xlu0 %v2211
    %v2247 = vpop.xlane.xlu0 %2246
    %2248 = vmax.xlane.f32.xlu0 %v2213
    %v2249 = vpop.xlane.xlu0 %2248
    %2250 = vmax.xlane.f32.xlu0 %v2216
    %v2251 = vpop.xlane.xlu0 %2250
    %2252 = vmax.xlane.f32.xlu0 %v2218
    %v2253 = vpop.xlane.xlu0 %2252
    %2254 = vmax.xlane.f32.xlu0 %v2221
    %v2255 = vpop.xlane.xlu0 %2254
    %2256 = vmax.xlane.f32.xlu0 %v2223
    %v2257 = vpop.xlane.xlu0 %2256
    %2258 = vmax.xlane.f32.xlu0 %v2226
    %v2259 = vpop.xlane.xlu0 %2258
    %2260 = vmax.xlane.f32.xlu0 %v2228
    %v2261 = vpop.xlane.xlu0 %2260
    %v2262 = vsub.f32 %v2191, %v2231
    %v2263 = vsub.f32 %v2193, %v2233
    %v2264 = vsub.f32 %v2196, %v2235
    %v2265 = vsub.f32 %v2198, %v2237
    %v2266 = vsub.f32 %v2201, %v2239
    %v2267 = vsub.f32 %v2203, %v2241
    %v2268 = vsub.f32 %v2206, %v2243
    %v2269 = vsub.f32 %v2208, %v2245
    %v2270 = vsub.f32 %v2211, %v2247
    %v2271 = vsub.f32 %v2213, %v2249
    %v2272 = vsub.f32 %v2216, %v2251
    %v2273 = vsub.f32 %v2218, %v2253
    %v2274 = vsub.f32 %v2221, %v2255
    %v2275 = vsub.f32 %v2223, %v2257
    %v2276 = vsub.f32 %v2226, %v2259
    %v2277 = vsub.f32 %v2228, %v2261
    %v2278 = vmul.f32 %v2262, 1.442695
    %v2279 = vpow.pop %v2278
    %v2280 = vmul.f32 %v2263, 1.442695
    %v2281 = vpow.pop %v2280
    %v2282 = vmul.f32 %v2264, 1.442695
    %v2283 = vpow.pop %v2282
    %v2284 = vmul.f32 %v2265, 1.442695
    %v2285 = vpow.pop %v2284
    %v2286 = vmul.f32 %v2266, 1.442695
    %v2287 = vpow.pop %v2286
    %v2288 = vmul.f32 %v2267, 1.442695
    %v2289 = vpow.pop %v2288
    %v2290 = vmul.f32 %v2268, 1.442695
    %v2291 = vpow.pop %v2290
    %v2292 = vmul.f32 %v2269, 1.442695
    %v2293 = vpow.pop %v2292
    %v2294 = vmul.f32 %v2270, 1.442695
    %v2295 = vpow.pop %v2294
    %v2296 = vmul.f32 %v2271, 1.442695
    %v2297 = vpow.pop %v2296
    %v2298 = vmul.f32 %v2272, 1.442695
    %v2299 = vpow.pop %v2298
    %v2300 = vmul.f32 %v2273, 1.442695
    %v2301 = vpow.pop %v2300
    %v2302 = vmul.f32 %v2274, 1.442695
    %v2303 = vpow.pop %v2302
    %v2304 = vmul.f32 %v2275, 1.442695
    %v2305 = vpow.pop %v2304
    %v2306 = vmul.f32 %v2276, 1.442695
    %v2307 = vpow.pop %v2306
    %v2308 = vmul.f32 %v2277, 1.442695
    %v2309 = vpow.pop %v2308
    %2310 = vadd.xlane.f32.xlu0 %v2279
    %v2311 = vpop.xlane.xlu0 %2310
    %2312 = vadd.xlane.f32.xlu0 %v2281
    %v2313 = vpop.xlane.xlu0 %2312
    %2314 = vadd.xlane.f32.xlu0 %v2283
    %v2315 = vpop.xlane.xlu0 %2314
    %2316 = vadd.xlane.f32.xlu0 %v2285
    %v2317 = vpop.xlane.xlu0 %2316
    %2318 = vadd.xlane.f32.xlu0 %v2287
    %v2319 = vpop.xlane.xlu0 %2318
    %2320 = vadd.xlane.f32.xlu0 %v2289
    %v2321 = vpop.xlane.xlu0 %2320
    %2322 = vadd.xlane.f32.xlu0 %v2291
    %v2323 = vpop.xlane.xlu0 %2322
    %2324 = vadd.xlane.f32.xlu0 %v2293
    %v2325 = vpop.xlane.xlu0 %2324
    %2326 = vadd.xlane.f32.xlu0 %v2295
    %v2327 = vpop.xlane.xlu0 %2326
    %2328 = vadd.xlane.f32.xlu0 %v2297
    %v2329 = vpop.xlane.xlu0 %2328
    %2330 = vadd.xlane.f32.xlu0 %v2299
    %v2331 = vpop.xlane.xlu0 %2330
    %2332 = vadd.xlane.f32.xlu0 %v2301
    %v2333 = vpop.xlane.xlu0 %2332
    %2334 = vadd.xlane.f32.xlu0 %v2303
    %v2335 = vpop.xlane.xlu0 %2334
    %2336 = vadd.xlane.f32.xlu0 %v2305
    %v2337 = vpop.xlane.xlu0 %2336
    %2338 = vadd.xlane.f32.xlu0 %v2307
    %v2339 = vpop.xlane.xlu0 %2338
    %2340 = vadd.xlane.f32.xlu0 %v2309
    %v2341 = vpop.xlane.xlu0 %2340
    %v2342 = vrcp.pop %v2311
    %v2343 = vrcp.pop %v2313
    %v2344 = vrcp.pop %v2315
    %v2345 = vrcp.pop %v2317
    %v2346 = vrcp.pop %v2319
    %v2347 = vrcp.pop %v2321
    %v2348 = vrcp.pop %v2323
    %v2349 = vrcp.pop %v2325
    %v2350 = vrcp.pop %v2327
    %v2351 = vrcp.pop %v2329
    %v2352 = vrcp.pop %v2331
    %v2353 = vrcp.pop %v2333
    %v2354 = vrcp.pop %v2335
    %v2355 = vrcp.pop %v2337
    %v2356 = vrcp.pop %v2339
    %v2357 = vrcp.pop %v2341
    %v2358 = vmul.f32 %v2279, %v2342
    %v2359 = vmul.f32 %v2281, %v2343
    %v2360 = vmul.f32 %v2283, %v2344
    %v2361 = vmul.f32 %v2285, %v2345
    %v2362 = vmul.f32 %v2287, %v2346
    %v2363 = vmul.f32 %v2289, %v2347
    %v2364 = vmul.f32 %v2291, %v2348
    %v2365 = vmul.f32 %v2293, %v2349
    %v2366 = vmul.f32 %v2295, %v2350
    %v2367 = vmul.f32 %v2297, %v2351
    %v2368 = vmul.f32 %v2299, %v2352
    %v2369 = vmul.f32 %v2301, %v2353
    %v2370 = vmul.f32 %v2303, %v2354
    %v2371 = vmul.f32 %v2305, %v2355
    %v2372 = vmul.f32 %v2307, %v2356
    %v2373 = vmul.f32 %v2309, %v2357
    %v2374 = vpack.c.bf16 %v2359, %v2358
    %v2375 = vpack.c.bf16 %v2361, %v2360
    %v2376 = vpack.c.bf16 %v2363, %v2362
    %v2377 = vpack.c.bf16 %v2365, %v2364
    %v2378 = vpack.c.bf16 %v2367, %v2366
    %v2379 = vpack.c.bf16 %v2369, %v2368
    %v2380 = vpack.c.bf16 %v2371, %v2370
    %v2381 = vpack.c.bf16 %v2373, %v2372
    %v2386 = vunpack.c.l.b16 %v901
    %v2387 = vunpack.c.l.b16 %v902
    %v2388 = vunpack.c.l.b16 %v903
    %v2389 = vunpack.c.l.b16 %v904
    %v2390 = vpack.c.b16 %v2387, %v2386
    %v2391 = vpack.c.b16 %v2389, %v2388
    %2394 = vmatpush.bf16.xpose.msra.mxu0 %v2381
    %2395 = vmatpush.bf16.xpose.msra.mxu0 %v2380
    %2396 = vmatpush.bf16.xpose.msra.mxu0 %v2379
    %2397 = vmatpush.bf16.xpose.msra.mxu0 %v2378
    %2398 = vmatpush.bf16.xpose.msra.mxu0 %v2377
    %2399 = vmatpush.bf16.xpose.msra.mxu0 %v2376
    %2400 = vmatpush.bf16.xpose.msra.mxu0 %v2375
    %2401 = vmatpush.bf16.xpose.msra.mxu0 %v2374
    %2402 = vmatmul.bf16.gmra.mxu0 %v2390
    %v2403 = vpop.f32.mrf.mxu0
    %v2404 = vadd.f32 0.0, %v2403
    %v2405 = vpop.f32.mrf.mxu0
    %v2406 = vadd.f32 0.0, %v2405
    %2407 = vmatmul.bf16.gmra.mxu0 %v2391
    %v2408 = vpop.f32.mrf.mxu0
    %v2409 = vadd.f32 0.0, %v2408
    %v2410 = vpop.f32.mrf.mxu0
    %v2411 = vadd.f32 0.0, %v2410
    %2412 = vdwg.mxu0
    %v2413 = vpack.c.bf16 %v2404, %v2404
    %v2414 = vpack.c.bf16 %v2406, %v2406
    %v2415 = vpack.c.bf16 %v2409, %v2409
    %v2416 = vpack.c.bf16 %v2411, %v2411
    %v2421 = vunpack.c.l.b16 %v841
    %v2422 = vunpack.c.l.b16 %v842
    %v2423 = vunpack.c.l.b16 %v843
    %v2424 = vunpack.c.l.b16 %v844
    %v2425 = vpack.c.b16 %v2422, %v2421
    %v2426 = vpack.c.b16 %v2424, %v2423
    %2429 = vxpose.xlu0.c.b16.start [1/8] %v2425, 128
    %2430 = vxpose.xlu0.c.b16.cont [2/8] %v2426, 128
    %2431 = vxpose.xlu0.c.b16.cont [3/8] 0, 128
    %2432 = vxpose.xlu0.c.b16.cont [4/8] 0, 128
    %2433 = vxpose.xlu0.c.b16.cont [5/8] 0, 128
    %2434 = vxpose.xlu0.c.b16.cont [6/8] 0, 128
    %2435 = vxpose.xlu0.c.b16.cont [7/8] 0, 128
    %2436 = vxpose.xlu0.c.b16.end [8/8] 0, 128
    %v2437 = vpop.trf.xlu0
    %v2438 = vpop.trf.xlu0
    %v2439 = vpop.trf.xlu0
    %v2440 = vpop.trf.xlu0
    %v2441 = vpop.trf.xlu0
    %v2442 = vpop.trf.xlu0
    %v2443 = vpop.trf.xlu0
    %v2444 = vpop.trf.xlu0
    %v2449 = vunpack.c.l.b16 %v873
    %v2450 = vunpack.c.l.b16 %v874
    %v2451 = vunpack.c.l.b16 %v875
    %v2452 = vunpack.c.l.b16 %v876
    %v2453 = vpack.c.b16 %v2450, %v2449
    %v2454 = vpack.c.b16 %v2452, %v2451
    %v2458 = vsel %vm153, %v2437, 0
    %v2461 = vsel %vm153, %v2438, 0
    %v2464 = vsel %vm153, %v2439, 0
    %v2467 = vsel %vm153, %v2440, 0
    %v2470 = vsel %vm153, %v2441, 0
    %v2473 = vsel %vm153, %v2442, 0
    %v2476 = vsel %vm153, %v2443, 0
    %v2479 = vsel %vm153, %v2444, 0
    %2481 = vmatpush.bf16.msra.mxu0 0
    %2482 = vmatpush.bf16.msra.mxu0 0
    %2483 = vmatpush.bf16.msra.mxu0 0
    %2484 = vmatpush.bf16.msra.mxu0 0
    %2485 = vmatpush.bf16.msra.mxu0 0
    %2486 = vmatpush.bf16.msra.mxu0 0
    %2487 = vmatpush.bf16.msra.mxu0 %v2454
    %2488 = vmatpush.bf16.msra.mxu0 %v2453
    %2489 = vmatmul.bf16.gmra.mxu0 %v2458
    %v2490 = vpop.f32.mrf.mxu0
    %v2491 = vadd.f32 0.0, %v2490
    %v2492 = vpop.f32.mrf.mxu0
    %v2493 = vadd.f32 0.0, %v2492
    %2494 = vmatmul.bf16.gmra.mxu0 %v2461
    %v2495 = vpop.f32.mrf.mxu0
    %v2496 = vadd.f32 0.0, %v2495
    %v2497 = vpop.f32.mrf.mxu0
    %v2498 = vadd.f32 0.0, %v2497
    %2499 = vmatmul.bf16.gmra.mxu0 %v2464
    %v2500 = vpop.f32.mrf.mxu0
    %v2501 = vadd.f32 0.0, %v2500
    %v2502 = vpop.f32.mrf.mxu0
    %v2503 = vadd.f32 0.0, %v2502
    %2504 = vmatmul.bf16.gmra.mxu0 %v2467
    %v2505 = vpop.f32.mrf.mxu0
    %v2506 = vadd.f32 0.0, %v2505
    %v2507 = vpop.f32.mrf.mxu0
    %v2508 = vadd.f32 0.0, %v2507
    %2509 = vmatmul.bf16.gmra.mxu0 %v2470
    %v2510 = vpop.f32.mrf.mxu0
    %v2511 = vadd.f32 0.0, %v2510
    %v2512 = vpop.f32.mrf.mxu0
    %v2513 = vadd.f32 0.0, %v2512
    %2514 = vmatmul.bf16.gmra.mxu0 %v2473
    %v2515 = vpop.f32.mrf.mxu0
    %v2516 = vadd.f32 0.0, %v2515
    %v2517 = vpop.f32.mrf.mxu0
    %v2518 = vadd.f32 0.0, %v2517
    %2519 = vmatmul.bf16.gmra.mxu0 %v2476
    %v2520 = vpop.f32.mrf.mxu0
    %v2521 = vadd.f32 0.0, %v2520
    %v2522 = vpop.f32.mrf.mxu0
    %v2523 = vadd.f32 0.0, %v2522
    %2524 = vmatmul.bf16.gmra.mxu0 %v2479
    %v2525 = vpop.f32.mrf.mxu0
    %v2526 = vadd.f32 0.0, %v2525
    %v2527 = vpop.f32.mrf.mxu0
    %v2528 = vadd.f32 0.0, %v2527
    %2529 = vdwg.mxu0
    %2530 = vmax.xlane.f32.xlu0 %v2491
    %v2531 = vpop.xlane.xlu0 %2530
    %2532 = vmax.xlane.f32.xlu0 %v2493
    %v2533 = vpop.xlane.xlu0 %2532
    %2534 = vmax.xlane.f32.xlu0 %v2496
    %v2535 = vpop.xlane.xlu0 %2534
    %2536 = vmax.xlane.f32.xlu0 %v2498
    %v2537 = vpop.xlane.xlu0 %2536
    %2538 = vmax.xlane.f32.xlu0 %v2501
    %v2539 = vpop.xlane.xlu0 %2538
    %2540 = vmax.xlane.f32.xlu0 %v2503
    %v2541 = vpop.xlane.xlu0 %2540
    %2542 = vmax.xlane.f32.xlu0 %v2506
    %v2543 = vpop.xlane.xlu0 %2542
    %2544 = vmax.xlane.f32.xlu0 %v2508
    %v2545 = vpop.xlane.xlu0 %2544
    %2546 = vmax.xlane.f32.xlu0 %v2511
    %v2547 = vpop.xlane.xlu0 %2546
    %2548 = vmax.xlane.f32.xlu0 %v2513
    %v2549 = vpop.xlane.xlu0 %2548
    %2550 = vmax.xlane.f32.xlu0 %v2516
    %v2551 = vpop.xlane.xlu0 %2550
    %2552 = vmax.xlane.f32.xlu0 %v2518
    %v2553 = vpop.xlane.xlu0 %2552
    %2554 = vmax.xlane.f32.xlu0 %v2521
    %v2555 = vpop.xlane.xlu0 %2554
    %2556 = vmax.xlane.f32.xlu0 %v2523
    %v2557 = vpop.xlane.xlu0 %2556
    %2558 = vmax.xlane.f32.xlu0 %v2526
    %v2559 = vpop.xlane.xlu0 %2558
    %2560 = vmax.xlane.f32.xlu0 %v2528
    %v2561 = vpop.xlane.xlu0 %2560
    %v2562 = vsub.f32 %v2491, %v2531
    %v2563 = vsub.f32 %v2493, %v2533
    %v2564 = vsub.f32 %v2496, %v2535
    %v2565 = vsub.f32 %v2498, %v2537
    %v2566 = vsub.f32 %v2501, %v2539
    %v2567 = vsub.f32 %v2503, %v2541
    %v2568 = vsub.f32 %v2506, %v2543
    %v2569 = vsub.f32 %v2508, %v2545
    %v2570 = vsub.f32 %v2511, %v2547
    %v2571 = vsub.f32 %v2513, %v2549
    %v2572 = vsub.f32 %v2516, %v2551
    %v2573 = vsub.f32 %v2518, %v2553
    %v2574 = vsub.f32 %v2521, %v2555
    %v2575 = vsub.f32 %v2523, %v2557
    %v2576 = vsub.f32 %v2526, %v2559
    %v2577 = vsub.f32 %v2528, %v2561
    %v2578 = vmul.f32 %v2562, 1.442695
    %v2579 = vpow.pop %v2578
    %v2580 = vmul.f32 %v2563, 1.442695
    %v2581 = vpow.pop %v2580
    %v2582 = vmul.f32 %v2564, 1.442695
    %v2583 = vpow.pop %v2582
    %v2584 = vmul.f32 %v2565, 1.442695
    %v2585 = vpow.pop %v2584
    %v2586 = vmul.f32 %v2566, 1.442695
    %v2587 = vpow.pop %v2586
    %v2588 = vmul.f32 %v2567, 1.442695
    %v2589 = vpow.pop %v2588
    %v2590 = vmul.f32 %v2568, 1.442695
    %v2591 = vpow.pop %v2590
    %v2592 = vmul.f32 %v2569, 1.442695
    %v2593 = vpow.pop %v2592
    %v2594 = vmul.f32 %v2570, 1.442695
    %v2595 = vpow.pop %v2594
    %v2596 = vmul.f32 %v2571, 1.442695
    %v2597 = vpow.pop %v2596
    %v2598 = vmul.f32 %v2572, 1.442695
    %v2599 = vpow.pop %v2598
    %v2600 = vmul.f32 %v2573, 1.442695
    %v2601 = vpow.pop %v2600
    %v2602 = vmul.f32 %v2574, 1.442695
    %v2603 = vpow.pop %v2602
    %v2604 = vmul.f32 %v2575, 1.442695
    %v2605 = vpow.pop %v2604
    %v2606 = vmul.f32 %v2576, 1.442695
    %v2607 = vpow.pop %v2606
    %v2608 = vmul.f32 %v2577, 1.442695
    %v2609 = vpow.pop %v2608
    %2610 = vadd.xlane.f32.xlu0 %v2579
    %v2611 = vpop.xlane.xlu0 %2610
    %2612 = vadd.xlane.f32.xlu0 %v2581
    %v2613 = vpop.xlane.xlu0 %2612
    %2614 = vadd.xlane.f32.xlu0 %v2583
    %v2615 = vpop.xlane.xlu0 %2614
    %2616 = vadd.xlane.f32.xlu0 %v2585
    %v2617 = vpop.xlane.xlu0 %2616
    %2618 = vadd.xlane.f32.xlu0 %v2587
    %v2619 = vpop.xlane.xlu0 %2618
    %2620 = vadd.xlane.f32.xlu0 %v2589
    %v2621 = vpop.xlane.xlu0 %2620
    %2622 = vadd.xlane.f32.xlu0 %v2591
    %v2623 = vpop.xlane.xlu0 %2622
    %2624 = vadd.xlane.f32.xlu0 %v2593
    %v2625 = vpop.xlane.xlu0 %2624
    %2626 = vadd.xlane.f32.xlu0 %v2595
    %v2627 = vpop.xlane.xlu0 %2626
    %2628 = vadd.xlane.f32.xlu0 %v2597
    %v2629 = vpop.xlane.xlu0 %2628
    %2630 = vadd.xlane.f32.xlu0 %v2599
    %v2631 = vpop.xlane.xlu0 %2630
    %2632 = vadd.xlane.f32.xlu0 %v2601
    %v2633 = vpop.xlane.xlu0 %2632
    %2634 = vadd.xlane.f32.xlu0 %v2603
    %v2635 = vpop.xlane.xlu0 %2634
    %2636 = vadd.xlane.f32.xlu0 %v2605
    %v2637 = vpop.xlane.xlu0 %2636
    %2638 = vadd.xlane.f32.xlu0 %v2607
    %v2639 = vpop.xlane.xlu0 %2638
    %2640 = vadd.xlane.f32.xlu0 %v2609
    %v2641 = vpop.xlane.xlu0 %2640
    %v2642 = vrcp.pop %v2611
    %v2643 = vrcp.pop %v2613
    %v2644 = vrcp.pop %v2615
    %v2645 = vrcp.pop %v2617
    %v2646 = vrcp.pop %v2619
    %v2647 = vrcp.pop %v2621
    %v2648 = vrcp.pop %v2623
    %v2649 = vrcp.pop %v2625
    %v2650 = vrcp.pop %v2627
    %v2651 = vrcp.pop %v2629
    %v2652 = vrcp.pop %v2631
    %v2653 = vrcp.pop %v2633
    %v2654 = vrcp.pop %v2635
    %v2655 = vrcp.pop %v2637
    %v2656 = vrcp.pop %v2639
    %v2657 = vrcp.pop %v2641
    %v2658 = vmul.f32 %v2579, %v2642
    %v2659 = vmul.f32 %v2581, %v2643
    %v2660 = vmul.f32 %v2583, %v2644
    %v2661 = vmul.f32 %v2585, %v2645
    %v2662 = vmul.f32 %v2587, %v2646
    %v2663 = vmul.f32 %v2589, %v2647
    %v2664 = vmul.f32 %v2591, %v2648
    %v2665 = vmul.f32 %v2593, %v2649
    %v2666 = vmul.f32 %v2595, %v2650
    %v2667 = vmul.f32 %v2597, %v2651
    %v2668 = vmul.f32 %v2599, %v2652
    %v2669 = vmul.f32 %v2601, %v2653
    %v2670 = vmul.f32 %v2603, %v2654
    %v2671 = vmul.f32 %v2605, %v2655
    %v2672 = vmul.f32 %v2607, %v2656
    %v2673 = vmul.f32 %v2609, %v2657
    %v2674 = vpack.c.bf16 %v2659, %v2658
    %v2675 = vpack.c.bf16 %v2661, %v2660
    %v2676 = vpack.c.bf16 %v2663, %v2662
    %v2677 = vpack.c.bf16 %v2665, %v2664
    %v2678 = vpack.c.bf16 %v2667, %v2666
    %v2679 = vpack.c.bf16 %v2669, %v2668
    %v2680 = vpack.c.bf16 %v2671, %v2670
    %v2681 = vpack.c.bf16 %v2673, %v2672
    %v2686 = vunpack.c.l.b16 %v905
    %v2687 = vunpack.c.l.b16 %v906
    %v2688 = vunpack.c.l.b16 %v907
    %v2689 = vunpack.c.l.b16 %v908
    %v2690 = vpack.c.b16 %v2687, %v2686
    %v2691 = vpack.c.b16 %v2689, %v2688
    %2694 = vmatpush.bf16.xpose.msra.mxu0 %v2681
    %2695 = vmatpush.bf16.xpose.msra.mxu0 %v2680
    %2696 = vmatpush.bf16.xpose.msra.mxu0 %v2679
    %2697 = vmatpush.bf16.xpose.msra.mxu0 %v2678
    %2698 = vmatpush.bf16.xpose.msra.mxu0 %v2677
    %2699 = vmatpush.bf16.xpose.msra.mxu0 %v2676
    %2700 = vmatpush.bf16.xpose.msra.mxu0 %v2675
    %2701 = vmatpush.bf16.xpose.msra.mxu0 %v2674
    %2702 = vmatmul.bf16.gmra.mxu0 %v2690
    %v2703 = vpop.f32.mrf.mxu0
    %v2704 = vadd.f32 0.0, %v2703
    %v2705 = vpop.f32.mrf.mxu0
    %v2706 = vadd.f32 0.0, %v2705
    %2707 = vmatmul.bf16.gmra.mxu0 %v2691
    %v2708 = vpop.f32.mrf.mxu0
    %v2709 = vadd.f32 0.0, %v2708
    %v2710 = vpop.f32.mrf.mxu0
    %v2711 = vadd.f32 0.0, %v2710
    %2712 = vdwg.mxu0
    %v2713 = vpack.c.bf16 %v2704, %v2704
    %v2714 = vpack.c.bf16 %v2706, %v2706
    %v2715 = vpack.c.bf16 %v2709, %v2709
    %v2716 = vpack.c.bf16 %v2711, %v2711
    %v2721 = vunpack.c.l.b16 %v845
    %v2722 = vunpack.c.l.b16 %v846
    %v2723 = vunpack.c.l.b16 %v847
    %v2724 = vunpack.c.l.b16 %v848
    %v2725 = vpack.c.b16 %v2722, %v2721
    %v2726 = vpack.c.b16 %v2724, %v2723
    %2729 = vxpose.xlu0.c.b16.start [1/8] %v2725, 128
    %2730 = vxpose.xlu0.c.b16.cont [2/8] %v2726, 128
    %2731 = vxpose.xlu0.c.b16.cont [3/8] 0, 128
    %2732 = vxpose.xlu0.c.b16.cont [4/8] 0, 128
    %2733 = vxpose.xlu0.c.b16.cont [5/8] 0, 128
    %2734 = vxpose.xlu0.c.b16.cont [6/8] 0, 128
    %2735 = vxpose.xlu0.c.b16.cont [7/8] 0, 128
    %2736 = vxpose.xlu0.c.b16.end [8/8] 0, 128
    %v2737 = vpop.trf.xlu0
    %v2738 = vpop.trf.xlu0
    %v2739 = vpop.trf.xlu0
    %v2740 = vpop.trf.xlu0
    %v2741 = vpop.trf.xlu0
    %v2742 = vpop.trf.xlu0
    %v2743 = vpop.trf.xlu0
    %v2744 = vpop.trf.xlu0
    %v2749 = vunpack.c.l.b16 %v877
    %v2750 = vunpack.c.l.b16 %v878
    %v2751 = vunpack.c.l.b16 %v879
    %v2752 = vunpack.c.l.b16 %v880
    %v2753 = vpack.c.b16 %v2750, %v2749
    %v2754 = vpack.c.b16 %v2752, %v2751
    %v2758 = vsel %vm153, %v2737, 0
    %v2761 = vsel %vm153, %v2738, 0
    %v2764 = vsel %vm153, %v2739, 0
    %v2767 = vsel %vm153, %v2740, 0
    %v2770 = vsel %vm153, %v2741, 0
    %v2773 = vsel %vm153, %v2742, 0
    %v2776 = vsel %vm153, %v2743, 0
    %v2779 = vsel %vm153, %v2744, 0
    %2781 = vmatpush.bf16.msra.mxu0 0
    %2782 = vmatpush.bf16.msra.mxu0 0
    %2783 = vmatpush.bf16.msra.mxu0 0
    %2784 = vmatpush.bf16.msra.mxu0 0
    %2785 = vmatpush.bf16.msra.mxu0 0
    %2786 = vmatpush.bf16.msra.mxu0 0
    %2787 = vmatpush.bf16.msra.mxu0 %v2754
    %2788 = vmatpush.bf16.msra.mxu0 %v2753
    %2789 = vmatmul.bf16.gmra.mxu0 %v2758
    %v2790 = vpop.f32.mrf.mxu0
    %v2791 = vadd.f32 0.0, %v2790
    %v2792 = vpop.f32.mrf.mxu0
    %v2793 = vadd.f32 0.0, %v2792
    %2794 = vmatmul.bf16.gmra.mxu0 %v2761
    %v2795 = vpop.f32.mrf.mxu0
    %v2796 = vadd.f32 0.0, %v2795
    %v2797 = vpop.f32.mrf.mxu0
    %v2798 = vadd.f32 0.0, %v2797
    %2799 = vmatmul.bf16.gmra.mxu0 %v2764
    %v2800 = vpop.f32.mrf.mxu0
    %v2801 = vadd.f32 0.0, %v2800
    %v2802 = vpop.f32.mrf.mxu0
    %v2803 = vadd.f32 0.0, %v2802
    %2804 = vmatmul.bf16.gmra.mxu0 %v2767
    %v2805 = vpop.f32.mrf.mxu0
    %v2806 = vadd.f32 0.0, %v2805
    %v2807 = vpop.f32.mrf.mxu0
    %v2808 = vadd.f32 0.0, %v2807
    %2809 = vmatmul.bf16.gmra.mxu0 %v2770
    %v2810 = vpop.f32.mrf.mxu0
    %v2811 = vadd.f32 0.0, %v2810
    %v2812 = vpop.f32.mrf.mxu0
    %v2813 = vadd.f32 0.0, %v2812
    %2814 = vmatmul.bf16.gmra.mxu0 %v2773
    %v2815 = vpop.f32.mrf.mxu0
    %v2816 = vadd.f32 0.0, %v2815
    %v2817 = vpop.f32.mrf.mxu0
    %v2818 = vadd.f32 0.0, %v2817
    %2819 = vmatmul.bf16.gmra.mxu0 %v2776
    %v2820 = vpop.f32.mrf.mxu0
    %v2821 = vadd.f32 0.0, %v2820
    %v2822 = vpop.f32.mrf.mxu0
    %v2823 = vadd.f32 0.0, %v2822
    %2824 = vmatmul.bf16.gmra.mxu0 %v2779
    %v2825 = vpop.f32.mrf.mxu0
    %v2826 = vadd.f32 0.0, %v2825
    %v2827 = vpop.f32.mrf.mxu0
    %v2828 = vadd.f32 0.0, %v2827
    %2829 = vdwg.mxu0
    %2830 = vmax.xlane.f32.xlu0 %v2791
    %v2831 = vpop.xlane.xlu0 %2830
    %2832 = vmax.xlane.f32.xlu0 %v2793
    %v2833 = vpop.xlane.xlu0 %2832
    %2834 = vmax.xlane.f32.xlu0 %v2796
    %v2835 = vpop.xlane.xlu0 %2834
    %2836 = vmax.xlane.f32.xlu0 %v2798
    %v2837 = vpop.xlane.xlu0 %2836
    %2838 = vmax.xlane.f32.xlu0 %v2801
    %v2839 = vpop.xlane.xlu0 %2838
    %2840 = vmax.xlane.f32.xlu0 %v2803
    %v2841 = vpop.xlane.xlu0 %2840
    %2842 = vmax.xlane.f32.xlu0 %v2806
    %v2843 = vpop.xlane.xlu0 %2842
    %2844 = vmax.xlane.f32.xlu0 %v2808
    %v2845 = vpop.xlane.xlu0 %2844
    %2846 = vmax.xlane.f32.xlu0 %v2811
    %v2847 = vpop.xlane.xlu0 %2846
    %2848 = vmax.xlane.f32.xlu0 %v2813
    %v2849 = vpop.xlane.xlu0 %2848
    %2850 = vmax.xlane.f32.xlu0 %v2816
    %v2851 = vpop.xlane.xlu0 %2850
    %2852 = vmax.xlane.f32.xlu0 %v2818
    %v2853 = vpop.xlane.xlu0 %2852
    %2854 = vmax.xlane.f32.xlu0 %v2821
    %v2855 = vpop.xlane.xlu0 %2854
    %2856 = vmax.xlane.f32.xlu0 %v2823
    %v2857 = vpop.xlane.xlu0 %2856
    %2858 = vmax.xlane.f32.xlu0 %v2826
    %v2859 = vpop.xlane.xlu0 %2858
    %2860 = vmax.xlane.f32.xlu0 %v2828
    %v2861 = vpop.xlane.xlu0 %2860
    %v2862 = vsub.f32 %v2791, %v2831
    %v2863 = vsub.f32 %v2793, %v2833
    %v2864 = vsub.f32 %v2796, %v2835
    %v2865 = vsub.f32 %v2798, %v2837
    %v2866 = vsub.f32 %v2801, %v2839
    %v2867 = vsub.f32 %v2803, %v2841
    %v2868 = vsub.f32 %v2806, %v2843
    %v2869 = vsub.f32 %v2808, %v2845
    %v2870 = vsub.f32 %v2811, %v2847
    %v2871 = vsub.f32 %v2813, %v2849
    %v2872 = vsub.f32 %v2816, %v2851
    %v2873 = vsub.f32 %v2818, %v2853
    %v2874 = vsub.f32 %v2821, %v2855
    %v2875 = vsub.f32 %v2823, %v2857
    %v2876 = vsub.f32 %v2826, %v2859
    %v2877 = vsub.f32 %v2828, %v2861
    %v2878 = vmul.f32 %v2862, 1.442695
    %v2879 = vpow.pop %v2878
    %v2880 = vmul.f32 %v2863, 1.442695
    %v2881 = vpow.pop %v2880
    %v2882 = vmul.f32 %v2864, 1.442695
    %v2883 = vpow.pop %v2882
    %v2884 = vmul.f32 %v2865, 1.442695
    %v2885 = vpow.pop %v2884
    %v2886 = vmul.f32 %v2866, 1.442695
    %v2887 = vpow.pop %v2886
    %v2888 = vmul.f32 %v2867, 1.442695
    %v2889 = vpow.pop %v2888
    %v2890 = vmul.f32 %v2868, 1.442695
    %v2891 = vpow.pop %v2890
    %v2892 = vmul.f32 %v2869, 1.442695
    %v2893 = vpow.pop %v2892
    %v2894 = vmul.f32 %v2870, 1.442695
    %v2895 = vpow.pop %v2894
    %v2896 = vmul.f32 %v2871, 1.442695
    %v2897 = vpow.pop %v2896
    %v2898 = vmul.f32 %v2872, 1.442695
    %v2899 = vpow.pop %v2898
    %v2900 = vmul.f32 %v2873, 1.442695
    %v2901 = vpow.pop %v2900
    %v2902 = vmul.f32 %v2874, 1.442695
    %v2903 = vpow.pop %v2902
    %v2904 = vmul.f32 %v2875, 1.442695
    %v2905 = vpow.pop %v2904
    %v2906 = vmul.f32 %v2876, 1.442695
    %v2907 = vpow.pop %v2906
    %v2908 = vmul.f32 %v2877, 1.442695
    %v2909 = vpow.pop %v2908
    %2910 = vadd.xlane.f32.xlu0 %v2879
    %v2911 = vpop.xlane.xlu0 %2910
    %2912 = vadd.xlane.f32.xlu0 %v2881
    %v2913 = vpop.xlane.xlu0 %2912
    %2914 = vadd.xlane.f32.xlu0 %v2883
    %v2915 = vpop.xlane.xlu0 %2914
    %2916 = vadd.xlane.f32.xlu0 %v2885
    %v2917 = vpop.xlane.xlu0 %2916
    %2918 = vadd.xlane.f32.xlu0 %v2887
    %v2919 = vpop.xlane.xlu0 %2918
    %2920 = vadd.xlane.f32.xlu0 %v2889
    %v2921 = vpop.xlane.xlu0 %2920
    %2922 = vadd.xlane.f32.xlu0 %v2891
    %v2923 = vpop.xlane.xlu0 %2922
    %2924 = vadd.xlane.f32.xlu0 %v2893
    %v2925 = vpop.xlane.xlu0 %2924
    %2926 = vadd.xlane.f32.xlu0 %v2895
    %v2927 = vpop.xlane.xlu0 %2926
    %2928 = vadd.xlane.f32.xlu0 %v2897
    %v2929 = vpop.xlane.xlu0 %2928
    %2930 = vadd.xlane.f32.xlu0 %v2899
    %v2931 = vpop.xlane.xlu0 %2930
    %2932 = vadd.xlane.f32.xlu0 %v2901
    %v2933 = vpop.xlane.xlu0 %2932
    %2934 = vadd.xlane.f32.xlu0 %v2903
    %v2935 = vpop.xlane.xlu0 %2934
    %2936 = vadd.xlane.f32.xlu0 %v2905
    %v2937 = vpop.xlane.xlu0 %2936
    %2938 = vadd.xlane.f32.xlu0 %v2907
    %v2939 = vpop.xlane.xlu0 %2938
    %2940 = vadd.xlane.f32.xlu0 %v2909
    %v2941 = vpop.xlane.xlu0 %2940
    %v2942 = vrcp.pop %v2911
    %v2943 = vrcp.pop %v2913
    %v2944 = vrcp.pop %v2915
    %v2945 = vrcp.pop %v2917
    %v2946 = vrcp.pop %v2919
    %v2947 = vrcp.pop %v2921
    %v2948 = vrcp.pop %v2923
    %v2949 = vrcp.pop %v2925
    %v2950 = vrcp.pop %v2927
    %v2951 = vrcp.pop %v2929
    %v2952 = vrcp.pop %v2931
    %v2953 = vrcp.pop %v2933
    %v2954 = vrcp.pop %v2935
    %v2955 = vrcp.pop %v2937
    %v2956 = vrcp.pop %v2939
    %v2957 = vrcp.pop %v2941
    %v2958 = vmul.f32 %v2879, %v2942
    %v2959 = vmul.f32 %v2881, %v2943
    %v2960 = vmul.f32 %v2883, %v2944
    %v2961 = vmul.f32 %v2885, %v2945
    %v2962 = vmul.f32 %v2887, %v2946
    %v2963 = vmul.f32 %v2889, %v2947
    %v2964 = vmul.f32 %v2891, %v2948
    %v2965 = vmul.f32 %v2893, %v2949
    %v2966 = vmul.f32 %v2895, %v2950
    %v2967 = vmul.f32 %v2897, %v2951
    %v2968 = vmul.f32 %v2899, %v2952
    %v2969 = vmul.f32 %v2901, %v2953
    %v2970 = vmul.f32 %v2903, %v2954
    %v2971 = vmul.f32 %v2905, %v2955
    %v2972 = vmul.f32 %v2907, %v2956
    %v2973 = vmul.f32 %v2909, %v2957
    %v2974 = vpack.c.bf16 %v2959, %v2958
    %v2975 = vpack.c.bf16 %v2961, %v2960
    %v2976 = vpack.c.bf16 %v2963, %v2962
    %v2977 = vpack.c.bf16 %v2965, %v2964
    %v2978 = vpack.c.bf16 %v2967, %v2966
    %v2979 = vpack.c.bf16 %v2969, %v2968
    %v2980 = vpack.c.bf16 %v2971, %v2970
    %v2981 = vpack.c.bf16 %v2973, %v2972
    %v2986 = vunpack.c.l.b16 %v909
    %v2987 = vunpack.c.l.b16 %v910
    %v2988 = vunpack.c.l.b16 %v911
    %v2989 = vunpack.c.l.b16 %v912
    %v2990 = vpack.c.b16 %v2987, %v2986
    %v2991 = vpack.c.b16 %v2989, %v2988
    %2994 = vmatpush.bf16.xpose.msra.mxu0 %v2981
    %2995 = vmatpush.bf16.xpose.msra.mxu0 %v2980
    %2996 = vmatpush.bf16.xpose.msra.mxu0 %v2979
    %2997 = vmatpush.bf16.xpose.msra.mxu0 %v2978
    %2998 = vmatpush.bf16.xpose.msra.mxu0 %v2977
    %2999 = vmatpush.bf16.xpose.msra.mxu0 %v2976
    %3000 = vmatpush.bf16.xpose.msra.mxu0 %v2975
    %3001 = vmatpush.bf16.xpose.msra.mxu0 %v2974
    %3002 = vmatmul.bf16.gmra.mxu0 %v2990
    %v3003 = vpop.f32.mrf.mxu0
    %v3004 = vadd.f32 0.0, %v3003
    %v3005 = vpop.f32.mrf.mxu0
    %v3006 = vadd.f32 0.0, %v3005
    %3007 = vmatmul.bf16.gmra.mxu0 %v2991
    %v3008 = vpop.f32.mrf.mxu0
    %v3009 = vadd.f32 0.0, %v3008
    %v3010 = vpop.f32.mrf.mxu0
    %v3011 = vadd.f32 0.0, %v3010
    %3012 = vdwg.mxu0
    %v3013 = vpack.c.bf16 %v3004, %v3004
    %v3014 = vpack.c.bf16 %v3006, %v3006
    %v3015 = vpack.c.bf16 %v3009, %v3009
    %v3016 = vpack.c.bf16 %v3011, %v3011
    %v3021 = vunpack.c.l.b16 %v849
    %v3022 = vunpack.c.l.b16 %v850
    %v3023 = vunpack.c.l.b16 %v851
    %v3024 = vunpack.c.l.b16 %v852
    %v3025 = vpack.c.b16 %v3022, %v3021
    %v3026 = vpack.c.b16 %v3024, %v3023
    %3029 = vxpose.xlu0.c.b16.start [1/8] %v3025, 128
    %3030 = vxpose.xlu0.c.b16.cont [2/8] %v3026, 128
    %3031 = vxpose.xlu0.c.b16.cont [3/8] 0, 128
    %3032 = vxpose.xlu0.c.b16.cont [4/8] 0, 128
    %3033 = vxpose.xlu0.c.b16.cont [5/8] 0, 128
    %3034 = vxpose.xlu0.c.b16.cont [6/8] 0, 128
    %3035 = vxpose.xlu0.c.b16.cont [7/8] 0, 128
    %3036 = vxpose.xlu0.c.b16.end [8/8] 0, 128
    %v3037 = vpop.trf.xlu0
    %v3038 = vpop.trf.xlu0
    %v3039 = vpop.trf.xlu0
    %v3040 = vpop.trf.xlu0
    %v3041 = vpop.trf.xlu0
    %v3042 = vpop.trf.xlu0
    %v3043 = vpop.trf.xlu0
    %v3044 = vpop.trf.xlu0
    %v3049 = vunpack.c.l.b16 %v881
    %v3050 = vunpack.c.l.b16 %v882
    %v3051 = vunpack.c.l.b16 %v883
    %v3052 = vunpack.c.l.b16 %v884
    %v3053 = vpack.c.b16 %v3050, %v3049
    %v3054 = vpack.c.b16 %v3052, %v3051
    %v3058 = vsel %vm153, %v3037, 0
    %v3061 = vsel %vm153, %v3038, 0
    %v3064 = vsel %vm153, %v3039, 0
    %v3067 = vsel %vm153, %v3040, 0
    %v3070 = vsel %vm153, %v3041, 0
    %v3073 = vsel %vm153, %v3042, 0
    %v3076 = vsel %vm153, %v3043, 0
    %v3079 = vsel %vm153, %v3044, 0
    %3081 = vmatpush.bf16.msra.mxu0 0
    %3082 = vmatpush.bf16.msra.mxu0 0
    %3083 = vmatpush.bf16.msra.mxu0 0
    %3084 = vmatpush.bf16.msra.mxu0 0
    %3085 = vmatpush.bf16.msra.mxu0 0
    %3086 = vmatpush.bf16.msra.mxu0 0
    %3087 = vmatpush.bf16.msra.mxu0 %v3054
    %3088 = vmatpush.bf16.msra.mxu0 %v3053
    %3089 = vmatmul.bf16.gmra.mxu0 %v3058
    %v3090 = vpop.f32.mrf.mxu0
    %v3091 = vadd.f32 0.0, %v3090
    %v3092 = vpop.f32.mrf.mxu0
    %v3093 = vadd.f32 0.0, %v3092
    %3094 = vmatmul.bf16.gmra.mxu0 %v3061
    %v3095 = vpop.f32.mrf.mxu0
    %v3096 = vadd.f32 0.0, %v3095
    %v3097 = vpop.f32.mrf.mxu0
    %v3098 = vadd.f32 0.0, %v3097
    %3099 = vmatmul.bf16.gmra.mxu0 %v3064
    %v3100 = vpop.f32.mrf.mxu0
    %v3101 = vadd.f32 0.0, %v3100
    %v3102 = vpop.f32.mrf.mxu0
    %v3103 = vadd.f32 0.0, %v3102
    %3104 = vmatmul.bf16.gmra.mxu0 %v3067
    %v3105 = vpop.f32.mrf.mxu0
    %v3106 = vadd.f32 0.0, %v3105
    %v3107 = vpop.f32.mrf.mxu0
    %v3108 = vadd.f32 0.0, %v3107
    %3109 = vmatmul.bf16.gmra.mxu0 %v3070
    %v3110 = vpop.f32.mrf.mxu0
    %v3111 = vadd.f32 0.0, %v3110
    %v3112 = vpop.f32.mrf.mxu0
    %v3113 = vadd.f32 0.0, %v3112
    %3114 = vmatmul.bf16.gmra.mxu0 %v3073
    %v3115 = vpop.f32.mrf.mxu0
    %v3116 = vadd.f32 0.0, %v3115
    %v3117 = vpop.f32.mrf.mxu0
    %v3118 = vadd.f32 0.0, %v3117
    %3119 = vmatmul.bf16.gmra.mxu0 %v3076
    %v3120 = vpop.f32.mrf.mxu0
    %v3121 = vadd.f32 0.0, %v3120
    %v3122 = vpop.f32.mrf.mxu0
    %v3123 = vadd.f32 0.0, %v3122
    %3124 = vmatmul.bf16.gmra.mxu0 %v3079
    %v3125 = vpop.f32.mrf.mxu0
    %v3126 = vadd.f32 0.0, %v3125
    %v3127 = vpop.f32.mrf.mxu0
    %v3128 = vadd.f32 0.0, %v3127
    %3129 = vdwg.mxu0
    %3130 = vmax.xlane.f32.xlu0 %v3091
    %v3131 = vpop.xlane.xlu0 %3130
    %3132 = vmax.xlane.f32.xlu0 %v3093
    %v3133 = vpop.xlane.xlu0 %3132
    %3134 = vmax.xlane.f32.xlu0 %v3096
    %v3135 = vpop.xlane.xlu0 %3134
    %3136 = vmax.xlane.f32.xlu0 %v3098
    %v3137 = vpop.xlane.xlu0 %3136
    %3138 = vmax.xlane.f32.xlu0 %v3101
    %v3139 = vpop.xlane.xlu0 %3138
    %3140 = vmax.xlane.f32.xlu0 %v3103
    %v3141 = vpop.xlane.xlu0 %3140
    %3142 = vmax.xlane.f32.xlu0 %v3106
    %v3143 = vpop.xlane.xlu0 %3142
    %3144 = vmax.xlane.f32.xlu0 %v3108
    %v3145 = vpop.xlane.xlu0 %3144
    %3146 = vmax.xlane.f32.xlu0 %v3111
    %v3147 = vpop.xlane.xlu0 %3146
    %3148 = vmax.xlane.f32.xlu0 %v3113
    %v3149 = vpop.xlane.xlu0 %3148
    %3150 = vmax.xlane.f32.xlu0 %v3116
    %v3151 = vpop.xlane.xlu0 %3150
    %3152 = vmax.xlane.f32.xlu0 %v3118
    %v3153 = vpop.xlane.xlu0 %3152
    %3154 = vmax.xlane.f32.xlu0 %v3121
    %v3155 = vpop.xlane.xlu0 %3154
    %3156 = vmax.xlane.f32.xlu0 %v3123
    %v3157 = vpop.xlane.xlu0 %3156
    %3158 = vmax.xlane.f32.xlu0 %v3126
    %v3159 = vpop.xlane.xlu0 %3158
    %3160 = vmax.xlane.f32.xlu0 %v3128
    %v3161 = vpop.xlane.xlu0 %3160
    %v3162 = vsub.f32 %v3091, %v3131
    %v3163 = vsub.f32 %v3093, %v3133
    %v3164 = vsub.f32 %v3096, %v3135
    %v3165 = vsub.f32 %v3098, %v3137
    %v3166 = vsub.f32 %v3101, %v3139
    %v3167 = vsub.f32 %v3103, %v3141
    %v3168 = vsub.f32 %v3106, %v3143
    %v3169 = vsub.f32 %v3108, %v3145
    %v3170 = vsub.f32 %v3111, %v3147
    %v3171 = vsub.f32 %v3113, %v3149
    %v3172 = vsub.f32 %v3116, %v3151
    %v3173 = vsub.f32 %v3118, %v3153
    %v3174 = vsub.f32 %v3121, %v3155
    %v3175 = vsub.f32 %v3123, %v3157
    %v3176 = vsub.f32 %v3126, %v3159
    %v3177 = vsub.f32 %v3128, %v3161
    %v3178 = vmul.f32 %v3162, 1.442695
    %v3179 = vpow.pop %v3178
    %v3180 = vmul.f32 %v3163, 1.442695
    %v3181 = vpow.pop %v3180
    %v3182 = vmul.f32 %v3164, 1.442695
    %v3183 = vpow.pop %v3182
    %v3184 = vmul.f32 %v3165, 1.442695
    %v3185 = vpow.pop %v3184
    %v3186 = vmul.f32 %v3166, 1.442695
    %v3187 = vpow.pop %v3186
    %v3188 = vmul.f32 %v3167, 1.442695
    %v3189 = vpow.pop %v3188
    %v3190 = vmul.f32 %v3168, 1.442695
    %v3191 = vpow.pop %v3190
    %v3192 = vmul.f32 %v3169, 1.442695
    %v3193 = vpow.pop %v3192
    %v3194 = vmul.f32 %v3170, 1.442695
    %v3195 = vpow.pop %v3194
    %v3196 = vmul.f32 %v3171, 1.442695
    %v3197 = vpow.pop %v3196
    %v3198 = vmul.f32 %v3172, 1.442695
    %v3199 = vpow.pop %v3198
    %v3200 = vmul.f32 %v3173, 1.442695
    %v3201 = vpow.pop %v3200
    %v3202 = vmul.f32 %v3174, 1.442695
    %v3203 = vpow.pop %v3202
    %v3204 = vmul.f32 %v3175, 1.442695
    %v3205 = vpow.pop %v3204
    %v3206 = vmul.f32 %v3176, 1.442695
    %v3207 = vpow.pop %v3206
    %v3208 = vmul.f32 %v3177, 1.442695
    %v3209 = vpow.pop %v3208
    %3210 = vadd.xlane.f32.xlu0 %v3179
    %v3211 = vpop.xlane.xlu0 %3210
    %3212 = vadd.xlane.f32.xlu0 %v3181
    %v3213 = vpop.xlane.xlu0 %3212
    %3214 = vadd.xlane.f32.xlu0 %v3183
    %v3215 = vpop.xlane.xlu0 %3214
    %3216 = vadd.xlane.f32.xlu0 %v3185
    %v3217 = vpop.xlane.xlu0 %3216
    %3218 = vadd.xlane.f32.xlu0 %v3187
    %v3219 = vpop.xlane.xlu0 %3218
    %3220 = vadd.xlane.f32.xlu0 %v3189
    %v3221 = vpop.xlane.xlu0 %3220
    %3222 = vadd.xlane.f32.xlu0 %v3191
    %v3223 = vpop.xlane.xlu0 %3222
    %3224 = vadd.xlane.f32.xlu0 %v3193
    %v3225 = vpop.xlane.xlu0 %3224
    %3226 = vadd.xlane.f32.xlu0 %v3195
    %v3227 = vpop.xlane.xlu0 %3226
    %3228 = vadd.xlane.f32.xlu0 %v3197
    %v3229 = vpop.xlane.xlu0 %3228
    %3230 = vadd.xlane.f32.xlu0 %v3199
    %v3231 = vpop.xlane.xlu0 %3230
    %3232 = vadd.xlane.f32.xlu0 %v3201
    %v3233 = vpop.xlane.xlu0 %3232
    %3234 = vadd.xlane.f32.xlu0 %v3203
    %v3235 = vpop.xlane.xlu0 %3234
    %3236 = vadd.xlane.f32.xlu0 %v3205
    %v3237 = vpop.xlane.xlu0 %3236
    %3238 = vadd.xlane.f32.xlu0 %v3207
    %v3239 = vpop.xlane.xlu0 %3238
    %3240 = vadd.xlane.f32.xlu0 %v3209
    %v3241 = vpop.xlane.xlu0 %3240
    %v3242 = vrcp.pop %v3211
    %v3243 = vrcp.pop %v3213
    %v3244 = vrcp.pop %v3215
    %v3245 = vrcp.pop %v3217
    %v3246 = vrcp.pop %v3219
    %v3247 = vrcp.pop %v3221
    %v3248 = vrcp.pop %v3223
    %v3249 = vrcp.pop %v3225
    %v3250 = vrcp.pop %v3227
    %v3251 = vrcp.pop %v3229
    %v3252 = vrcp.pop %v3231
    %v3253 = vrcp.pop %v3233
    %v3254 = vrcp.pop %v3235
    %v3255 = vrcp.pop %v3237
    %v3256 = vrcp.pop %v3239
    %v3257 = vrcp.pop %v3241
    %v3258 = vmul.f32 %v3179, %v3242
    %v3259 = vmul.f32 %v3181, %v3243
    %v3260 = vmul.f32 %v3183, %v3244
    %v3261 = vmul.f32 %v3185, %v3245
    %v3262 = vmul.f32 %v3187, %v3246
    %v3263 = vmul.f32 %v3189, %v3247
    %v3264 = vmul.f32 %v3191, %v3248
    %v3265 = vmul.f32 %v3193, %v3249
    %v3266 = vmul.f32 %v3195, %v3250
    %v3267 = vmul.f32 %v3197, %v3251
    %v3268 = vmul.f32 %v3199, %v3252
    %v3269 = vmul.f32 %v3201, %v3253
    %v3270 = vmul.f32 %v3203, %v3254
    %v3271 = vmul.f32 %v3205, %v3255
    %v3272 = vmul.f32 %v3207, %v3256
    %v3273 = vmul.f32 %v3209, %v3257
    %v3274 = vpack.c.bf16 %v3259, %v3258
    %v3275 = vpack.c.bf16 %v3261, %v3260
    %v3276 = vpack.c.bf16 %v3263, %v3262
    %v3277 = vpack.c.bf16 %v3265, %v3264
    %v3278 = vpack.c.bf16 %v3267, %v3266
    %v3279 = vpack.c.bf16 %v3269, %v3268
    %v3280 = vpack.c.bf16 %v3271, %v3270
    %v3281 = vpack.c.bf16 %v3273, %v3272
    %v3286 = vunpack.c.l.b16 %v913
    %v3287 = vunpack.c.l.b16 %v914
    %v3288 = vunpack.c.l.b16 %v915
    %v3289 = vunpack.c.l.b16 %v916
    %v3290 = vpack.c.b16 %v3287, %v3286
    %v3291 = vpack.c.b16 %v3289, %v3288
    %3294 = vmatpush.bf16.xpose.msra.mxu0 %v3281
    %3295 = vmatpush.bf16.xpose.msra.mxu0 %v3280
    %3296 = vmatpush.bf16.xpose.msra.mxu0 %v3279
    %3297 = vmatpush.bf16.xpose.msra.mxu0 %v3278
    %3298 = vmatpush.bf16.xpose.msra.mxu0 %v3277
    %3299 = vmatpush.bf16.xpose.msra.mxu0 %v3276
    %3300 = vmatpush.bf16.xpose.msra.mxu0 %v3275
    %3301 = vmatpush.bf16.xpose.msra.mxu0 %v3274
    %3302 = vmatmul.bf16.gmra.mxu0 %v3290
    %v3303 = vpop.f32.mrf.mxu0
    %v3304 = vadd.f32 0.0, %v3303
    %v3305 = vpop.f32.mrf.mxu0
    %v3306 = vadd.f32 0.0, %v3305
    %3307 = vmatmul.bf16.gmra.mxu0 %v3291
    %v3308 = vpop.f32.mrf.mxu0
    %v3309 = vadd.f32 0.0, %v3308
    %v3310 = vpop.f32.mrf.mxu0
    %v3311 = vadd.f32 0.0, %v3310
    %3312 = vdwg.mxu0
    %v3313 = vpack.c.bf16 %v3304, %v3304
    %v3314 = vpack.c.bf16 %v3306, %v3306
    %v3315 = vpack.c.bf16 %v3309, %v3309
    %v3316 = vpack.c.bf16 %v3311, %v3311
    %v3321 = vunpack.c.l.b16 %v1213
    %v3322 = vunpack.c.l.b16 %v1214
    %v3323 = vunpack.c.l.b16 %v1215
    %v3324 = vunpack.c.l.b16 %v1216
    %v3325 = vpack.c.b16 %v3322, %v3321
    %v3326 = vpack.c.b16 %v3324, %v3323
    %v3333 = vunpack.c.l.b16 %v1513
    %v3334 = vunpack.c.l.b16 %v1514
    %v3335 = vunpack.c.l.b16 %v1515
    %v3336 = vunpack.c.l.b16 %v1516
    %v3337 = vpack.c.b16 %v3334, %v3333
    %v3338 = vpack.c.b16 %v3336, %v3335
    %v3345 = vunpack.c.l.b16 %v1813
    %v3346 = vunpack.c.l.b16 %v1814
    %v3347 = vunpack.c.l.b16 %v1815
    %v3348 = vunpack.c.l.b16 %v1816
    %v3349 = vpack.c.b16 %v3346, %v3345
    %v3350 = vpack.c.b16 %v3348, %v3347
    %v3357 = vunpack.c.l.b16 %v2113
    %v3358 = vunpack.c.l.b16 %v2114
    %v3359 = vunpack.c.l.b16 %v2115
    %v3360 = vunpack.c.l.b16 %v2116
    %v3361 = vpack.c.b16 %v3358, %v3357
    %v3362 = vpack.c.b16 %v3360, %v3359
    %v3369 = vunpack.c.l.b16 %v2413
    %v3370 = vunpack.c.l.b16 %v2414
    %v3371 = vunpack.c.l.b16 %v2415
    %v3372 = vunpack.c.l.b16 %v2416
    %v3373 = vpack.c.b16 %v3370, %v3369
    %v3374 = vpack.c.b16 %v3372, %v3371
    %v3381 = vunpack.c.l.b16 %v2713
    %v3382 = vunpack.c.l.b16 %v2714
    %v3383 = vunpack.c.l.b16 %v2715
    %v3384 = vunpack.c.l.b16 %v2716
    %v3385 = vpack.c.b16 %v3382, %v3381
    %v3386 = vpack.c.b16 %v3384, %v3383
    %v3393 = vunpack.c.l.b16 %v3013
    %v3394 = vunpack.c.l.b16 %v3014
    %v3395 = vunpack.c.l.b16 %v3015
    %v3396 = vunpack.c.l.b16 %v3016
    %v3397 = vpack.c.b16 %v3394, %v3393
    %v3398 = vpack.c.b16 %v3396, %v3395
    %v3405 = vunpack.c.l.b16 %v3313
    %v3406 = vunpack.c.l.b16 %v3314
    %v3407 = vunpack.c.l.b16 %v3315
    %v3408 = vunpack.c.l.b16 %v3316
    %v3409 = vpack.c.b16 %v3406, %v3405
    %v3410 = vpack.c.b16 %v3408, %v3407
    %v3413 = vld [vmem:[%s4] sm:$0xff]
    %v3414 = vld [vmem:[%s4 + $0x8] sm:$0xff]
    %v3415 = vld [vmem:[%s4 + $0x10] sm:$0xff]
    %v3416 = vld [vmem:[%s4 + $0x18] sm:$0xff]
    %v3417 = vld [vmem:[%s5] sm:$0xff]
    %v3418 = vld [vmem:[%s5 + $0x8] sm:$0xff]
    %v3419 = vld [vmem:[%s5 + $0x10] sm:$0xff]
    %v3420 = vld [vmem:[%s5 + $0x18] sm:$0xff]
    %3422 = vset.pattern.permute.xlu0 0
    %3423 = vperm.xlu0 %3422, %v3417
    %v3424 = vpop.permute.xlu0 %3423
    %3427 = vset.pattern.permute.xlu0 0
    %3428 = vperm.xlu0 %3427, %v3418
    %v3429 = vpop.permute.xlu0 %3428
    %3432 = vset.pattern.permute.xlu0 0
    %3433 = vperm.xlu0 %3432, %v3419
    %v3434 = vpop.permute.xlu0 %3433
    %3437 = vset.pattern.permute.xlu0 0
    %3438 = vperm.xlu0 %3437, %v3420
    %v3439 = vpop.permute.xlu0 %3438
    %v3445 = vunpack.c.l.b16 %v3413
    %v3446 = vunpack.c.h.b16 %v3413
    %v3447 = vunpack.c.l.b16 %v3414
    %v3448 = vunpack.c.h.b16 %v3414
    %v3449 = vunpack.c.l.b16 %v3415
    %v3450 = vunpack.c.h.b16 %v3415
    %v3451 = vunpack.c.l.b16 %v3416
    %v3452 = vunpack.c.h.b16 %v3416
    %v3453 = vpack.c.b16 %v3447, %v3445
    %v3454 = vpack.c.b16 %v3448, %v3446
    %v3455 = vpack.c.b16 %v3451, %v3449
    %v3456 = vpack.c.b16 %v3452, %v3450
    %3461 = vmatpush.bf16.msra.mxu0 %v3362
    %3462 = vmatpush.bf16.msra.mxu0 %v3361
    %3463 = vmatpush.bf16.msra.mxu0 %v3350
    %3464 = vmatpush.bf16.msra.mxu0 %v3349
    %3465 = vmatpush.bf16.msra.mxu0 %v3338
    %3466 = vmatpush.bf16.msra.mxu0 %v3337
    %3467 = vmatpush.bf16.msra.mxu0 %v3326
    %3468 = vmatpush.bf16.msra.mxu0 %v3325
    %3469 = vmatmul.bf16.gmra.mxu0 %v3453
    %v3470 = vpop.f32.mrf.mxu0
    %v3471 = vadd.f32 %v3424, %v3470
    %v3472 = vpop.f32.mrf.mxu0
    %v3473 = vadd.f32 %v3429, %v3472
    %3474 = vmatmul.bf16.gmra.mxu0 %v3455
    %v3475 = vpop.f32.mrf.mxu0
    %v3476 = vadd.f32 %v3434, %v3475
    %v3477 = vpop.f32.mrf.mxu0
    %v3478 = vadd.f32 %v3439, %v3477
    %3479 = vdwg.mxu0
    %3480 = vmatpush.bf16.msra.mxu0 %v3410
    %3481 = vmatpush.bf16.msra.mxu0 %v3409
    %3482 = vmatpush.bf16.msra.mxu0 %v3398
    %3483 = vmatpush.bf16.msra.mxu0 %v3397
    %3484 = vmatpush.bf16.msra.mxu0 %v3386
    %3485 = vmatpush.bf16.msra.mxu0 %v3385
    %3486 = vmatpush.bf16.msra.mxu0 %v3374
    %3487 = vmatpush.bf16.msra.mxu0 %v3373
    %3488 = vmatmul.bf16.gmra.mxu0 %v3454
    %v3489 = vpop.f32.mrf.mxu0
    %v3490 = vadd.f32 %v3471, %v3489
    %v3491 = vpop.f32.mrf.mxu0
    %v3492 = vadd.f32 %v3473, %v3491
    %3493 = vmatmul.bf16.gmra.mxu0 %v3456
    %v3494 = vpop.f32.mrf.mxu0
    %v3495 = vadd.f32 %v3476, %v3494
    %v3496 = vpop.f32.mrf.mxu0
    %v3497 = vadd.f32 %v3478, %v3496
    %3498 = vdwg.mxu0
    %3499 = vst [vmem:[#allocation2] sm:$0xff] %v3490
    %3500 = vst [vmem:[#allocation2 + $0x8] sm:$0xff] %v3492
    %3501 = vst [vmem:[#allocation2 + $0x10] sm:$0xff] %v3495
    %3502 = vst [vmem:[#allocation2 + $0x18] sm:$0xff] %v3497
    // Predicated region
    $region26: #{tpu_custom_call.1} parent=1 // pred_check
      _
    $region27: #{tpu_custom_call.1} parent=1 // pred_check_branch
      %3504 = sbr.rel (0) target = $region29
    $region28: #{tpu_custom_call.1} parent=1 // pred_region
      %3506 = vsyncadd [#allocation3], 0
      %s3507 = sshll.u32 [#allocation2], 4
      %s3508 = int_to_ptr.vmem [resolvable:$true] %s3507
      %s3509 = sshll.u32 %s6, 4
      %s3510 = int_to_ptr.hbm [resolvable:$true] %s3509
      %3515 = dma.vmem_to_hbm [thread:$0]  %s3508, 512, %s3510, [#allocation3], 128, 128, 8
    $region29: #{tpu_custom_call.1} parent=1 // pred_fallthru
      _
    // Predicated region
    $region30: #{tpu_custom_call.1} parent=1 // pred_check
      _
    $region31: #{tpu_custom_call.1} parent=1 // pred_check_branch
      %3517 = sbr.rel (0) target = $region33
    $region32: #{tpu_custom_call.1} parent=1 // pred_region
      %3519 = dma.done [#allocation3], 512
    $region33: #{tpu_custom_call.1} parent=1 // pred_fallthru
      _
    %3520 = vsyncpa [#allocation3], 1

</llo_original>
